<compile_context>
chip_gen: v6e
topology: v6e:2x2x1
jax: 0.10.0
libtpu: 0.0.40
codegen_flags: <defaults>
</compile_context>

<pallas_src>
import functools

import jax
import jax.numpy as jnp
from jax import lax
from jax.experimental import pallas as pl
from jax.experimental.pallas import tpu as pltpu

MAX_CURVES = 32
_LN_EPS = 1e-5


# ----------------------------- in-kernel helpers -----------------------------

def _ln_rows(x, g, b, eps=_LN_EPS):
    """Row-wise LayerNorm in fp32.  x: (R, D), g/b: (1, D)."""
    mean = jnp.mean(x, axis=-1, keepdims=True)
    xc = x - mean
    var = jnp.mean(xc * xc, axis=-1, keepdims=True)
    return xc * lax.rsqrt(var + eps) * g + b


# ----------------------------- fused ViT kernel -------------------------------

def _vit_kernel(patch_ref, wc_ref, extra_ref, lnp_g_ref, lnp_b_ref, mask_ref,
                ln1_g_ref, ln1_b_ref, w_qkv_ref, b_qkv_ref, w_out_ref, b_out_ref,
                ln2_g_ref, ln2_b_ref, w_fc_ref, b_fc_ref, w_proj_ref, b_proj_ref,
                lnq_g_ref, lnq_b_ref, proj_ref,
                o_ref, xres_ref, *, heads, batch):
    """grid = (layers,).  One grid step = one residual attention block.

    The residual stream (B*S, D) lives in the fp32 VMEM scratch `xres_ref` across the
    layer axis.  Embed runs at layer==0, the output head at layer==L-1.
    """
    layer = pl.program_id(0)
    n_layers = pl.num_programs(0)
    BS, D = xres_ref.shape
    S = BS // batch
    hd = D // heads
    scale = hd ** -0.5

    # ---- 1) patch embed + cls/pos + ln_pre (first grid step only) ----
    @pl.when(layer == 0)
    def _():
        # patches already have a zero row per class token; `extra` carries
        # pos embeddings + class embedding + folded conv bias per row.
        tok = (jnp.dot(patch_ref[...], wc_ref[...],
                       preferred_element_type=jnp.float32) + extra_ref[...])
        xres_ref[...] = _ln_rows(tok, lnp_g_ref[...], lnp_b_ref[...])

    # ---- 2) residual attention block (batch folded into the matmul rows) ----
    x = xres_ref[...]                                                 # (B*S, D) fp32
    mask = mask_ref[...]                                              # block-diag additive

    # attention: LN1 -> QKV -> per-head masked softmax(QK^T)V -> out-proj -> residual
    h = _ln_rows(x, ln1_g_ref[0], ln1_b_ref[0])
    qkv = jnp.dot(h.astype(jnp.bfloat16), w_qkv_ref[0],
                  preferred_element_type=jnp.float32) + b_qkv_ref[0]  # (B*S, 3D)
    w_out = w_out_ref[0]                                              # (D, D) bf16

    attn = jnp.zeros((BS, D), jnp.float32)
    for head in range(heads):
        lo, hi = head * hd, (head + 1) * hd
        q = qkv[:, lo:hi] * scale                                     # scale folded into q
        k = qkv[:, D + lo:D + hi]
        v = qkv[:, 2 * D + lo:2 * D + hi]
        s = lax.dot_general(q, k, (((1,), (1,)), ((), ())),
                            preferred_element_type=jnp.float32) + mask  # (BS, BS)
        s = s - jnp.max(s, axis=-1, keepdims=True)
        p = jnp.exp(s)
        p = p / jnp.sum(p, axis=-1, keepdims=True)                    # exact divide
        o_h = jnp.dot(p, v, preferred_element_type=jnp.float32)       # (BS, hd)
        # concat(o_h) @ w_out == sum_h o_h @ w_out[rows of head h]  (avoids concat)
        attn = attn + jnp.dot(o_h.astype(jnp.bfloat16), w_out[lo:hi, :],
                              preferred_element_type=jnp.float32)
    x = x + attn + b_out_ref[0]

    # MLP: LN2 -> FC + QuickGELU -> proj -> residual
    h2 = _ln_rows(x, ln2_g_ref[0], ln2_b_ref[0])
    m = jnp.dot(h2.astype(jnp.bfloat16), w_fc_ref[0],
                preferred_element_type=jnp.float32) + b_fc_ref[0]
    m = m * jax.nn.sigmoid(1.702 * m)                                 # QuickGELU
    y = jnp.dot(m.astype(jnp.bfloat16), w_proj_ref[0],
                preferred_element_type=jnp.float32) + b_proj_ref[0]
    x = x + y
    xres_ref[...] = x

    # ---- 3) head (last grid step): ln_post on class token + projection + sigmoid ----
    @pl.when(layer == n_layers - 1)
    def _():
        g = lnq_g_ref[...]
        b = lnq_b_ref[...]
        proj = proj_ref[...]
        for bb in range(batch):                                       # batch is tiny/static
            cls_tok = x[bb * S:bb * S + 1, :]                         # (1, D)
            hh = _ln_rows(cls_tok, g, b)
            yy = jnp.dot(hh, proj, preferred_element_type=jnp.float32)
            o_ref[bb:bb + 1, :] = jax.nn.sigmoid(yy)


# ----------------------------- weight folding / prep --------------------------

def _fold_conv0_into_patch_embed(conv0_w, conv0_b, conv1_w):
    """Fold conv0 (5x5, pad 2) into conv1 (PxP, stride P): one (P+4)^2 -> width matmul.

    W_comb[u, v, o] = sum_{c,di,dj} conv0_w[c,0,di,dj] * conv1_w[o,c,u-di,v-dj],
    computed as a 'full' correlation of conv1_w with the flipped conv0 kernel.
    """
    width = conv1_w.shape[0]
    P = conv1_w.shape[-1]
    k = conv0_w[:, :, ::-1, ::-1].transpose(1, 0, 2, 3)               # (1, 3, 5, 5)
    wc = lax.conv_general_dilated(
        conv1_w, k, window_strides=(1, 1), padding=((4, 4), (4, 4)),
        dimension_numbers=("NCHW", "OIHW", "NCHW"))                   # (width, 1, P+4, P+4)
    Pw = P + 4
    wc = wc[:, 0].transpose(1, 2, 0).reshape(Pw * Pw, width)          # (F, width)
    bc = jnp.einsum("ocpq,c->o", conv1_w, conv0_b).reshape(1, width)  # conv0 bias folded
    return wc, bc


def prepare_params(params):
    """One-time prep: fold conv0 into the patch-embed matmul, cast big weights to bf16."""
    wc, bc = _fold_conv0_into_patch_embed(params["conv0_w"], params["conv0_b"],
                                          params["conv1_w"])
    blk = params["blocks"]
    blocks = {k: blk[k] for k in ("ln1_g", "ln1_b", "ln2_g", "ln2_b",
                                  "b_qkv", "b_out", "b_fc", "b_proj")}
    for k in ("w_qkv", "w_out", "w_fc", "w_proj"):
        blocks[k] = blk[k].astype(jnp.bfloat16)
    return {
        "wc": wc, "bc": bc,
        "cls": params["cls"], "pos": params["pos"],
        "ln_pre_g": params["ln_pre_g"], "ln_pre_b": params["ln_pre_b"],
        "ln_post_g": params["ln_post_g"], "ln_post_b": params["ln_post_b"],
        "proj": params["proj"],
        "blocks": blocks,
    }


# ----------------------------- parameters -------------------------------------

def init_params(key, *, width, layers, patch_size, grid_tokens, output_dim):
    std = 0.02
    scale = width ** -0.5
    ks = jax.random.split(key, 9)
    D = width
    return {
        "conv0_w": std * jax.random.normal(ks[0], (3, 1, 5, 5), jnp.float32),
        "conv0_b": jnp.zeros((3,), jnp.float32),
        "conv1_w": std * jax.random.normal(ks[1], (width, 3, patch_size, patch_size),
                                           jnp.float32),
        "cls": scale * jax.random.normal(ks[2], (1, width), jnp.float32),
        "pos": scale * jax.random.normal(ks[3], (grid_tokens + 1, width), jnp.float32),
        "ln_pre_g": jnp.ones((1, width), jnp.float32),
        "ln_pre_b": jnp.zeros((1, width), jnp.float32),
        "ln_post_g": jnp.ones((1, width), jnp.float32),
        "ln_post_b": jnp.zeros((1, width), jnp.float32),
        "proj": scale * jax.random.normal(ks[4], (width, output_dim), jnp.float32),
        # per-layer weights stacked along a leading layer axis (indexed by the grid)
        "blocks": {
            "ln1_g": jnp.ones((layers, 1, D), jnp.float32),
            "ln1_b": jnp.zeros((layers, 1, D), jnp.float32),
            "ln2_g": jnp.ones((layers, 1, D), jnp.float32),
            "ln2_b": jnp.zeros((layers, 1, D), jnp.float32),
            "w_qkv": std * jax.random.normal(ks[5], (layers, D, 3 * D), jnp.float32),
            "b_qkv": jnp.zeros((layers, 1, 3 * D), jnp.float32),
            "w_out": std * jax.random.normal(ks[6], (layers, D, D), jnp.float32),
            "b_out": jnp.zeros((layers, 1, D), jnp.float32),
            "w_fc": std * jax.random.normal(ks[7], (layers, D, 4 * D), jnp.float32),
            "b_fc": jnp.zeros((layers, 1, 4 * D), jnp.float32),
            "w_proj": std * jax.random.normal(ks[8], (layers, 4 * D, D), jnp.float32),
            "b_proj": jnp.zeros((layers, 1, D), jnp.float32),
        },
    }


# ----------------------------- forward pass -----------------------------------

def vision_transformer_forward(prep, x, *, heads, patch_size):
    # x: NCHW (B, 1, H, W), matching the PyTorch module.
    B, _, H, W = x.shape
    P = patch_size
    gh, gw = H // P, W // P
    Np = gh * gw
    S = Np + 1
    BS = B * S
    Pw = P + 4
    F = Pw * Pw
    D = prep["pos"].shape[-1]
    blocks = prep["blocks"]
    L = blocks["w_qkv"].shape[0]
    out_dim = prep["proj"].shape[-1]

    # --- wrapper glue (tiny XLA ops) ---------------------------------------
    # Overlapping (P+4)x(P+4) windows, one per output patch (== conv0 pad-2 receptive
    # field of each conv1 patch).
    windows = lax.conv_general_dilated_patches(
        x, filter_shape=(Pw, Pw), window_strides=(P, P),
        padding=((2, 2), (2, 2)),
        dimension_numbers=("NCHW", "OIHW", "NCHW"))                    # (B, F, gh, gw)
    windows = windows.reshape(B, F, Np).transpose(0, 2, 1)             # (B, Np, F)
    # Insert a zero row per class token so the kernel's single matmul covers all rows.
    patches_seq = jnp.pad(windows, ((0, 0), (1, 0), (0, 0))).reshape(BS, F)

    # Per-row additive term: positional embedding + (class embedding on cls rows) +
    # (folded conv bias on patch rows).
    bias_rows = jnp.pad(jnp.tile(prep["bc"], (Np, 1)), ((1, 0), (0, 0)))   # (S, D)
    cls_rows = jnp.pad(prep["cls"], ((0, S - 1), (0, 0)))                  # (S, D)
    extra = jnp.tile(prep["pos"] + bias_rows + cls_rows, (B, 1))           # (BS, D)

    # Block-diagonal additive attention mask: batch is folded into the rows, so
    # cross-batch scores are pushed to -1e30 before softmax.
    seg = jnp.arange(BS, dtype=jnp.int32) // S
    attn_mask = jnp.where(seg[:, None] == seg[None, :], 0.0, -1e30).astype(jnp.float32)

    # --- single fused pallas_call, grid over layers -------------------------
    def _const(shape):
        return pl.BlockSpec(shape, lambda l: (0, 0))

    def _layer(shape):
        return pl.BlockSpec((1,) + shape, lambda l: (l, 0, 0))

    out = pl.pallas_call(
        functools.partial(_vit_kernel, heads=heads, batch=B),
        out_shape=jax.ShapeDtypeStruct((B, out_dim), jnp.float32),
        grid=(L,),
        in_specs=[
            _const((BS, F)),              # patches_seq  (fetched once)
            _const((F, D)),               # wc           (fetched once)
            _const((BS, D)),              # extra
            _const((1, D)),               # ln_pre_g
            _const((1, D)),               # ln_pre_b
            _const((BS, BS)),             # attention mask
            _layer((1, D)),               # ln1_g
            _layer((1, D)),               # ln1_b
            _layer((D, 3 * D)),           # w_qkv (bf16)
            _layer((1, 3 * D)),           # b_qkv
            _layer((D, D)),               # w_out (bf16)
            _layer((1, D)),               # b_out
            _layer((1, D)),               # ln2_g
            _layer((1, D)),               # ln2_b
            _layer((D, 4 * D)),           # w_fc  (bf16)
            _layer((1, 4 * D)),           # b_fc
            _layer((4 * D, D)),           # w_proj (bf16)
            _layer((1, D)),               # b_proj
            _const((1, D)),               # ln_post_g
            _const((1, D)),               # ln_post_b
            _const((D, out_dim)),         # proj
        ],
        out_specs=pl.BlockSpec((B, out_dim), lambda l: (0, 0)),
        scratch_shapes=[pltpu.VMEM((BS, D), jnp.float32)],   # resident residual stream
        compiler_params=pltpu.CompilerParams(
            dimension_semantics=("arbitrary",),
            vmem_limit_bytes=32 * 1024 * 1024),
    )(patches_seq, prep["wc"], extra, prep["ln_pre_g"], prep["ln_pre_b"], attn_mask,
      blocks["ln1_g"], blocks["ln1_b"], blocks["w_qkv"], blocks["b_qkv"],
      blocks["w_out"], blocks["b_out"], blocks["ln2_g"], blocks["ln2_b"],
      blocks["w_fc"], blocks["b_fc"], blocks["w_proj"], blocks["b_proj"],
      prep["ln_post_g"], prep["ln_post_b"], prep["proj"])

    return out.reshape(-1, MAX_CURVES, 4, 2)


# --------------------------------- main ----------------------------------------

if __name__ == "__main__":
    # Small shapes consistent with the module: 64x64 image, 32x32 patches -> 4 patches,
    # seq = 5, width = 128, 2 layers, 4 heads; output_dim must stay MAX_CURVES*8 = 256
    # so the final reshape to (-1, 32, 4, 2) is valid.
    INPUT_RES = 64
    PATCH = 32
    WIDTH = 128
    LAYERS = 2
    HEADS = 4
    OUTPUT_DIM = MAX_CURVES * 8

    key = jax.random.PRNGKey(0)
    kx, kp = jax.random.split(key)
    x = jax.random.normal(kx, (2, 1, INPUT_RES, INPUT_RES), jnp.float32)

    grid_tokens = (INPUT_RES // PATCH) ** 2
    params = init_params(kp, width=WIDTH, layers=LAYERS, patch_size=PATCH,
                         grid_tokens=grid_tokens, output_dim=OUTPUT_DIM)
    prep = prepare_params(params)   # one-time: fold conv0, cast big weights to bf16

    fwd = jax.jit(functools.partial(vision_transformer_forward,
                                    heads=HEADS, patch_size=PATCH))
    out = fwd(prep, x)
    jax.block_until_ready(out)
    assert out.shape == (2, MAX_CURVES, 4, 2), out.shape
    assert bool(jnp.all((out >= 0.0) & (out <= 1.0)))
    print("KERNEL_OK")
</pallas_src>

<mosaic_0001>
module attributes {stable_mosaic.version = 11 : i64} {
  func.func @_vit_kernel(%arg0: i32, %arg1: memref<10x1296xf32, #tpu.memory_space<vmem>>, %arg2: memref<1296x128xf32, #tpu.memory_space<vmem>>, %arg3: memref<10x128xf32, #tpu.memory_space<vmem>>, %arg4: memref<1x128xf32, #tpu.memory_space<vmem>>, %arg5: memref<1x128xf32, #tpu.memory_space<vmem>>, %arg6: memref<10x10xf32, #tpu.memory_space<vmem>>, %arg7: memref<1x1x128xf32, #tpu.memory_space<vmem>>, %arg8: memref<1x1x128xf32, #tpu.memory_space<vmem>>, %arg9: memref<1x128x384xbf16, #tpu.memory_space<vmem>>, %arg10: memref<1x1x384xf32, #tpu.memory_space<vmem>>, %arg11: memref<1x128x128xbf16, #tpu.memory_space<vmem>>, %arg12: memref<1x1x128xf32, #tpu.memory_space<vmem>>, %arg13: memref<1x1x128xf32, #tpu.memory_space<vmem>>, %arg14: memref<1x1x128xf32, #tpu.memory_space<vmem>>, %arg15: memref<1x128x512xbf16, #tpu.memory_space<vmem>>, %arg16: memref<1x1x512xf32, #tpu.memory_space<vmem>>, %arg17: memref<1x512x128xbf16, #tpu.memory_space<vmem>>, %arg18: memref<1x1x128xf32, #tpu.memory_space<vmem>>, %arg19: memref<1x128xf32, #tpu.memory_space<vmem>>, %arg20: memref<1x128xf32, #tpu.memory_space<vmem>>, %arg21: memref<128x256xf32, #tpu.memory_space<vmem>>, %arg22: memref<2x256xf32, #tpu.memory_space<vmem>>, %arg23: memref<10x128xf32, #tpu.memory_space<vmem>>) attributes {dimension_semantics = [#tpu.dimension_semantics<arbitrary>], iteration_bounds = array<i64: 2>, scalar_prefetch = 0 : i64, scratch_operands = 1 : i64, tpu.core_type = #tpu.core_type<tc>, window_params = [{pipeline_mode = #tpu.pipeline_mode<synchronous>, transform_indices = @transform_0, window_bounds = array<i64: 10, 1296>}, {pipeline_mode = #tpu.pipeline_mode<synchronous>, transform_indices = @transform_1, window_bounds = array<i64: 1296, 128>}, {pipeline_mode = #tpu.pipeline_mode<synchronous>, transform_indices = @transform_2, window_bounds = array<i64: 10, 128>}, {pipeline_mode = #tpu.pipeline_mode<synchronous>, transform_indices = @transform_3, window_bounds = array<i64: 1, 128>}, {pipeline_mode = #tpu.pipeline_mode<synchronous>, transform_indices = @transform_4, window_bounds = array<i64: 1, 128>}, {pipeline_mode = #tpu.pipeline_mode<synchronous>, transform_indices = @transform_5, window_bounds = array<i64: 10, 10>}, {transform_indices = @transform_6, window_bounds = array<i64: 1, 1, 128>}, {transform_indices = @transform_7, window_bounds = array<i64: 1, 1, 128>}, {transform_indices = @transform_8, window_bounds = array<i64: 1, 128, 384>}, {transform_indices = @transform_9, window_bounds = array<i64: 1, 1, 384>}, {transform_indices = @transform_10, window_bounds = array<i64: 1, 128, 128>}, {transform_indices = @transform_11, window_bounds = array<i64: 1, 1, 128>}, {transform_indices = @transform_12, window_bounds = array<i64: 1, 1, 128>}, {transform_indices = @transform_13, window_bounds = array<i64: 1, 1, 128>}, {transform_indices = @transform_14, window_bounds = array<i64: 1, 128, 512>}, {transform_indices = @transform_15, window_bounds = array<i64: 1, 1, 512>}, {transform_indices = @transform_16, window_bounds = array<i64: 1, 512, 128>}, {transform_indices = @transform_17, window_bounds = array<i64: 1, 1, 128>}, {pipeline_mode = #tpu.pipeline_mode<synchronous>, transform_indices = @transform_18, window_bounds = array<i64: 1, 128>}, {pipeline_mode = #tpu.pipeline_mode<synchronous>, transform_indices = @transform_19, window_bounds = array<i64: 1, 128>}, {pipeline_mode = #tpu.pipeline_mode<synchronous>, transform_indices = @transform_20, window_bounds = array<i64: 128, 256>}, {pipeline_mode = #tpu.pipeline_mode<synchronous>, transform_indices = @transform_21, window_bounds = array<i64: 2, 256>}]} {
    %c0_i32 = arith.constant 0 : i32
    %0 = arith.cmpi eq, %arg0, %c0_i32 : i32
    %1 = arith.extui %0 : i1 to i32
    %c0_i32_0 = arith.constant 0 : i32
    %2 = arith.cmpi ne, %1, %c0_i32_0 : i32
    scf.if %2 {
      %c0_82 = arith.constant 0 : index
      %c0_83 = arith.constant 0 : index
      %182 = vector.load %arg1[%c0_82, %c0_83] : memref<10x1296xf32, #tpu.memory_space<vmem>>, vector<10x1296xf32>
      %c0_84 = arith.constant 0 : index
      %c0_85 = arith.constant 0 : index
      %183 = vector.load %arg2[%c0_84, %c0_85] : memref<1296x128xf32, #tpu.memory_space<vmem>>, vector<1296x128xf32>
      %cst_86 = arith.constant dense<0.000000e+00> : vector<10x128xf32>
      %184 = tpu.matmul %182, %183, %cst_86 {dimension_numbers = #tpu.dot_dimension_numbers<[1], [0], [0], [1], [0, 0, 1, 1], [], []>} : vector<10x1296xf32>, vector<1296x128xf32>, vector<10x128xf32> -> vector<10x128xf32>
      %c0_87 = arith.constant 0 : index
      %c0_88 = arith.constant 0 : index
      %185 = vector.load %arg3[%c0_87, %c0_88] : memref<10x128xf32, #tpu.memory_space<vmem>>, vector<10x128xf32>
      %186 = arith.addf %184, %185 : vector<10x128xf32>
      %c0_89 = arith.constant 0 : index
      %c0_90 = arith.constant 0 : index
      %187 = vector.load %arg4[%c0_89, %c0_90] : memref<1x128xf32, #tpu.memory_space<vmem>>, vector<1x128xf32>
      %c0_91 = arith.constant 0 : index
      %c0_92 = arith.constant 0 : index
      %188 = vector.load %arg5[%c0_91, %c0_92] : memref<1x128xf32, #tpu.memory_space<vmem>>, vector<1x128xf32>
      %cst_93 = arith.constant dense<0.000000e+00> : vector<10xf32>
      %189 = vector.multi_reduction <add>, %186, %cst_93 [1] : vector<10x128xf32> to vector<10xf32>
      %190 = vector.shape_cast %189 : vector<10xf32> to vector<10x1xf32>
      %cst_94 = arith.constant 1.280000e+02 : f32
      %191 = vector.broadcast %cst_94 : f32 to vector<10x1xf32>
      %192 = arith.divf %190, %191 : vector<10x1xf32>
      %193 = vector.broadcast %192 : vector<10x1xf32> to vector<10x128xf32>
      %194 = arith.subf %186, %193 : vector<10x128xf32>
      %195 = arith.mulf %194, %194 : vector<10x128xf32>
      %cst_95 = arith.constant dense<0.000000e+00> : vector<10xf32>
      %196 = vector.multi_reduction <add>, %195, %cst_95 [1] : vector<10x128xf32> to vector<10xf32>
      %197 = vector.shape_cast %196 : vector<10xf32> to vector<10x1xf32>
      %cst_96 = arith.constant 1.280000e+02 : f32
      %198 = vector.broadcast %cst_96 : f32 to vector<10x1xf32>
      %199 = arith.divf %197, %198 : vector<10x1xf32>
      %cst_97 = arith.constant 9.99999974E-6 : f32
      %200 = vector.broadcast %cst_97 : f32 to vector<10x1xf32>
      %201 = arith.addf %199, %200 : vector<10x1xf32>
      %202 = math.rsqrt %201 : vector<10x1xf32>
      %203 = vector.broadcast %202 : vector<10x1xf32> to vector<10x128xf32>
      %204 = arith.mulf %194, %203 : vector<10x128xf32>
      %205 = vector.broadcast %187 : vector<1x128xf32> to vector<10x128xf32>
      %206 = arith.mulf %204, %205 : vector<10x128xf32>
      %207 = vector.broadcast %188 : vector<1x128xf32> to vector<10x128xf32>
      %208 = arith.addf %206, %207 : vector<10x128xf32>
      %c0_98 = arith.constant 0 : index
      %c0_99 = arith.constant 0 : index
      %209 = vector.load %arg23[%c0_98, %c0_99] : memref<10x128xf32, #tpu.memory_space<vmem>>, vector<10x128xf32>
      tpu.vector_store %arg23[%c0_98, %c0_99], %208 {strides = array<i32>} : memref<10x128xf32, #tpu.memory_space<vmem>>, vector<10x128xf32>,
    } else {
    }
    %c0 = arith.constant 0 : index
    %c0_1 = arith.constant 0 : index
    %3 = vector.load %arg23[%c0, %c0_1] : memref<10x128xf32, #tpu.memory_space<vmem>>, vector<10x128xf32>
    %c0_2 = arith.constant 0 : index
    %c0_3 = arith.constant 0 : index
    %4 = vector.load %arg6[%c0_2, %c0_3] : memref<10x10xf32, #tpu.memory_space<vmem>>, vector<10x10xf32>
    %c0_4 = arith.constant 0 : index
    %c0_5 = arith.constant 0 : index
    %c0_6 = arith.constant 0 : index
    %5 = vector.load %arg7[%c0_4, %c0_5, %c0_6] : memref<1x1x128xf32, #tpu.memory_space<vmem>>, vector<1x1x128xf32>
    %6 = vector.shape_cast %5 : vector<1x1x128xf32> to vector<1x128xf32>
    %c0_7 = arith.constant 0 : index
    %c0_8 = arith.constant 0 : index
    %c0_9 = arith.constant 0 : index
    %7 = vector.load %arg8[%c0_7, %c0_8, %c0_9] : memref<1x1x128xf32, #tpu.memory_space<vmem>>, vector<1x1x128xf32>
    %8 = vector.shape_cast %7 : vector<1x1x128xf32> to vector<1x128xf32>
    %cst = arith.constant dense<0.000000e+00> : vector<10xf32>
    %9 = vector.multi_reduction <add>, %3, %cst [1] : vector<10x128xf32> to vector<10xf32>
    %10 = vector.shape_cast %9 : vector<10xf32> to vector<10x1xf32>
    %cst_10 = arith.constant 1.280000e+02 : f32
    %11 = vector.broadcast %cst_10 : f32 to vector<10x1xf32>
    %12 = arith.divf %10, %11 : vector<10x1xf32>
    %13 = vector.broadcast %12 : vector<10x1xf32> to vector<10x128xf32>
    %14 = arith.subf %3, %13 : vector<10x128xf32>
    %15 = arith.mulf %14, %14 : vector<10x128xf32>
    %cst_11 = arith.constant dense<0.000000e+00> : vector<10xf32>
    %16 = vector.multi_reduction <add>, %15, %cst_11 [1] : vector<10x128xf32> to vector<10xf32>
    %17 = vector.shape_cast %16 : vector<10xf32> to vector<10x1xf32>
    %cst_12 = arith.constant 1.280000e+02 : f32
    %18 = vector.broadcast %cst_12 : f32 to vector<10x1xf32>
    %19 = arith.divf %17, %18 : vector<10x1xf32>
    %cst_13 = arith.constant 9.99999974E-6 : f32
    %20 = vector.broadcast %cst_13 : f32 to vector<10x1xf32>
    %21 = arith.addf %19, %20 : vector<10x1xf32>
    %22 = math.rsqrt %21 : vector<10x1xf32>
    %23 = vector.broadcast %22 : vector<10x1xf32> to vector<10x128xf32>
    %24 = arith.mulf %14, %23 : vector<10x128xf32>
    %25 = vector.broadcast %6 : vector<1x128xf32> to vector<10x128xf32>
    %26 = arith.mulf %24, %25 : vector<10x128xf32>
    %27 = vector.broadcast %8 : vector<1x128xf32> to vector<10x128xf32>
    %28 = arith.addf %26, %27 : vector<10x128xf32>
    %29 = arith.truncf %28 : vector<10x128xf32> to vector<10x128xbf16>
    %c0_14 = arith.constant 0 : index
    %c0_15 = arith.constant 0 : index
    %c0_16 = arith.constant 0 : index
    %30 = vector.load %arg9[%c0_14, %c0_15, %c0_16] : memref<1x128x384xbf16, #tpu.memory_space<vmem>>, vector<1x128x384xbf16>
    %31 = vector.shape_cast %30 : vector<1x128x384xbf16> to vector<128x384xbf16>
    %cst_17 = arith.constant dense<0.000000e+00> : vector<10x384xf32>
    %32 = tpu.matmul %29, %31, %cst_17 {dimension_numbers = #tpu.dot_dimension_numbers<[1], [0], [0], [1], [0, 0, 1, 1], [], []>} : vector<10x128xbf16>, vector<128x384xbf16>, vector<10x384xf32> -> vector<10x384xf32>
    %c0_18 = arith.constant 0 : index
    %c0_19 = arith.constant 0 : index
    %c0_20 = arith.constant 0 : index
    %33 = vector.load %arg10[%c0_18, %c0_19, %c0_20] : memref<1x1x384xf32, #tpu.memory_space<vmem>>, vector<1x1x384xf32>
    %34 = vector.shape_cast %33 : vector<1x1x384xf32> to vector<1x384xf32>
    %35 = vector.broadcast %34 : vector<1x384xf32> to vector<10x384xf32>
    %36 = arith.addf %32, %35 : vector<10x384xf32>
    %c0_21 = arith.constant 0 : index
    %c0_22 = arith.constant 0 : index
    %c0_23 = arith.constant 0 : index
    %37 = vector.load %arg11[%c0_21, %c0_22, %c0_23] : memref<1x128x128xbf16, #tpu.memory_space<vmem>>, vector<1x128x128xbf16>
    %38 = vector.shape_cast %37 : vector<1x128x128xbf16> to vector<128x128xbf16>
    %cst_24 = arith.constant 0.000000e+00 : f32
    %39 = vector.broadcast %cst_24 : f32 to vector<10x128xf32>
    %40 = vector.extract_strided_slice %36 {offsets = [0, 0], sizes = [10, 32], strides = [1, 1]} : vector<10x384xf32> to vector<10x32xf32>
    %cst_25 = arith.constant 0.176776692 : f32
    %41 = vector.broadcast %cst_25 : f32 to vector<10x32xf32>
    %42 = arith.mulf %40, %41 : vector<10x32xf32>
    %43 = vector.extract_strided_slice %36 {offsets = [0, 128], sizes = [10, 32], strides = [1, 1]} : vector<10x384xf32> to vector<10x32xf32>
    %44 = vector.extract_strided_slice %36 {offsets = [0, 256], sizes = [10, 32], strides = [1, 1]} : vector<10x384xf32> to vector<10x32xf32>
    %cst_26 = arith.constant dense<0.000000e+00> : vector<10x10xf32>
    %45 = tpu.matmul %42, %43, %cst_26 {dimension_numbers = #tpu.dot_dimension_numbers<[1], [1], [0], [0], [0, 0, 1, 0], [], []>} : vector<10x32xf32>, vector<10x32xf32>, vector<10x10xf32> -> vector<10x10xf32>
    %46 = arith.addf %45, %4 : vector<10x10xf32>
    %cst_27 = arith.constant dense<0xFF800000> : vector<10xf32>
    %47 = vector.multi_reduction <maximumf>, %46, %cst_27 [1] : vector<10x10xf32> to vector<10xf32>
    %48 = vector.shape_cast %47 : vector<10xf32> to vector<10x1xf32>
    %49 = vector.broadcast %48 : vector<10x1xf32> to vector<10x10xf32>
    %50 = arith.subf %46, %49 : vector<10x10xf32>
    %51 = math.exp %50 : vector<10x10xf32>
    %cst_28 = arith.constant dense<0.000000e+00> : vector<10xf32>
    %52 = vector.multi_reduction <add>, %51, %cst_28 [1] : vector<10x10xf32> to vector<10xf32>
    %53 = vector.shape_cast %52 : vector<10xf32> to vector<10x1xf32>
    %54 = vector.broadcast %53 : vector<10x1xf32> to vector<10x10xf32>
    %55 = arith.divf %51, %54 : vector<10x10xf32>
    %cst_29 = arith.constant dense<0.000000e+00> : vector<10x32xf32>
    %56 = tpu.matmul %55, %44, %cst_29 {dimension_numbers = #tpu.dot_dimension_numbers<[1], [0], [0], [1], [0, 0, 1, 1], [], []>} : vector<10x10xf32>, vector<10x32xf32>, vector<10x32xf32> -> vector<10x32xf32>
    %57 = arith.truncf %56 : vector<10x32xf32> to vector<10x32xbf16>
    %58 = vector.extract_strided_slice %38 {offsets = [0, 0], sizes = [32, 128], strides = [1, 1]} : vector<128x128xbf16> to vector<32x128xbf16>
    %cst_30 = arith.constant dense<0.000000e+00> : vector<10x128xf32>
    %59 = tpu.matmul %57, %58, %cst_30 {dimension_numbers = #tpu.dot_dimension_numbers<[1], [0], [0], [1], [0, 0, 1, 1], [], []>} : vector<10x32xbf16>, vector<32x128xbf16>, vector<10x128xf32> -> vector<10x128xf32>
    %60 = arith.addf %39, %59 : vector<10x128xf32>
    %61 = vector.extract_strided_slice %36 {offsets = [0, 32], sizes = [10, 32], strides = [1, 1]} : vector<10x384xf32> to vector<10x32xf32>
    %cst_31 = arith.constant 0.176776692 : f32
    %62 = vector.broadcast %cst_31 : f32 to vector<10x32xf32>
    %63 = arith.mulf %61, %62 : vector<10x32xf32>
    %64 = vector.extract_strided_slice %36 {offsets = [0, 160], sizes = [10, 32], strides = [1, 1]} : vector<10x384xf32> to vector<10x32xf32>
    %65 = vector.extract_strided_slice %36 {offsets = [0, 288], sizes = [10, 32], strides = [1, 1]} : vector<10x384xf32> to vector<10x32xf32>
    %cst_32 = arith.constant dense<0.000000e+00> : vector<10x10xf32>
    %66 = tpu.matmul %63, %64, %cst_32 {dimension_numbers = #tpu.dot_dimension_numbers<[1], [1], [0], [0], [0, 0, 1, 0], [], []>} : vector<10x32xf32>, vector<10x32xf32>, vector<10x10xf32> -> vector<10x10xf32>
    %67 = arith.addf %66, %4 : vector<10x10xf32>
    %cst_33 = arith.constant dense<0xFF800000> : vector<10xf32>
    %68 = vector.multi_reduction <maximumf>, %67, %cst_33 [1] : vector<10x10xf32> to vector<10xf32>
    %69 = vector.shape_cast %68 : vector<10xf32> to vector<10x1xf32>
    %70 = vector.broadcast %69 : vector<10x1xf32> to vector<10x10xf32>
    %71 = arith.subf %67, %70 : vector<10x10xf32>
    %72 = math.exp %71 : vector<10x10xf32>
    %cst_34 = arith.constant dense<0.000000e+00> : vector<10xf32>
    %73 = vector.multi_reduction <add>, %72, %cst_34 [1] : vector<10x10xf32> to vector<10xf32>
    %74 = vector.shape_cast %73 : vector<10xf32> to vector<10x1xf32>
    %75 = vector.broadcast %74 : vector<10x1xf32> to vector<10x10xf32>
    %76 = arith.divf %72, %75 : vector<10x10xf32>
    %cst_35 = arith.constant dense<0.000000e+00> : vector<10x32xf32>
    %77 = tpu.matmul %76, %65, %cst_35 {dimension_numbers = #tpu.dot_dimension_numbers<[1], [0], [0], [1], [0, 0, 1, 1], [], []>} : vector<10x10xf32>, vector<10x32xf32>, vector<10x32xf32> -> vector<10x32xf32>
    %78 = arith.truncf %77 : vector<10x32xf32> to vector<10x32xbf16>
    %79 = vector.extract_strided_slice %38 {offsets = [32, 0], sizes = [32, 128], strides = [1, 1]} : vector<128x128xbf16> to vector<32x128xbf16>
    %cst_36 = arith.constant dense<0.000000e+00> : vector<10x128xf32>
    %80 = tpu.matmul %78, %79, %cst_36 {dimension_numbers = #tpu.dot_dimension_numbers<[1], [0], [0], [1], [0, 0, 1, 1], [], []>} : vector<10x32xbf16>, vector<32x128xbf16>, vector<10x128xf32> -> vector<10x128xf32>
    %81 = arith.addf %60, %80 : vector<10x128xf32>
    %82 = vector.extract_strided_slice %36 {offsets = [0, 64], sizes = [10, 32], strides = [1, 1]} : vector<10x384xf32> to vector<10x32xf32>
    %cst_37 = arith.constant 0.176776692 : f32
    %83 = vector.broadcast %cst_37 : f32 to vector<10x32xf32>
    %84 = arith.mulf %82, %83 : vector<10x32xf32>
    %85 = vector.extract_strided_slice %36 {offsets = [0, 192], sizes = [10, 32], strides = [1, 1]} : vector<10x384xf32> to vector<10x32xf32>
    %86 = vector.extract_strided_slice %36 {offsets = [0, 320], sizes = [10, 32], strides = [1, 1]} : vector<10x384xf32> to vector<10x32xf32>
    %cst_38 = arith.constant dense<0.000000e+00> : vector<10x10xf32>
    %87 = tpu.matmul %84, %85, %cst_38 {dimension_numbers = #tpu.dot_dimension_numbers<[1], [1], [0], [0], [0, 0, 1, 0], [], []>} : vector<10x32xf32>, vector<10x32xf32>, vector<10x10xf32> -> vector<10x10xf32>
    %88 = arith.addf %87, %4 : vector<10x10xf32>
    %cst_39 = arith.constant dense<0xFF800000> : vector<10xf32>
    %89 = vector.multi_reduction <maximumf>, %88, %cst_39 [1] : vector<10x10xf32> to vector<10xf32>
    %90 = vector.shape_cast %89 : vector<10xf32> to vector<10x1xf32>
    %91 = vector.broadcast %90 : vector<10x1xf32> to vector<10x10xf32>
    %92 = arith.subf %88, %91 : vector<10x10xf32>
    %93 = math.exp %92 : vector<10x10xf32>
    %cst_40 = arith.constant dense<0.000000e+00> : vector<10xf32>
    %94 = vector.multi_reduction <add>, %93, %cst_40 [1] : vector<10x10xf32> to vector<10xf32>
    %95 = vector.shape_cast %94 : vector<10xf32> to vector<10x1xf32>
    %96 = vector.broadcast %95 : vector<10x1xf32> to vector<10x10xf32>
    %97 = arith.divf %93, %96 : vector<10x10xf32>
    %cst_41 = arith.constant dense<0.000000e+00> : vector<10x32xf32>
    %98 = tpu.matmul %97, %86, %cst_41 {dimension_numbers = #tpu.dot_dimension_numbers<[1], [0], [0], [1], [0, 0, 1, 1], [], []>} : vector<10x10xf32>, vector<10x32xf32>, vector<10x32xf32> -> vector<10x32xf32>
    %99 = arith.truncf %98 : vector<10x32xf32> to vector<10x32xbf16>
    %100 = vector.extract_strided_slice %38 {offsets = [64, 0], sizes = [32, 128], strides = [1, 1]} : vector<128x128xbf16> to vector<32x128xbf16>
    %cst_42 = arith.constant dense<0.000000e+00> : vector<10x128xf32>
    %101 = tpu.matmul %99, %100, %cst_42 {dimension_numbers = #tpu.dot_dimension_numbers<[1], [0], [0], [1], [0, 0, 1, 1], [], []>} : vector<10x32xbf16>, vector<32x128xbf16>, vector<10x128xf32> -> vector<10x128xf32>
    %102 = arith.addf %81, %101 : vector<10x128xf32>
    %103 = vector.extract_strided_slice %36 {offsets = [0, 96], sizes = [10, 32], strides = [1, 1]} : vector<10x384xf32> to vector<10x32xf32>
    %cst_43 = arith.constant 0.176776692 : f32
    %104 = vector.broadcast %cst_43 : f32 to vector<10x32xf32>
    %105 = arith.mulf %103, %104 : vector<10x32xf32>
    %106 = vector.extract_strided_slice %36 {offsets = [0, 224], sizes = [10, 32], strides = [1, 1]} : vector<10x384xf32> to vector<10x32xf32>
    %107 = vector.extract_strided_slice %36 {offsets = [0, 352], sizes = [10, 32], strides = [1, 1]} : vector<10x384xf32> to vector<10x32xf32>
    %cst_44 = arith.constant dense<0.000000e+00> : vector<10x10xf32>
    %108 = tpu.matmul %105, %106, %cst_44 {dimension_numbers = #tpu.dot_dimension_numbers<[1], [1], [0], [0], [0, 0, 1, 0], [], []>} : vector<10x32xf32>, vector<10x32xf32>, vector<10x10xf32> -> vector<10x10xf32>
    %109 = arith.addf %108, %4 : vector<10x10xf32>
    %cst_45 = arith.constant dense<0xFF800000> : vector<10xf32>
    %110 = vector.multi_reduction <maximumf>, %109, %cst_45 [1] : vector<10x10xf32> to vector<10xf32>
    %111 = vector.shape_cast %110 : vector<10xf32> to vector<10x1xf32>
    %112 = vector.broadcast %111 : vector<10x1xf32> to vector<10x10xf32>
    %113 = arith.subf %109, %112 : vector<10x10xf32>
    %114 = math.exp %113 : vector<10x10xf32>
    %cst_46 = arith.constant dense<0.000000e+00> : vector<10xf32>
    %115 = vector.multi_reduction <add>, %114, %cst_46 [1] : vector<10x10xf32> to vector<10xf32>
    %116 = vector.shape_cast %115 : vector<10xf32> to vector<10x1xf32>
    %117 = vector.broadcast %116 : vector<10x1xf32> to vector<10x10xf32>
    %118 = arith.divf %114, %117 : vector<10x10xf32>
    %cst_47 = arith.constant dense<0.000000e+00> : vector<10x32xf32>
    %119 = tpu.matmul %118, %107, %cst_47 {dimension_numbers = #tpu.dot_dimension_numbers<[1], [0], [0], [1], [0, 0, 1, 1], [], []>} : vector<10x10xf32>, vector<10x32xf32>, vector<10x32xf32> -> vector<10x32xf32>
    %120 = arith.truncf %119 : vector<10x32xf32> to vector<10x32xbf16>
    %121 = vector.extract_strided_slice %38 {offsets = [96, 0], sizes = [32, 128], strides = [1, 1]} : vector<128x128xbf16> to vector<32x128xbf16>
    %cst_48 = arith.constant dense<0.000000e+00> : vector<10x128xf32>
    %122 = tpu.matmul %120, %121, %cst_48 {dimension_numbers = #tpu.dot_dimension_numbers<[1], [0], [0], [1], [0, 0, 1, 1], [], []>} : vector<10x32xbf16>, vector<32x128xbf16>, vector<10x128xf32> -> vector<10x128xf32>
    %123 = arith.addf %102, %122 : vector<10x128xf32>
    %124 = arith.addf %3, %123 : vector<10x128xf32>
    %c0_49 = arith.constant 0 : index
    %c0_50 = arith.constant 0 : index
    %c0_51 = arith.constant 0 : index
    %125 = vector.load %arg12[%c0_49, %c0_50, %c0_51] : memref<1x1x128xf32, #tpu.memory_space<vmem>>, vector<1x1x128xf32>
    %126 = vector.shape_cast %125 : vector<1x1x128xf32> to vector<1x128xf32>
    %127 = vector.broadcast %126 : vector<1x128xf32> to vector<10x128xf32>
    %128 = arith.addf %124, %127 : vector<10x128xf32>
    %c0_52 = arith.constant 0 : index
    %c0_53 = arith.constant 0 : index
    %c0_54 = arith.constant 0 : index
    %129 = vector.load %arg13[%c0_52, %c0_53, %c0_54] : memref<1x1x128xf32, #tpu.memory_space<vmem>>, vector<1x1x128xf32>
    %130 = vector.shape_cast %129 : vector<1x1x128xf32> to vector<1x128xf32>
    %c0_55 = arith.constant 0 : index
    %c0_56 = arith.constant 0 : index
    %c0_57 = arith.constant 0 : index
    %131 = vector.load %arg14[%c0_55, %c0_56, %c0_57] : memref<1x1x128xf32, #tpu.memory_space<vmem>>, vector<1x1x128xf32>
    %132 = vector.shape_cast %131 : vector<1x1x128xf32> to vector<1x128xf32>
    %cst_58 = arith.constant dense<0.000000e+00> : vector<10xf32>
    %133 = vector.multi_reduction <add>, %128, %cst_58 [1] : vector<10x128xf32> to vector<10xf32>
    %134 = vector.shape_cast %133 : vector<10xf32> to vector<10x1xf32>
    %cst_59 = arith.constant 1.280000e+02 : f32
    %135 = vector.broadcast %cst_59 : f32 to vector<10x1xf32>
    %136 = arith.divf %134, %135 : vector<10x1xf32>
    %137 = vector.broadcast %136 : vector<10x1xf32> to vector<10x128xf32>
    %138 = arith.subf %128, %137 : vector<10x128xf32>
    %139 = arith.mulf %138, %138 : vector<10x128xf32>
    %cst_60 = arith.constant dense<0.000000e+00> : vector<10xf32>
    %140 = vector.multi_reduction <add>, %139, %cst_60 [1] : vector<10x128xf32> to vector<10xf32>
    %141 = vector.shape_cast %140 : vector<10xf32> to vector<10x1xf32>
    %cst_61 = arith.constant 1.280000e+02 : f32
    %142 = vector.broadcast %cst_61 : f32 to vector<10x1xf32>
    %143 = arith.divf %141, %142 : vector<10x1xf32>
    %cst_62 = arith.constant 9.99999974E-6 : f32
    %144 = vector.broadcast %cst_62 : f32 to vector<10x1xf32>
    %145 = arith.addf %143, %144 : vector<10x1xf32>
    %146 = math.rsqrt %145 : vector<10x1xf32>
    %147 = vector.broadcast %146 : vector<10x1xf32> to vector<10x128xf32>
    %148 = arith.mulf %138, %147 : vector<10x128xf32>
    %149 = vector.broadcast %130 : vector<1x128xf32> to vector<10x128xf32>
    %150 = arith.mulf %148, %149 : vector<10x128xf32>
    %151 = vector.broadcast %132 : vector<1x128xf32> to vector<10x128xf32>
    %152 = arith.addf %150, %151 : vector<10x128xf32>
    %153 = arith.truncf %152 : vector<10x128xf32> to vector<10x128xbf16>
    %c0_63 = arith.constant 0 : index
    %c0_64 = arith.constant 0 : index
    %c0_65 = arith.constant 0 : index
    %154 = vector.load %arg15[%c0_63, %c0_64, %c0_65] : memref<1x128x512xbf16, #tpu.memory_space<vmem>>, vector<1x128x512xbf16>
    %155 = vector.shape_cast %154 : vector<1x128x512xbf16> to vector<128x512xbf16>
    %cst_66 = arith.constant dense<0.000000e+00> : vector<10x512xf32>
    %156 = tpu.matmul %153, %155, %cst_66 {dimension_numbers = #tpu.dot_dimension_numbers<[1], [0], [0], [1], [0, 0, 1, 1], [], []>} : vector<10x128xbf16>, vector<128x512xbf16>, vector<10x512xf32> -> vector<10x512xf32>
    %c0_67 = arith.constant 0 : index
    %c0_68 = arith.constant 0 : index
    %c0_69 = arith.constant 0 : index
    %157 = vector.load %arg16[%c0_67, %c0_68, %c0_69] : memref<1x1x512xf32, #tpu.memory_space<vmem>>, vector<1x1x512xf32>
    %158 = vector.shape_cast %157 : vector<1x1x512xf32> to vector<1x512xf32>
    %159 = vector.broadcast %158 : vector<1x512xf32> to vector<10x512xf32>
    %160 = arith.addf %156, %159 : vector<10x512xf32>
    %cst_70 = arith.constant 1.702000e+00 : f32
    %161 = vector.broadcast %cst_70 : f32 to vector<10x512xf32>
    %162 = arith.mulf %161, %160 : vector<10x512xf32>
    %163 = arith.negf %162 : vector<10x512xf32>
    %164 = math.exp %163 : vector<10x512xf32>
    %cst_71 = arith.constant 1.000000e+00 : f32
    %165 = vector.broadcast %cst_71 : f32 to vector<10x512xf32>
    %166 = arith.addf %165, %164 : vector<10x512xf32>
    %167 = arith.divf %165, %166 : vector<10x512xf32>
    %168 = arith.mulf %160, %167 : vector<10x512xf32>
    %169 = arith.truncf %168 : vector<10x512xf32> to vector<10x512xbf16>
    %c0_72 = arith.constant 0 : index
    %c0_73 = arith.constant 0 : index
    %c0_74 = arith.constant 0 : index
    %170 = vector.load %arg17[%c0_72, %c0_73, %c0_74] : memref<1x512x128xbf16, #tpu.memory_space<vmem>>, vector<1x512x128xbf16>
    %171 = vector.shape_cast %170 : vector<1x512x128xbf16> to vector<512x128xbf16>
    %cst_75 = arith.constant dense<0.000000e+00> : vector<10x128xf32>
    %172 = tpu.matmul %169, %171, %cst_75 {dimension_numbers = #tpu.dot_dimension_numbers<[1], [0], [0], [1], [0, 0, 1, 1], [], []>} : vector<10x512xbf16>, vector<512x128xbf16>, vector<10x128xf32> -> vector<10x128xf32>
    %c0_76 = arith.constant 0 : index
    %c0_77 = arith.constant 0 : index
    %c0_78 = arith.constant 0 : index
    %173 = vector.load %arg18[%c0_76, %c0_77, %c0_78] : memref<1x1x128xf32, #tpu.memory_space<vmem>>, vector<1x1x128xf32>
    %174 = vector.shape_cast %173 : vector<1x1x128xf32> to vector<1x128xf32>
    %175 = vector.broadcast %174 : vector<1x128xf32> to vector<10x128xf32>
    %176 = arith.addf %172, %175 : vector<10x128xf32>
    %177 = arith.addf %128, %176 : vector<10x128xf32>
    %c0_79 = arith.constant 0 : index
    %c0_80 = arith.constant 0 : index
    %178 = vector.load %arg23[%c0_79, %c0_80] : memref<10x128xf32, #tpu.memory_space<vmem>>, vector<10x128xf32>
    tpu.vector_store %arg23[%c0_79, %c0_80], %177 {strides = array<i32>} : memref<10x128xf32, #tpu.memory_space<vmem>>, vector<10x128xf32>,
    %c1_i32 = arith.constant 1 : i32
    %179 = arith.cmpi eq, %arg0, %c1_i32 : i32
    %180 = arith.extui %179 : i1 to i32
    %c0_i32_81 = arith.constant 0 : i32
    %181 = arith.cmpi ne, %180, %c0_i32_81 : i32
    scf.if %181 {
      %c0_82 = arith.constant 0 : index
      %c0_83 = arith.constant 0 : index
      %182 = vector.load %arg19[%c0_82, %c0_83] : memref<1x128xf32, #tpu.memory_space<vmem>>, vector<1x128xf32>
      %c0_84 = arith.constant 0 : index
      %c0_85 = arith.constant 0 : index
      %183 = vector.load %arg20[%c0_84, %c0_85] : memref<1x128xf32, #tpu.memory_space<vmem>>, vector<1x128xf32>
      %c0_86 = arith.constant 0 : index
      %c0_87 = arith.constant 0 : index
      %184 = vector.load %arg21[%c0_86, %c0_87] : memref<128x256xf32, #tpu.memory_space<vmem>>, vector<128x256xf32>
      %185 = vector.extract_strided_slice %177 {offsets = [0, 0], sizes = [1, 128], strides = [1, 1]} : vector<10x128xf32> to vector<1x128xf32>
      %cst_88 = arith.constant dense<0.000000e+00> : vector<1xf32>
      %186 = vector.multi_reduction <add>, %185, %cst_88 [1] : vector<1x128xf32> to vector<1xf32>
      %187 = vector.shape_cast %186 : vector<1xf32> to vector<1x1xf32>
      %cst_89 = arith.constant 1.280000e+02 : f32
      %188 = vector.broadcast %cst_89 : f32 to vector<1x1xf32>
      %189 = arith.divf %187, %188 : vector<1x1xf32>
      %190 = vector.broadcast %189 : vector<1x1xf32> to vector<1x128xf32>
      %191 = arith.subf %185, %190 : vector<1x128xf32>
      %192 = arith.mulf %191, %191 : vector<1x128xf32>
      %cst_90 = arith.constant dense<0.000000e+00> : vector<1xf32>
      %193 = vector.multi_reduction <add>, %192, %cst_90 [1] : vector<1x128xf32> to vector<1xf32>
      %194 = vector.shape_cast %193 : vector<1xf32> to vector<1x1xf32>
      %cst_91 = arith.constant 1.280000e+02 : f32
      %195 = vector.broadcast %cst_91 : f32 to vector<1x1xf32>
      %196 = arith.divf %194, %195 : vector<1x1xf32>
      %cst_92 = arith.constant 9.99999974E-6 : f32
      %197 = vector.broadcast %cst_92 : f32 to vector<1x1xf32>
      %198 = arith.addf %196, %197 : vector<1x1xf32>
      %199 = math.rsqrt %198 : vector<1x1xf32>
      %200 = vector.broadcast %199 : vector<1x1xf32> to vector<1x128xf32>
      %201 = arith.mulf %191, %200 : vector<1x128xf32>
      %202 = arith.mulf %201, %182 : vector<1x128xf32>
      %203 = arith.addf %202, %183 : vector<1x128xf32>
      %cst_93 = arith.constant dense<0.000000e+00> : vector<1x256xf32>
      %204 = tpu.matmul %203, %184, %cst_93 {dimension_numbers = #tpu.dot_dimension_numbers<[1], [0], [0], [1], [0, 0, 1, 1], [], []>} : vector<1x128xf32>, vector<128x256xf32>, vector<1x256xf32> -> vector<1x256xf32>
      %205 = arith.negf %204 : vector<1x256xf32>
      %206 = math.exp %205 : vector<1x256xf32>
      %cst_94 = arith.constant 1.000000e+00 : f32
      %207 = vector.broadcast %cst_94 : f32 to vector<1x256xf32>
      %208 = arith.addf %207, %206 : vector<1x256xf32>
      %209 = arith.divf %207, %208 : vector<1x256xf32>
      %c0_95 = arith.constant 0 : index
      %c0_96 = arith.constant 0 : index
      %210 = vector.load %arg22[%c0_95, %c0_96] : memref<2x256xf32, #tpu.memory_space<vmem>>, vector<1x256xf32>
      tpu.vector_store %arg22[%c0_95, %c0_96], %209 {strides = array<i32>} : memref<2x256xf32, #tpu.memory_space<vmem>>, vector<1x256xf32>,
      %211 = vector.extract_strided_slice %177 {offsets = [5, 0], sizes = [1, 128], strides = [1, 1]} : vector<10x128xf32> to vector<1x128xf32>
      %cst_97 = arith.constant dense<0.000000e+00> : vector<1xf32>
      %212 = vector.multi_reduction <add>, %211, %cst_97 [1] : vector<1x128xf32> to vector<1xf32>
      %213 = vector.shape_cast %212 : vector<1xf32> to vector<1x1xf32>
      %cst_98 = arith.constant 1.280000e+02 : f32
      %214 = vector.broadcast %cst_98 : f32 to vector<1x1xf32>
      %215 = arith.divf %213, %214 : vector<1x1xf32>
      %216 = vector.broadcast %215 : vector<1x1xf32> to vector<1x128xf32>
      %217 = arith.subf %211, %216 : vector<1x128xf32>
      %218 = arith.mulf %217, %217 : vector<1x128xf32>
      %cst_99 = arith.constant dense<0.000000e+00> : vector<1xf32>
      %219 = vector.multi_reduction <add>, %218, %cst_99 [1] : vector<1x128xf32> to vector<1xf32>
      %220 = vector.shape_cast %219 : vector<1xf32> to vector<1x1xf32>
      %cst_100 = arith.constant 1.280000e+02 : f32
      %221 = vector.broadcast %cst_100 : f32 to vector<1x1xf32>
      %222 = arith.divf %220, %221 : vector<1x1xf32>
      %cst_101 = arith.constant 9.99999974E-6 : f32
      %223 = vector.broadcast %cst_101 : f32 to vector<1x1xf32>
      %224 = arith.addf %222, %223 : vector<1x1xf32>
      %225 = math.rsqrt %224 : vector<1x1xf32>
      %226 = vector.broadcast %225 : vector<1x1xf32> to vector<1x128xf32>
      %227 = arith.mulf %217, %226 : vector<1x128xf32>
      %228 = arith.mulf %227, %182 : vector<1x128xf32>
      %229 = arith.addf %228, %183 : vector<1x128xf32>
      %cst_102 = arith.constant dense<0.000000e+00> : vector<1x256xf32>
      %230 = tpu.matmul %229, %184, %cst_102 {dimension_numbers = #tpu.dot_dimension_numbers<[1], [0], [0], [1], [0, 0, 1, 1], [], []>} : vector<1x128xf32>, vector<128x256xf32>, vector<1x256xf32> -> vector<1x256xf32>
      %231 = arith.negf %230 : vector<1x256xf32>
      %232 = math.exp %231 : vector<1x256xf32>
      %cst_103 = arith.constant 1.000000e+00 : f32
      %233 = vector.broadcast %cst_103 : f32 to vector<1x256xf32>
      %234 = arith.addf %233, %232 : vector<1x256xf32>
      %235 = arith.divf %233, %234 : vector<1x256xf32>
      %c1 = arith.constant 1 : index
      %c0_104 = arith.constant 0 : index
      %236 = vector.load %arg22[%c1, %c0_104] : memref<2x256xf32, #tpu.memory_space<vmem>>, vector<1x256xf32>
      tpu.vector_store %arg22[%c1, %c0_104], %235 {strides = array<i32>} : memref<2x256xf32, #tpu.memory_space<vmem>>, vector<1x256xf32>,
    } else {
    }
    return
  }
  func.func @transform_0(%arg0: i32) -> (i32, i32) {
    %c0_i32 = arith.constant 0 : i32
    %c0_i32_0 = arith.constant 0 : i32
    %c0_i32_1 = arith.constant 0 : i32
    return %c0_i32, %c0_i32_0 : i32, i32
  }
  func.func @transform_1(%arg0: i32) -> (i32, i32) {
    %c0_i32 = arith.constant 0 : i32
    %c0_i32_0 = arith.constant 0 : i32
    %c0_i32_1 = arith.constant 0 : i32
    return %c0_i32, %c0_i32_0 : i32, i32
  }
  func.func @transform_2(%arg0: i32) -> (i32, i32) {
    %c0_i32 = arith.constant 0 : i32
    %c0_i32_0 = arith.constant 0 : i32
    %c0_i32_1 = arith.constant 0 : i32
    return %c0_i32, %c0_i32_0 : i32, i32
  }
  func.func @transform_3(%arg0: i32) -> (i32, i32) {
    %c0_i32 = arith.constant 0 : i32
    %c0_i32_0 = arith.constant 0 : i32
    %c0_i32_1 = arith.constant 0 : i32
    return %c0_i32, %c0_i32_0 : i32, i32
  }
  func.func @transform_4(%arg0: i32) -> (i32, i32) {
    %c0_i32 = arith.constant 0 : i32
    %c0_i32_0 = arith.constant 0 : i32
    %c0_i32_1 = arith.constant 0 : i32
    return %c0_i32, %c0_i32_0 : i32, i32
  }
  func.func @transform_5(%arg0: i32) -> (i32, i32) {
    %c0_i32 = arith.constant 0 : i32
    %c0_i32_0 = arith.constant 0 : i32
    %c0_i32_1 = arith.constant 0 : i32
    return %c0_i32, %c0_i32_0 : i32, i32
  }
  func.func @transform_6(%arg0: i32) -> (i32, i32, i32) {
    %c0_i32 = arith.constant 0 : i32
    %c0_i32_0 = arith.constant 0 : i32
    %c0_i32_1 = arith.constant 0 : i32
    return %arg0, %c0_i32, %c0_i32_0 : i32, i32, i32
  }
  func.func @transform_7(%arg0: i32) -> (i32, i32, i32) {
    %c0_i32 = arith.constant 0 : i32
    %c0_i32_0 = arith.constant 0 : i32
    %c0_i32_1 = arith.constant 0 : i32
    return %arg0, %c0_i32, %c0_i32_0 : i32, i32, i32
  }
  func.func @transform_8(%arg0: i32) -> (i32, i32, i32) {
    %c0_i32 = arith.constant 0 : i32
    %c0_i32_0 = arith.constant 0 : i32
    %c0_i32_1 = arith.constant 0 : i32
    return %arg0, %c0_i32, %c0_i32_0 : i32, i32, i32
  }
  func.func @transform_9(%arg0: i32) -> (i32, i32, i32) {
    %c0_i32 = arith.constant 0 : i32
    %c0_i32_0 = arith.constant 0 : i32
    %c0_i32_1 = arith.constant 0 : i32
    return %arg0, %c0_i32, %c0_i32_0 : i32, i32, i32
  }
  func.func @transform_10(%arg0: i32) -> (i32, i32, i32) {
    %c0_i32 = arith.constant 0 : i32
    %c0_i32_0 = arith.constant 0 : i32
    %c0_i32_1 = arith.constant 0 : i32
    return %arg0, %c0_i32, %c0_i32_0 : i32, i32, i32
  }
  func.func @transform_11(%arg0: i32) -> (i32, i32, i32) {
    %c0_i32 = arith.constant 0 : i32
    %c0_i32_0 = arith.constant 0 : i32
    %c0_i32_1 = arith.constant 0 : i32
    return %arg0, %c0_i32, %c0_i32_0 : i32, i32, i32
  }
  func.func @transform_12(%arg0: i32) -> (i32, i32, i32) {
    %c0_i32 = arith.constant 0 : i32
    %c0_i32_0 = arith.constant 0 : i32
    %c0_i32_1 = arith.constant 0 : i32
    return %arg0, %c0_i32, %c0_i32_0 : i32, i32, i32
  }
  func.func @transform_13(%arg0: i32) -> (i32, i32, i32) {
    %c0_i32 = arith.constant 0 : i32
    %c0_i32_0 = arith.constant 0 : i32
    %c0_i32_1 = arith.constant 0 : i32
    return %arg0, %c0_i32, %c0_i32_0 : i32, i32, i32
  }
  func.func @transform_14(%arg0: i32) -> (i32, i32, i32) {
    %c0_i32 = arith.constant 0 : i32
    %c0_i32_0 = arith.constant 0 : i32
    %c0_i32_1 = arith.constant 0 : i32
    return %arg0, %c0_i32, %c0_i32_0 : i32, i32, i32
  }
  func.func @transform_15(%arg0: i32) -> (i32, i32, i32) {
    %c0_i32 = arith.constant 0 : i32
    %c0_i32_0 = arith.constant 0 : i32
    %c0_i32_1 = arith.constant 0 : i32
    return %arg0, %c0_i32, %c0_i32_0 : i32, i32, i32
  }
  func.func @transform_16(%arg0: i32) -> (i32, i32, i32) {
    %c0_i32 = arith.constant 0 : i32
    %c0_i32_0 = arith.constant 0 : i32
    %c0_i32_1 = arith.constant 0 : i32
    return %arg0, %c0_i32, %c0_i32_0 : i32, i32, i32
  }
  func.func @transform_17(%arg0: i32) -> (i32, i32, i32) {
    %c0_i32 = arith.constant 0 : i32
    %c0_i32_0 = arith.constant 0 : i32
    %c0_i32_1 = arith.constant 0 : i32
    return %arg0, %c0_i32, %c0_i32_0 : i32, i32, i32
  }
  func.func @transform_18(%arg0: i32) -> (i32, i32) {
    %c0_i32 = arith.constant 0 : i32
    %c0_i32_0 = arith.constant 0 : i32
    %c0_i32_1 = arith.constant 0 : i32
    return %c0_i32, %c0_i32_0 : i32, i32
  }
  func.func @transform_19(%arg0: i32) -> (i32, i32) {
    %c0_i32 = arith.constant 0 : i32
    %c0_i32_0 = arith.constant 0 : i32
    %c0_i32_1 = arith.constant 0 : i32
    return %c0_i32, %c0_i32_0 : i32, i32
  }
  func.func @transform_20(%arg0: i32) -> (i32, i32) {
    %c0_i32 = arith.constant 0 : i32
    %c0_i32_0 = arith.constant 0 : i32
    %c0_i32_1 = arith.constant 0 : i32
    return %c0_i32, %c0_i32_0 : i32, i32
  }
  func.func @transform_21(%arg0: i32) -> (i32, i32) {
    %c0_i32 = arith.constant 0 : i32
    %c0_i32_0 = arith.constant 0 : i32
    %c0_i32_1 = arith.constant 0 : i32
    return %c0_i32, %c0_i32_0 : i32, i32
  }
}

</mosaic_0001>

<llo_original>
// kernel: tile.19
$region0: #{tile.19}
  %s0 = inlined_call_operand.vmem [shape: f32[2,5,128], index: 0, kind: input, shape index: {}]
  %s1 = inlined_call_operand.vmem [shape: f32[10,128], index: 1, kind: output, shape index: {}]
  %v2 = vld [vmem:[%s0] sm:$0x1f]
  %3 = vst [vmem:[%s1] sm:$0x1f] %v2
  %s4 = scalar_lea.vmem %s0, 8
  %v5 = vld [vmem:[%s4] sm:$0x1f]
  %s6 = scalar_lea.vmem %s1, 5
  %7 = vst [vmem:[%s6] sm:$0x1f] %v5

// kernel: vision_transformer_forward.1
$region0: #{vision_transformer_forward.1}
  #allocation0 [shape = 'u32[]', space=smem, size = 0x4, offset = 0x4, fixed_abs, tag = 'smem constant byte address 0x4 - core index']
  #allocation1 [shape = 'u32[144,128]{1,0:T(1,128)}', space=vmem, size = 0x12000, scoped, tag = 'internal scratch']
  #allocation2 [shape = 'f32[10,128]{1,0:T(8,128)}', space=vmem, size = 0x2000, scoped, tag = 'scratch operand']
  %s0 = inlined_call_operand.vmem [shape: f32[10,1296], index: 0, kind: input, shape index: {}]
  %s1 = inlined_call_operand.vmem [shape: f32[1296,128], index: 1, kind: input, shape index: {}]
  %s2 = inlined_call_operand.vmem [shape: f32[10,128], index: 2, kind: input, shape index: {}]
  %s3 = inlined_call_operand.vmem [shape: f32[1,128], index: 3, kind: input, shape index: {}]
  %s4 = inlined_call_operand.vmem [shape: f32[1,128], index: 4, kind: input, shape index: {}]
  %s5 = inlined_call_operand.vmem [shape: f32[10,10], index: 5, kind: input, shape index: {}]
  %s6 = inlined_call_operand.vmem [shape: f32[2,1,128], index: 6, kind: input, shape index: {}]
  %s7 = inlined_call_operand.vmem [shape: f32[2,1,128], index: 7, kind: input, shape index: {}]
  %s8 = inlined_call_operand.vmem [shape: bf16[2,128,384], index: 8, kind: input, shape index: {}]
  %s9 = inlined_call_operand.vmem [shape: f32[2,1,384], index: 9, kind: input, shape index: {}]
  %s10 = inlined_call_operand.vmem [shape: bf16[2,128,128], index: 10, kind: input, shape index: {}]
  %s11 = inlined_call_operand.vmem [shape: f32[2,1,128], index: 11, kind: input, shape index: {}]
  %s12 = inlined_call_operand.vmem [shape: f32[2,1,128], index: 12, kind: input, shape index: {}]
  %s13 = inlined_call_operand.vmem [shape: f32[2,1,128], index: 13, kind: input, shape index: {}]
  %s14 = inlined_call_operand.vmem [shape: bf16[2,128,512], index: 14, kind: input, shape index: {}]
  %s15 = inlined_call_operand.vmem [shape: f32[2,1,512], index: 15, kind: input, shape index: {}]
  %s16 = inlined_call_operand.vmem [shape: bf16[2,512,128], index: 16, kind: input, shape index: {}]
  %s17 = inlined_call_operand.vmem [shape: f32[2,1,128], index: 17, kind: input, shape index: {}]
  %s18 = inlined_call_operand.vmem [shape: f32[1,128], index: 18, kind: input, shape index: {}]
  %s19 = inlined_call_operand.vmem [shape: f32[1,128], index: 19, kind: input, shape index: {}]
  %s20 = inlined_call_operand.vmem [shape: f32[128,256], index: 20, kind: input, shape index: {}]
  %s21 = inlined_call_operand.vmem [shape: f32[2,256], index: 21, kind: output, shape index: {}]
  %s22 = sld [smem:[#allocation0]]
  $region125: #{vision_transformer_forward.1} parent=0
    _
  %s24 = ssub.s32 1, %s22
  %s25 = scalar_select 0, %s24, %s22
  loop: start=0, step=1, limit=4
  $region2: #{vision_transformer_forward.1} parent=0 // loop_pre_header
    _
  $region3: #{vision_transformer_forward.1} parent=0 // loop_header
    %s27 = sphi 0, %s31
    %p28 = scmp.ge.s32.totalorder %s27, 4
    %s35 = sphi 0, %s35
    %s37 = sphi 0, %s35
    %s38 = sphi 0, %s37
    %s52 = sphi 0, %s38
    %s56 = sphi 0, %s56
    %s58 = sphi 0, %s56
    %s59 = sphi 0, %s58
    %s73 = sphi 0, %s59
    %s77 = sphi 0, %s77
    %s79 = sphi 0, %s77
    %s80 = sphi 0, %s79
    %s94 = sphi 0, %s80
    %s98 = sphi 0, %s98
    %s100 = sphi 0, %s98
    %s101 = sphi 0, %s100
    %s115 = sphi 0, %s101
    %s119 = sphi 0, %s119
    %s121 = sphi 0, %s119
    %s122 = sphi 0, %s121
    %s136 = sphi 0, %s122
    %s140 = sphi 0, %s140
    %s142 = sphi 0, %s140
    %s143 = sphi 0, %s142
    %s157 = sphi 0, %s143
    %s163 = sphi 0, %s165
    %s166 = sphi 0, %s163
    %s167 = sphi 0, %s166
    %s183 = sphi 0, %s167
    %s189 = sphi 0, %s191
    %s192 = sphi 0, %s189
    %s193 = sphi 0, %s192
    %s209 = sphi 0, %s193
    %s215 = sphi 0, %s217
    %s218 = sphi 0, %s215
    %s219 = sphi 0, %s218
    %s235 = sphi 0, %s219
    %s241 = sphi 0, %s243
    %s244 = sphi 0, %s241
    %s245 = sphi 0, %s244
    %s261 = sphi 0, %s245
    %s267 = sphi 0, %s269
    %s270 = sphi 0, %s267
    %s271 = sphi 0, %s270
    %s287 = sphi 0, %s271
    %s293 = sphi 0, %s295
    %s296 = sphi 0, %s293
    %s297 = sphi 0, %s296
    %s313 = sphi 0, %s297
    %s319 = sphi 0, %s321
    %s322 = sphi 0, %s319
    %s323 = sphi 0, %s322
    %s339 = sphi 0, %s323
    %s345 = sphi 0, %s347
    %s348 = sphi 0, %s345
    %s349 = sphi 0, %s348
    %s365 = sphi 0, %s349
    %s371 = sphi 0, %s373
    %s374 = sphi 0, %s371
    %s375 = sphi 0, %s374
    %s391 = sphi 0, %s375
    %s397 = sphi 0, %s399
    %s400 = sphi 0, %s397
    %s401 = sphi 0, %s400
    %s417 = sphi 0, %s401
    %s423 = sphi 0, %s425
    %s426 = sphi 0, %s423
    %s427 = sphi 0, %s426
    %s443 = sphi 0, %s427
    %s449 = sphi 0, %s451
    %s452 = sphi 0, %s449
    %s453 = sphi 0, %s452
    %s469 = sphi 0, %s453
    %s473 = sphi 0, %s473
    %s475 = sphi 0, %s473
    %s476 = sphi 0, %s475
    %s490 = sphi 0, %s476
    %s494 = sphi 0, %s494
    %s496 = sphi 0, %s494
    %s497 = sphi 0, %s496
    %s511 = sphi 0, %s497
    %s515 = sphi 0, %s515
    %s517 = sphi 0, %s515
    %s518 = sphi 0, %s517
    %s532 = sphi 0, %s518
    %s536 = sphi 0, %s536
    %s538 = sphi 0, %s536
    %s539 = sphi 0, %s538
    %s553 = sphi 0, %s539
  $region4: #{vision_transformer_forward.1} parent=0 // loop_header_branch
    %30 = sbr.rel (%p28) target = $region8
  $region5: #{vision_transformer_forward.1} parent=0 // loop_body
    %s32 = ssub.s32 %s27, 1
    %s33 = ssub.s32 %s27, 2
    %s34 = sadd.s32 %s27, 1
    %s36 = sadd.s32 %s35, 1
    %p39 = scmp.eq.s32.totalorder %s27, 1
    %p40 = scmp.ne.s32.totalorder %s35, %s37
    %p41 = scmp.eq.s32.totalorder %s27, 0
    %p42 = por %p40, %p41
    %p43 = scmp.ne.s32.totalorder %s35, %s37
    %p44 = scmp.eq.s32.totalorder %s32, 1
    %p45 = por %p43, %p44
    %p46 = scmp.ne.s32.totalorder %s37, %s38
    %p47 = scmp.eq.s32.totalorder %s32, 0
    %p48 = por %p46, %p47
    %p49 = scmp.ne.s32.totalorder %s37, %s38
    %p50 = scmp.eq.s32.totalorder %s33, 1
    %p51 = por %p49, %p50
    %p53 = scmp.ne.s32.totalorder %s38, %s52
    %p54 = scmp.eq.s32.totalorder %s33, 0
    %p55 = por %p53, %p54
    %s57 = sadd.s32 %s56, 1
    %p60 = scmp.eq.s32.totalorder %s27, 1
    %p61 = scmp.ne.s32.totalorder %s56, %s58
    %p62 = scmp.eq.s32.totalorder %s27, 0
    %p63 = por %p61, %p62
    %p64 = scmp.ne.s32.totalorder %s56, %s58
    %p65 = scmp.eq.s32.totalorder %s32, 1
    %p66 = por %p64, %p65
    %p67 = scmp.ne.s32.totalorder %s58, %s59
    %p68 = scmp.eq.s32.totalorder %s32, 0
    %p69 = por %p67, %p68
    %p70 = scmp.ne.s32.totalorder %s58, %s59
    %p71 = scmp.eq.s32.totalorder %s33, 1
    %p72 = por %p70, %p71
    %p74 = scmp.ne.s32.totalorder %s59, %s73
    %p75 = scmp.eq.s32.totalorder %s33, 0
    %p76 = por %p74, %p75
    %s78 = sadd.s32 %s77, 1
    %p81 = scmp.eq.s32.totalorder %s27, 1
    %p82 = scmp.ne.s32.totalorder %s77, %s79
    %p83 = scmp.eq.s32.totalorder %s27, 0
    %p84 = por %p82, %p83
    %p85 = scmp.ne.s32.totalorder %s77, %s79
    %p86 = scmp.eq.s32.totalorder %s32, 1
    %p87 = por %p85, %p86
    %p88 = scmp.ne.s32.totalorder %s79, %s80
    %p89 = scmp.eq.s32.totalorder %s32, 0
    %p90 = por %p88, %p89
    %p91 = scmp.ne.s32.totalorder %s79, %s80
    %p92 = scmp.eq.s32.totalorder %s33, 1
    %p93 = por %p91, %p92
    %p95 = scmp.ne.s32.totalorder %s80, %s94
    %p96 = scmp.eq.s32.totalorder %s33, 0
    %p97 = por %p95, %p96
    %s99 = sadd.s32 %s98, 1
    %p102 = scmp.eq.s32.totalorder %s27, 1
    %p103 = scmp.ne.s32.totalorder %s98, %s100
    %p104 = scmp.eq.s32.totalorder %s27, 0
    %p105 = por %p103, %p104
    %p106 = scmp.ne.s32.totalorder %s98, %s100
    %p107 = scmp.eq.s32.totalorder %s32, 1
    %p108 = por %p106, %p107
    %p109 = scmp.ne.s32.totalorder %s100, %s101
    %p110 = scmp.eq.s32.totalorder %s32, 0
    %p111 = por %p109, %p110
    %p112 = scmp.ne.s32.totalorder %s100, %s101
    %p113 = scmp.eq.s32.totalorder %s33, 1
    %p114 = por %p112, %p113
    %p116 = scmp.ne.s32.totalorder %s101, %s115
    %p117 = scmp.eq.s32.totalorder %s33, 0
    %p118 = por %p116, %p117
    %s120 = sadd.s32 %s119, 1
    %p123 = scmp.eq.s32.totalorder %s27, 1
    %p124 = scmp.ne.s32.totalorder %s119, %s121
    %p125 = scmp.eq.s32.totalorder %s27, 0
    %p126 = por %p124, %p125
    %p127 = scmp.ne.s32.totalorder %s119, %s121
    %p128 = scmp.eq.s32.totalorder %s32, 1
    %p129 = por %p127, %p128
    %p130 = scmp.ne.s32.totalorder %s121, %s122
    %p131 = scmp.eq.s32.totalorder %s32, 0
    %p132 = por %p130, %p131
    %p133 = scmp.ne.s32.totalorder %s121, %s122
    %p134 = scmp.eq.s32.totalorder %s33, 1
    %p135 = por %p133, %p134
    %p137 = scmp.ne.s32.totalorder %s122, %s136
    %p138 = scmp.eq.s32.totalorder %s33, 0
    %p139 = por %p137, %p138
    %s141 = sadd.s32 %s140, 1
    %p144 = scmp.eq.s32.totalorder %s27, 1
    %p145 = scmp.ne.s32.totalorder %s140, %s142
    %p146 = scmp.eq.s32.totalorder %s27, 0
    %p147 = por %p145, %p146
    %p148 = scmp.ne.s32.totalorder %s140, %s142
    %p149 = scmp.eq.s32.totalorder %s32, 1
    %p150 = por %p148, %p149
    %p151 = scmp.ne.s32.totalorder %s142, %s143
    %p152 = scmp.eq.s32.totalorder %s32, 0
    %p153 = por %p151, %p152
    %p154 = scmp.ne.s32.totalorder %s142, %s143
    %p155 = scmp.eq.s32.totalorder %s33, 1
    %p156 = por %p154, %p155
    %p158 = scmp.ne.s32.totalorder %s143, %s157
    %p159 = scmp.eq.s32.totalorder %s33, 0
    %p160 = por %p158, %p159
    %s161 = ssub.s32 %s27, %s34
    %p162 = scmp.eq.s32.totalorder %s161, 0
    %s164 = sadd.s32 %s163, 1
    %s165 = scalar_select %p162, %s163, %s164
    %p168 = pneg %p162
    %p169 = scmp.eq.s32.totalorder %s27, 1
    %p170 = por %p168, %p169
    %p171 = scmp.ne.s32.totalorder %s163, %s166
    %p172 = scmp.eq.s32.totalorder %s27, 0
    %p173 = por %p171, %p172
    %p174 = scmp.ne.s32.totalorder %s163, %s166
    %p175 = scmp.eq.s32.totalorder %s32, 1
    %p176 = por %p174, %p175
    %p177 = scmp.ne.s32.totalorder %s166, %s167
    %p178 = scmp.eq.s32.totalorder %s32, 0
    %p179 = por %p177, %p178
    %p180 = scmp.ne.s32.totalorder %s166, %s167
    %p181 = scmp.eq.s32.totalorder %s33, 1
    %p182 = por %p180, %p181
    %p184 = scmp.ne.s32.totalorder %s167, %s183
    %p185 = scmp.eq.s32.totalorder %s33, 0
    %p186 = por %p184, %p185
    %s187 = ssub.s32 %s27, %s34
    %p188 = scmp.eq.s32.totalorder %s187, 0
    %s190 = sadd.s32 %s189, 1
    %s191 = scalar_select %p188, %s189, %s190
    %p194 = pneg %p188
    %p195 = scmp.eq.s32.totalorder %s27, 1
    %p196 = por %p194, %p195
    %p197 = scmp.ne.s32.totalorder %s189, %s192
    %p198 = scmp.eq.s32.totalorder %s27, 0
    %p199 = por %p197, %p198
    %p200 = scmp.ne.s32.totalorder %s189, %s192
    %p201 = scmp.eq.s32.totalorder %s32, 1
    %p202 = por %p200, %p201
    %p203 = scmp.ne.s32.totalorder %s192, %s193
    %p204 = scmp.eq.s32.totalorder %s32, 0
    %p205 = por %p203, %p204
    %p206 = scmp.ne.s32.totalorder %s192, %s193
    %p207 = scmp.eq.s32.totalorder %s33, 1
    %p208 = por %p206, %p207
    %p210 = scmp.ne.s32.totalorder %s193, %s209
    %p211 = scmp.eq.s32.totalorder %s33, 0
    %p212 = por %p210, %p211
    %s213 = ssub.s32 %s27, %s34
    %p214 = scmp.eq.s32.totalorder %s213, 0
    %s216 = sadd.s32 %s215, 1
    %s217 = scalar_select %p214, %s215, %s216
    %p220 = pneg %p214
    %p221 = scmp.eq.s32.totalorder %s27, 1
    %p222 = por %p220, %p221
    %p223 = scmp.ne.s32.totalorder %s215, %s218
    %p224 = scmp.eq.s32.totalorder %s27, 0
    %p225 = por %p223, %p224
    %p226 = scmp.ne.s32.totalorder %s215, %s218
    %p227 = scmp.eq.s32.totalorder %s32, 1
    %p228 = por %p226, %p227
    %p229 = scmp.ne.s32.totalorder %s218, %s219
    %p230 = scmp.eq.s32.totalorder %s32, 0
    %p231 = por %p229, %p230
    %p232 = scmp.ne.s32.totalorder %s218, %s219
    %p233 = scmp.eq.s32.totalorder %s33, 1
    %p234 = por %p232, %p233
    %p236 = scmp.ne.s32.totalorder %s219, %s235
    %p237 = scmp.eq.s32.totalorder %s33, 0
    %p238 = por %p236, %p237
    %s239 = ssub.s32 %s27, %s34
    %p240 = scmp.eq.s32.totalorder %s239, 0
    %s242 = sadd.s32 %s241, 1
    %s243 = scalar_select %p240, %s241, %s242
    %p246 = pneg %p240
    %p247 = scmp.eq.s32.totalorder %s27, 1
    %p248 = por %p246, %p247
    %p249 = scmp.ne.s32.totalorder %s241, %s244
    %p250 = scmp.eq.s32.totalorder %s27, 0
    %p251 = por %p249, %p250
    %p252 = scmp.ne.s32.totalorder %s241, %s244
    %p253 = scmp.eq.s32.totalorder %s32, 1
    %p254 = por %p252, %p253
    %p255 = scmp.ne.s32.totalorder %s244, %s245
    %p256 = scmp.eq.s32.totalorder %s32, 0
    %p257 = por %p255, %p256
    %p258 = scmp.ne.s32.totalorder %s244, %s245
    %p259 = scmp.eq.s32.totalorder %s33, 1
    %p260 = por %p258, %p259
    %p262 = scmp.ne.s32.totalorder %s245, %s261
    %p263 = scmp.eq.s32.totalorder %s33, 0
    %p264 = por %p262, %p263
    %s265 = ssub.s32 %s27, %s34
    %p266 = scmp.eq.s32.totalorder %s265, 0
    %s268 = sadd.s32 %s267, 1
    %s269 = scalar_select %p266, %s267, %s268
    %p272 = pneg %p266
    %p273 = scmp.eq.s32.totalorder %s27, 1
    %p274 = por %p272, %p273
    %p275 = scmp.ne.s32.totalorder %s267, %s270
    %p276 = scmp.eq.s32.totalorder %s27, 0
    %p277 = por %p275, %p276
    %p278 = scmp.ne.s32.totalorder %s267, %s270
    %p279 = scmp.eq.s32.totalorder %s32, 1
    %p280 = por %p278, %p279
    %p281 = scmp.ne.s32.totalorder %s270, %s271
    %p282 = scmp.eq.s32.totalorder %s32, 0
    %p283 = por %p281, %p282
    %p284 = scmp.ne.s32.totalorder %s270, %s271
    %p285 = scmp.eq.s32.totalorder %s33, 1
    %p286 = por %p284, %p285
    %p288 = scmp.ne.s32.totalorder %s271, %s287
    %p289 = scmp.eq.s32.totalorder %s33, 0
    %p290 = por %p288, %p289
    %s291 = ssub.s32 %s27, %s34
    %p292 = scmp.eq.s32.totalorder %s291, 0
    %s294 = sadd.s32 %s293, 1
    %s295 = scalar_select %p292, %s293, %s294
    %p298 = pneg %p292
    %p299 = scmp.eq.s32.totalorder %s27, 1
    %p300 = por %p298, %p299
    %p301 = scmp.ne.s32.totalorder %s293, %s296
    %p302 = scmp.eq.s32.totalorder %s27, 0
    %p303 = por %p301, %p302
    %p304 = scmp.ne.s32.totalorder %s293, %s296
    %p305 = scmp.eq.s32.totalorder %s32, 1
    %p306 = por %p304, %p305
    %p307 = scmp.ne.s32.totalorder %s296, %s297
    %p308 = scmp.eq.s32.totalorder %s32, 0
    %p309 = por %p307, %p308
    %p310 = scmp.ne.s32.totalorder %s296, %s297
    %p311 = scmp.eq.s32.totalorder %s33, 1
    %p312 = por %p310, %p311
    %p314 = scmp.ne.s32.totalorder %s297, %s313
    %p315 = scmp.eq.s32.totalorder %s33, 0
    %p316 = por %p314, %p315
    %s317 = ssub.s32 %s27, %s34
    %p318 = scmp.eq.s32.totalorder %s317, 0
    %s320 = sadd.s32 %s319, 1
    %s321 = scalar_select %p318, %s319, %s320
    %p324 = pneg %p318
    %p325 = scmp.eq.s32.totalorder %s27, 1
    %p326 = por %p324, %p325
    %p327 = scmp.ne.s32.totalorder %s319, %s322
    %p328 = scmp.eq.s32.totalorder %s27, 0
    %p329 = por %p327, %p328
    %p330 = scmp.ne.s32.totalorder %s319, %s322
    %p331 = scmp.eq.s32.totalorder %s32, 1
    %p332 = por %p330, %p331
    %p333 = scmp.ne.s32.totalorder %s322, %s323
    %p334 = scmp.eq.s32.totalorder %s32, 0
    %p335 = por %p333, %p334
    %p336 = scmp.ne.s32.totalorder %s322, %s323
    %p337 = scmp.eq.s32.totalorder %s33, 1
    %p338 = por %p336, %p337
    %p340 = scmp.ne.s32.totalorder %s323, %s339
    %p341 = scmp.eq.s32.totalorder %s33, 0
    %p342 = por %p340, %p341
    %s343 = ssub.s32 %s27, %s34
    %p344 = scmp.eq.s32.totalorder %s343, 0
    %s346 = sadd.s32 %s345, 1
    %s347 = scalar_select %p344, %s345, %s346
    %p350 = pneg %p344
    %p351 = scmp.eq.s32.totalorder %s27, 1
    %p352 = por %p350, %p351
    %p353 = scmp.ne.s32.totalorder %s345, %s348
    %p354 = scmp.eq.s32.totalorder %s27, 0
    %p355 = por %p353, %p354
    %p356 = scmp.ne.s32.totalorder %s345, %s348
    %p357 = scmp.eq.s32.totalorder %s32, 1
    %p358 = por %p356, %p357
    %p359 = scmp.ne.s32.totalorder %s348, %s349
    %p360 = scmp.eq.s32.totalorder %s32, 0
    %p361 = por %p359, %p360
    %p362 = scmp.ne.s32.totalorder %s348, %s349
    %p363 = scmp.eq.s32.totalorder %s33, 1
    %p364 = por %p362, %p363
    %p366 = scmp.ne.s32.totalorder %s349, %s365
    %p367 = scmp.eq.s32.totalorder %s33, 0
    %p368 = por %p366, %p367
    %s369 = ssub.s32 %s27, %s34
    %p370 = scmp.eq.s32.totalorder %s369, 0
    %s372 = sadd.s32 %s371, 1
    %s373 = scalar_select %p370, %s371, %s372
    %p376 = pneg %p370
    %p377 = scmp.eq.s32.totalorder %s27, 1
    %p378 = por %p376, %p377
    %p379 = scmp.ne.s32.totalorder %s371, %s374
    %p380 = scmp.eq.s32.totalorder %s27, 0
    %p381 = por %p379, %p380
    %p382 = scmp.ne.s32.totalorder %s371, %s374
    %p383 = scmp.eq.s32.totalorder %s32, 1
    %p384 = por %p382, %p383
    %p385 = scmp.ne.s32.totalorder %s374, %s375
    %p386 = scmp.eq.s32.totalorder %s32, 0
    %p387 = por %p385, %p386
    %p388 = scmp.ne.s32.totalorder %s374, %s375
    %p389 = scmp.eq.s32.totalorder %s33, 1
    %p390 = por %p388, %p389
    %p392 = scmp.ne.s32.totalorder %s375, %s391
    %p393 = scmp.eq.s32.totalorder %s33, 0
    %p394 = por %p392, %p393
    %s395 = ssub.s32 %s27, %s34
    %p396 = scmp.eq.s32.totalorder %s395, 0
    %s398 = sadd.s32 %s397, 1
    %s399 = scalar_select %p396, %s397, %s398
    %p402 = pneg %p396
    %p403 = scmp.eq.s32.totalorder %s27, 1
    %p404 = por %p402, %p403
    %p405 = scmp.ne.s32.totalorder %s397, %s400
    %p406 = scmp.eq.s32.totalorder %s27, 0
    %p407 = por %p405, %p406
    %p408 = scmp.ne.s32.totalorder %s397, %s400
    %p409 = scmp.eq.s32.totalorder %s32, 1
    %p410 = por %p408, %p409
    %p411 = scmp.ne.s32.totalorder %s400, %s401
    %p412 = scmp.eq.s32.totalorder %s32, 0
    %p413 = por %p411, %p412
    %p414 = scmp.ne.s32.totalorder %s400, %s401
    %p415 = scmp.eq.s32.totalorder %s33, 1
    %p416 = por %p414, %p415
    %p418 = scmp.ne.s32.totalorder %s401, %s417
    %p419 = scmp.eq.s32.totalorder %s33, 0
    %p420 = por %p418, %p419
    %s421 = ssub.s32 %s27, %s34
    %p422 = scmp.eq.s32.totalorder %s421, 0
    %s424 = sadd.s32 %s423, 1
    %s425 = scalar_select %p422, %s423, %s424
    %p428 = pneg %p422
    %p429 = scmp.eq.s32.totalorder %s27, 1
    %p430 = por %p428, %p429
    %p431 = scmp.ne.s32.totalorder %s423, %s426
    %p432 = scmp.eq.s32.totalorder %s27, 0
    %p433 = por %p431, %p432
    %p434 = scmp.ne.s32.totalorder %s423, %s426
    %p435 = scmp.eq.s32.totalorder %s32, 1
    %p436 = por %p434, %p435
    %p437 = scmp.ne.s32.totalorder %s426, %s427
    %p438 = scmp.eq.s32.totalorder %s32, 0
    %p439 = por %p437, %p438
    %p440 = scmp.ne.s32.totalorder %s426, %s427
    %p441 = scmp.eq.s32.totalorder %s33, 1
    %p442 = por %p440, %p441
    %p444 = scmp.ne.s32.totalorder %s427, %s443
    %p445 = scmp.eq.s32.totalorder %s33, 0
    %p446 = por %p444, %p445
    %s447 = ssub.s32 %s27, %s34
    %p448 = scmp.eq.s32.totalorder %s447, 0
    %s450 = sadd.s32 %s449, 1
    %s451 = scalar_select %p448, %s449, %s450
    %p454 = pneg %p448
    %p455 = scmp.eq.s32.totalorder %s27, 1
    %p456 = por %p454, %p455
    %p457 = scmp.ne.s32.totalorder %s449, %s452
    %p458 = scmp.eq.s32.totalorder %s27, 0
    %p459 = por %p457, %p458
    %p460 = scmp.ne.s32.totalorder %s449, %s452
    %p461 = scmp.eq.s32.totalorder %s32, 1
    %p462 = por %p460, %p461
    %p463 = scmp.ne.s32.totalorder %s452, %s453
    %p464 = scmp.eq.s32.totalorder %s32, 0
    %p465 = por %p463, %p464
    %p466 = scmp.ne.s32.totalorder %s452, %s453
    %p467 = scmp.eq.s32.totalorder %s33, 1
    %p468 = por %p466, %p467
    %p470 = scmp.ne.s32.totalorder %s453, %s469
    %p471 = scmp.eq.s32.totalorder %s33, 0
    %p472 = por %p470, %p471
    %s474 = sadd.s32 %s473, 1
    %p477 = scmp.eq.s32.totalorder %s27, 1
    %p478 = scmp.ne.s32.totalorder %s473, %s475
    %p479 = scmp.eq.s32.totalorder %s27, 0
    %p480 = por %p478, %p479
    %p481 = scmp.ne.s32.totalorder %s473, %s475
    %p482 = scmp.eq.s32.totalorder %s32, 1
    %p483 = por %p481, %p482
    %p484 = scmp.ne.s32.totalorder %s475, %s476
    %p485 = scmp.eq.s32.totalorder %s32, 0
    %p486 = por %p484, %p485
    %p487 = scmp.ne.s32.totalorder %s475, %s476
    %p488 = scmp.eq.s32.totalorder %s33, 1
    %p489 = por %p487, %p488
    %p491 = scmp.ne.s32.totalorder %s476, %s490
    %p492 = scmp.eq.s32.totalorder %s33, 0
    %p493 = por %p491, %p492
    %s495 = sadd.s32 %s494, 1
    %p498 = scmp.eq.s32.totalorder %s27, 1
    %p499 = scmp.ne.s32.totalorder %s494, %s496
    %p500 = scmp.eq.s32.totalorder %s27, 0
    %p501 = por %p499, %p500
    %p502 = scmp.ne.s32.totalorder %s494, %s496
    %p503 = scmp.eq.s32.totalorder %s32, 1
    %p504 = por %p502, %p503
    %p505 = scmp.ne.s32.totalorder %s496, %s497
    %p506 = scmp.eq.s32.totalorder %s32, 0
    %p507 = por %p505, %p506
    %p508 = scmp.ne.s32.totalorder %s496, %s497
    %p509 = scmp.eq.s32.totalorder %s33, 1
    %p510 = por %p508, %p509
    %p512 = scmp.ne.s32.totalorder %s497, %s511
    %p513 = scmp.eq.s32.totalorder %s33, 0
    %p514 = por %p512, %p513
    %s516 = sadd.s32 %s515, 1
    %p519 = scmp.eq.s32.totalorder %s27, 1
    %p520 = scmp.ne.s32.totalorder %s515, %s517
    %p521 = scmp.eq.s32.totalorder %s27, 0
    %p522 = por %p520, %p521
    %p523 = scmp.ne.s32.totalorder %s515, %s517
    %p524 = scmp.eq.s32.totalorder %s32, 1
    %p525 = por %p523, %p524
    %p526 = scmp.ne.s32.totalorder %s517, %s518
    %p527 = scmp.eq.s32.totalorder %s32, 0
    %p528 = por %p526, %p527
    %p529 = scmp.ne.s32.totalorder %s517, %s518
    %p530 = scmp.eq.s32.totalorder %s33, 1
    %p531 = por %p529, %p530
    %p533 = scmp.ne.s32.totalorder %s518, %s532
    %p534 = scmp.eq.s32.totalorder %s33, 0
    %p535 = por %p533, %p534
    %s537 = sadd.s32 %s536, 1
    %p540 = scmp.eq.s32.totalorder %s27, 1
    %p541 = scmp.ne.s32.totalorder %s536, %s538
    %p542 = scmp.eq.s32.totalorder %s27, 0
    %p543 = por %p541, %p542
    %p544 = scmp.ne.s32.totalorder %s536, %s538
    %p545 = scmp.eq.s32.totalorder %s32, 1
    %p546 = por %p544, %p545
    %p547 = scmp.ne.s32.totalorder %s538, %s539
    %p548 = scmp.eq.s32.totalorder %s32, 0
    %p549 = por %p547, %p548
    %p550 = scmp.ne.s32.totalorder %s538, %s539
    %p551 = scmp.eq.s32.totalorder %s33, 1
    %p552 = por %p550, %p551
    %p554 = scmp.ne.s32.totalorder %s539, %s553
    %p555 = scmp.eq.s32.totalorder %s33, 0
    %p556 = por %p554, %p555
    %p557 = scmp.le.s32.totalorder 1, %s27
    %p558 = scmp.lt.s32.totalorder %s27, 3
    %p559 = pnand %p557, %p558
    %p560 = pneg %p559
    // Predicated region
    $region9: #{vision_transformer_forward.1} parent=5 // pred_check
      _
    $region10: #{vision_transformer_forward.1} parent=5 // pred_check_branch
      %562 = sbr.rel (%p559) target = $region12
    $region11: #{vision_transformer_forward.1} parent=5 // pred_region
      %s563 = ssub.s32 %s27, 1
      // Predicated region
      $region13: #{vision_transformer_forward.1} parent=11 // pred_check
        %p564 = pneg %p48
      $region14: #{vision_transformer_forward.1} parent=11 // pred_check_branch
        %566 = sbr.rel (%p564) target = $region16
      $region15: #{vision_transformer_forward.1} parent=11 // pred_region
        _
      $region16: #{vision_transformer_forward.1} parent=11 // pred_fallthru
        _
      // Predicated region
      $region17: #{vision_transformer_forward.1} parent=11 // pred_check
        %p567 = pneg %p69
      $region18: #{vision_transformer_forward.1} parent=11 // pred_check_branch
        %569 = sbr.rel (%p567) target = $region20
      $region19: #{vision_transformer_forward.1} parent=11 // pred_region
        _
      $region20: #{vision_transformer_forward.1} parent=11 // pred_fallthru
        _
      // Predicated region
      $region21: #{vision_transformer_forward.1} parent=11 // pred_check
        %p570 = pneg %p90
      $region22: #{vision_transformer_forward.1} parent=11 // pred_check_branch
        %572 = sbr.rel (%p570) target = $region24
      $region23: #{vision_transformer_forward.1} parent=11 // pred_region
        _
      $region24: #{vision_transformer_forward.1} parent=11 // pred_fallthru
        _
      // Predicated region
      $region25: #{vision_transformer_forward.1} parent=11 // pred_check
        %p573 = pneg %p111
      $region26: #{vision_transformer_forward.1} parent=11 // pred_check_branch
        %575 = sbr.rel (%p573) target = $region28
      $region27: #{vision_transformer_forward.1} parent=11 // pred_region
        _
      $region28: #{vision_transformer_forward.1} parent=11 // pred_fallthru
        _
      // Predicated region
      $region29: #{vision_transformer_forward.1} parent=11 // pred_check
        %p576 = pneg %p132
      $region30: #{vision_transformer_forward.1} parent=11 // pred_check_branch
        %578 = sbr.rel (%p576) target = $region32
      $region31: #{vision_transformer_forward.1} parent=11 // pred_region
        _
      $region32: #{vision_transformer_forward.1} parent=11 // pred_fallthru
        _
      // Predicated region
      $region33: #{vision_transformer_forward.1} parent=11 // pred_check
        %p579 = pneg %p153
      $region34: #{vision_transformer_forward.1} parent=11 // pred_check_branch
        %581 = sbr.rel (%p579) target = $region36
      $region35: #{vision_transformer_forward.1} parent=11 // pred_region
        _
      $region36: #{vision_transformer_forward.1} parent=11 // pred_fallthru
        _
      // Predicated region
      $region37: #{vision_transformer_forward.1} parent=11 // pred_check
        %p582 = pneg %p486
      $region38: #{vision_transformer_forward.1} parent=11 // pred_check_branch
        %584 = sbr.rel (%p582) target = $region40
      $region39: #{vision_transformer_forward.1} parent=11 // pred_region
        _
      $region40: #{vision_transformer_forward.1} parent=11 // pred_fallthru
        _
      // Predicated region
      $region41: #{vision_transformer_forward.1} parent=11 // pred_check
        %p585 = pneg %p507
      $region42: #{vision_transformer_forward.1} parent=11 // pred_check_branch
        %587 = sbr.rel (%p585) target = $region44
      $region43: #{vision_transformer_forward.1} parent=11 // pred_region
        _
      $region44: #{vision_transformer_forward.1} parent=11 // pred_fallthru
        _
      // Predicated region
      $region45: #{vision_transformer_forward.1} parent=11 // pred_check
        %p588 = pneg %p528
      $region46: #{vision_transformer_forward.1} parent=11 // pred_check_branch
        %590 = sbr.rel (%p588) target = $region48
      $region47: #{vision_transformer_forward.1} parent=11 // pred_region
        _
      $region48: #{vision_transformer_forward.1} parent=11 // pred_fallthru
        _
    $region12: #{vision_transformer_forward.1} parent=5 // pred_fallthru
      _
    %p591 = scmp.lt.s32.totalorder %s27, 2
    // Predicated region
    $region49: #{vision_transformer_forward.1} parent=5 // pred_check
      %p592 = pneg %p591
    $region50: #{vision_transformer_forward.1} parent=5 // pred_check_branch
      %594 = sbr.rel (%p592) target = $region52
    $region51: #{vision_transformer_forward.1} parent=5 // pred_region
      // Predicated region
      $region53: #{vision_transformer_forward.1} parent=51 // pred_check
        %p595 = pneg %p173
      $region54: #{vision_transformer_forward.1} parent=51 // pred_check_branch
        %597 = sbr.rel (%p595) target = $region56
      $region55: #{vision_transformer_forward.1} parent=51 // pred_region
        %p598 = scmp.lt.s32.totalorder %s27, 1
        %s599 = scalar_select %p598, %s27, 1
        %s600 = scalar_lea.vmem %s6, %s599
      $region56: #{vision_transformer_forward.1} parent=51 // pred_fallthru
        _
      // Predicated region
      $region57: #{vision_transformer_forward.1} parent=51 // pred_check
        %p601 = pneg %p199
      $region58: #{vision_transformer_forward.1} parent=51 // pred_check_branch
        %603 = sbr.rel (%p601) target = $region60
      $region59: #{vision_transformer_forward.1} parent=51 // pred_region
        %p604 = scmp.lt.s32.totalorder %s27, 1
        %s605 = scalar_select %p604, %s27, 1
        %s606 = scalar_lea.vmem %s7, %s605
      $region60: #{vision_transformer_forward.1} parent=51 // pred_fallthru
        _
      // Predicated region
      $region61: #{vision_transformer_forward.1} parent=51 // pred_check
        %p607 = pneg %p225
      $region62: #{vision_transformer_forward.1} parent=51 // pred_check_branch
        %609 = sbr.rel (%p607) target = $region64
      $region63: #{vision_transformer_forward.1} parent=51 // pred_region
        %p610 = scmp.lt.s32.totalorder %s27, 1
        %s611 = scalar_select %p610, %s27, 1
        %s612 = smul.addr %s611, 48
        %s613 = smul.addr %s612, 4
        %s614 = scalar_lea.vmem %s8, %s613
      $region64: #{vision_transformer_forward.1} parent=51 // pred_fallthru
        _
      // Predicated region
      $region65: #{vision_transformer_forward.1} parent=51 // pred_check
        %p615 = pneg %p251
      $region66: #{vision_transformer_forward.1} parent=51 // pred_check_branch
        %617 = sbr.rel (%p615) target = $region68
      $region67: #{vision_transformer_forward.1} parent=51 // pred_region
        %p618 = scmp.lt.s32.totalorder %s27, 1
        %s619 = scalar_select %p618, %s27, 1
        %s620 = smul.addr %s619, 3
        %s621 = scalar_lea.vmem %s9, %s620
      $region68: #{vision_transformer_forward.1} parent=51 // pred_fallthru
        _
      // Predicated region
      $region69: #{vision_transformer_forward.1} parent=51 // pred_check
        %p622 = pneg %p277
      $region70: #{vision_transformer_forward.1} parent=51 // pred_check_branch
        %624 = sbr.rel (%p622) target = $region72
      $region71: #{vision_transformer_forward.1} parent=51 // pred_region
        %p625 = scmp.lt.s32.totalorder %s27, 1
        %s626 = scalar_select %p625, %s27, 1
        %s627 = smul.addr %s626, 16
        %s628 = smul.addr %s627, 4
        %s629 = scalar_lea.vmem %s10, %s628
      $region72: #{vision_transformer_forward.1} parent=51 // pred_fallthru
        _
      // Predicated region
      $region73: #{vision_transformer_forward.1} parent=51 // pred_check
        %p630 = pneg %p303
      $region74: #{vision_transformer_forward.1} parent=51 // pred_check_branch
        %632 = sbr.rel (%p630) target = $region76
      $region75: #{vision_transformer_forward.1} parent=51 // pred_region
        %p633 = scmp.lt.s32.totalorder %s27, 1
        %s634 = scalar_select %p633, %s27, 1
        %s635 = scalar_lea.vmem %s11, %s634
      $region76: #{vision_transformer_forward.1} parent=51 // pred_fallthru
        _
      // Predicated region
      $region77: #{vision_transformer_forward.1} parent=51 // pred_check
        %p636 = pneg %p329
      $region78: #{vision_transformer_forward.1} parent=51 // pred_check_branch
        %638 = sbr.rel (%p636) target = $region80
      $region79: #{vision_transformer_forward.1} parent=51 // pred_region
        %p639 = scmp.lt.s32.totalorder %s27, 1
        %s640 = scalar_select %p639, %s27, 1
        %s641 = scalar_lea.vmem %s12, %s640
      $region80: #{vision_transformer_forward.1} parent=51 // pred_fallthru
        _
      // Predicated region
      $region81: #{vision_transformer_forward.1} parent=51 // pred_check
        %p642 = pneg %p355
      $region82: #{vision_transformer_forward.1} parent=51 // pred_check_branch
        %644 = sbr.rel (%p642) target = $region84
      $region83: #{vision_transformer_forward.1} parent=51 // pred_region
        %p645 = scmp.lt.s32.totalorder %s27, 1
        %s646 = scalar_select %p645, %s27, 1
        %s647 = scalar_lea.vmem %s13, %s646
      $region84: #{vision_transformer_forward.1} parent=51 // pred_fallthru
        _
      // Predicated region
      $region85: #{vision_transformer_forward.1} parent=51 // pred_check
        %p648 = pneg %p381
      $region86: #{vision_transformer_forward.1} parent=51 // pred_check_branch
        %650 = sbr.rel (%p648) target = $region88
      $region87: #{vision_transformer_forward.1} parent=51 // pred_region
        %p651 = scmp.lt.s32.totalorder %s27, 1
        %s652 = scalar_select %p651, %s27, 1
        %s653 = smul.addr %s652, 64
        %s654 = smul.addr %s653, 4
        %s655 = scalar_lea.vmem %s14, %s654
      $region88: #{vision_transformer_forward.1} parent=51 // pred_fallthru
        _
      // Predicated region
      $region89: #{vision_transformer_forward.1} parent=51 // pred_check
        %p656 = pneg %p407
      $region90: #{vision_transformer_forward.1} parent=51 // pred_check_branch
        %658 = sbr.rel (%p656) target = $region92
      $region91: #{vision_transformer_forward.1} parent=51 // pred_region
        %p659 = scmp.lt.s32.totalorder %s27, 1
        %s660 = scalar_select %p659, %s27, 1
        %s661 = smul.addr %s660, 4
        %s662 = scalar_lea.vmem %s15, %s661
      $region92: #{vision_transformer_forward.1} parent=51 // pred_fallthru
        _
      // Predicated region
      $region93: #{vision_transformer_forward.1} parent=51 // pred_check
        %p663 = pneg %p433
      $region94: #{vision_transformer_forward.1} parent=51 // pred_check_branch
        %665 = sbr.rel (%p663) target = $region96
      $region95: #{vision_transformer_forward.1} parent=51 // pred_region
        %p666 = scmp.lt.s32.totalorder %s27, 1
        %s667 = scalar_select %p666, %s27, 1
        %s668 = smul.addr %s667, 64
        %s669 = smul.addr %s668, 4
        %s670 = scalar_lea.vmem %s16, %s669
      $region96: #{vision_transformer_forward.1} parent=51 // pred_fallthru
        _
      // Predicated region
      $region97: #{vision_transformer_forward.1} parent=51 // pred_check
        %p671 = pneg %p459
      $region98: #{vision_transformer_forward.1} parent=51 // pred_check_branch
        %673 = sbr.rel (%p671) target = $region100
      $region99: #{vision_transformer_forward.1} parent=51 // pred_region
        %p674 = scmp.lt.s32.totalorder %s27, 1
        %s675 = scalar_select %p674, %s27, 1
        %s676 = scalar_lea.vmem %s17, %s675
      $region100: #{vision_transformer_forward.1} parent=51 // pred_fallthru
        _
    $region52: #{vision_transformer_forward.1} parent=5 // pred_fallthru
      _
    %p677 = scmp.le.s32.totalorder 1, %s27
    %p678 = scmp.lt.s32.totalorder %s27, 3
    %p679 = pnand %p677, %p678
    %p680 = pneg %p679
    // Predicated region
    $region101: #{vision_transformer_forward.1} parent=5 // pred_check
      _
    $region102: #{vision_transformer_forward.1} parent=5 // pred_check_branch
      %682 = sbr.rel (%p679) target = $region104
    $region103: #{vision_transformer_forward.1} parent=5 // pred_region
      %s683 = ssub.s32 %s27, 1
      %p684 = pneg %p48
      %p685 = pneg %p45
      %p686 = pneg %p69
      %p687 = pneg %p66
      %p688 = pneg %p90
      %p689 = pneg %p87
      %p690 = pneg %p111
      %p691 = pneg %p108
      %p692 = pneg %p132
      %p693 = pneg %p129
      %p694 = pneg %p153
      %p695 = pneg %p150
      %p696 = scmp.lt.s32.totalorder %s32, 1
      %s697 = scalar_select %p696, %s32, 1
      %s698 = scalar_lea.vmem %s6, %s697
      %p699 = pneg %p179
      %p700 = pneg %p176
      %p701 = scmp.lt.s32.totalorder %s32, 1
      %s702 = scalar_select %p701, %s32, 1
      %s703 = scalar_lea.vmem %s7, %s702
      %p704 = pneg %p205
      %p705 = pneg %p202
      %p706 = scmp.lt.s32.totalorder %s32, 1
      %s707 = scalar_select %p706, %s32, 1
      %s708 = smul.addr %s707, 48
      %s709 = smul.addr %s708, 4
      %s710 = scalar_lea.vmem %s8, %s709
      %p711 = pneg %p231
      %p712 = pneg %p228
      %p713 = scmp.lt.s32.totalorder %s32, 1
      %s714 = scalar_select %p713, %s32, 1
      %s715 = smul.addr %s714, 3
      %s716 = scalar_lea.vmem %s9, %s715
      %p717 = pneg %p257
      %p718 = pneg %p254
      %p719 = scmp.lt.s32.totalorder %s32, 1
      %s720 = scalar_select %p719, %s32, 1
      %s721 = smul.addr %s720, 16
      %s722 = smul.addr %s721, 4
      %s723 = scalar_lea.vmem %s10, %s722
      %p724 = pneg %p283
      %p725 = pneg %p280
      %p726 = scmp.lt.s32.totalorder %s32, 1
      %s727 = scalar_select %p726, %s32, 1
      %s728 = scalar_lea.vmem %s11, %s727
      %p729 = pneg %p309
      %p730 = pneg %p306
      %p731 = scmp.lt.s32.totalorder %s32, 1
      %s732 = scalar_select %p731, %s32, 1
      %s733 = scalar_lea.vmem %s12, %s732
      %p734 = pneg %p335
      %p735 = pneg %p332
      %p736 = scmp.lt.s32.totalorder %s32, 1
      %s737 = scalar_select %p736, %s32, 1
      %s738 = scalar_lea.vmem %s13, %s737
      %p739 = pneg %p361
      %p740 = pneg %p358
      %p741 = scmp.lt.s32.totalorder %s32, 1
      %s742 = scalar_select %p741, %s32, 1
      %s743 = smul.addr %s742, 64
      %s744 = smul.addr %s743, 4
      %s745 = scalar_lea.vmem %s14, %s744
      %p746 = pneg %p387
      %p747 = pneg %p384
      %p748 = scmp.lt.s32.totalorder %s32, 1
      %s749 = scalar_select %p748, %s32, 1
      %s750 = smul.addr %s749, 4
      %s751 = scalar_lea.vmem %s15, %s750
      %p752 = pneg %p413
      %p753 = pneg %p410
      %p754 = scmp.lt.s32.totalorder %s32, 1
      %s755 = scalar_select %p754, %s32, 1
      %s756 = smul.addr %s755, 64
      %s757 = smul.addr %s756, 4
      %s758 = scalar_lea.vmem %s16, %s757
      %p759 = pneg %p439
      %p760 = pneg %p436
      %p761 = scmp.lt.s32.totalorder %s32, 1
      %s762 = scalar_select %p761, %s32, 1
      %s763 = scalar_lea.vmem %s17, %s762
      %p764 = pneg %p465
      %p765 = pneg %p462
      %p766 = pneg %p486
      %p767 = pneg %p483
      %p768 = pneg %p507
      %p769 = pneg %p504
      %p770 = pneg %p528
      %p771 = pneg %p525
      %p772 = pneg %p549
      %p773 = pneg %p546
      %p774 = scmp.lt.s32.totalorder %s32, 1
      %s775 = scalar_select %p774, %s32, 1
      %s776 = scalar_lea.vmem %s6, %s775
      %p777 = scmp.lt.s32.totalorder %s32, 1
      %s778 = scalar_select %p777, %s32, 1
      %s779 = scalar_lea.vmem %s7, %s778
      %p780 = scmp.lt.s32.totalorder %s32, 1
      %s781 = scalar_select %p780, %s32, 1
      %s782 = smul.addr %s781, 48
      %s783 = smul.addr %s782, 4
      %s784 = scalar_lea.vmem %s8, %s783
      %p785 = scmp.lt.s32.totalorder %s32, 1
      %s786 = scalar_select %p785, %s32, 1
      %s787 = smul.addr %s786, 3
      %s788 = scalar_lea.vmem %s9, %s787
      %p789 = scmp.lt.s32.totalorder %s32, 1
      %s790 = scalar_select %p789, %s32, 1
      %s791 = smul.addr %s790, 16
      %s792 = smul.addr %s791, 4
      %s793 = scalar_lea.vmem %s10, %s792
      %p794 = scmp.lt.s32.totalorder %s32, 1
      %s795 = scalar_select %p794, %s32, 1
      %s796 = scalar_lea.vmem %s11, %s795
      %p797 = scmp.lt.s32.totalorder %s32, 1
      %s798 = scalar_select %p797, %s32, 1
      %s799 = scalar_lea.vmem %s12, %s798
      %p800 = scmp.lt.s32.totalorder %s32, 1
      %s801 = scalar_select %p800, %s32, 1
      %s802 = scalar_lea.vmem %s13, %s801
      %p803 = scmp.lt.s32.totalorder %s32, 1
      %s804 = scalar_select %p803, %s32, 1
      %s805 = smul.addr %s804, 64
      %s806 = smul.addr %s805, 4
      %s807 = scalar_lea.vmem %s14, %s806
      %p808 = scmp.lt.s32.totalorder %s32, 1
      %s809 = scalar_select %p808, %s32, 1
      %s810 = smul.addr %s809, 4
      %s811 = scalar_lea.vmem %s15, %s810
      %p812 = scmp.lt.s32.totalorder %s32, 1
      %s813 = scalar_select %p812, %s32, 1
      %s814 = smul.addr %s813, 64
      %s815 = smul.addr %s814, 4
      %s816 = scalar_lea.vmem %s16, %s815
      %p817 = scmp.lt.s32.totalorder %s32, 1
      %s818 = scalar_select %p817, %s32, 1
      %s819 = scalar_lea.vmem %s17, %s818
      %p821 = scmp.eq.s32.totalorder %s32, 0
      // Predicated region
      $region105: #{vision_transformer_forward.1} parent=103 // pred_check
        %p822 = pneg %p821
      $region106: #{vision_transformer_forward.1} parent=103 // pred_check_branch
        %824 = sbr.rel (%p822) target = $region108
      $region107: #{vision_transformer_forward.1} parent=103 // pred_region
        %v825 = vld [vmem:[%s0] sm:$0xff]
        %v826 = vld [vmem:[%s0 + $0x8] sm:$0xff]
        %v827 = vld [vmem:[%s0 + $0x10] sm:$0xff]
        %v828 = vld [vmem:[%s0 + $0x18] sm:$0xff]
        %v829 = vld [vmem:[%s0 + $0x20] sm:$0xff]
        %v830 = vld [vmem:[%s0 + $0x28] sm:$0xff]
        %v831 = vld [vmem:[%s0 + $0x30] sm:$0xff]
        %v832 = vld [vmem:[%s0 + $0x38] sm:$0xff]
        %v833 = vld [vmem:[%s0 + $0x40] sm:$0xff]
        %v834 = vld [vmem:[%s0 + $0x48] sm:$0xff]
        %v835 = vld [vmem:[%s0 + $0x50] sm:$0xff]
        %v836 = vld [vmem:[%s0 + $0x58] sm:$0x3]
        %v837 = vld [vmem:[%s0 + $0x60] sm:$0x3]
        %v838 = vld [vmem:[%s0 + $0x68] sm:$0x3]
        %v839 = vld [vmem:[%s0 + $0x70] sm:$0x3]
        %v840 = vld [vmem:[%s0 + $0x78] sm:$0x3]
        %v841 = vld [vmem:[%s0 + $0x80] sm:$0x3]
        %v842 = vld [vmem:[%s0 + $0x88] sm:$0x3]
        %v843 = vld [vmem:[%s0 + $0x90] sm:$0x3]
        %v844 = vld [vmem:[%s0 + $0x98] sm:$0x3]
        %v845 = vld [vmem:[%s0 + $0xa0] sm:$0x3]
        %v846 = vld [vmem:[%s0 + $0xa8] sm:$0x3]
        %v847 = vld [vmem:[%s1] sm:$0xff]
        %v848 = vld [vmem:[%s1 + $0x8] sm:$0xff]
        %v849 = vld [vmem:[%s1 + $0x10] sm:$0xff]
        %v850 = vld [vmem:[%s1 + $0x18] sm:$0xff]
        %v851 = vld [vmem:[%s1 + $0x20] sm:$0xff]
        %v852 = vld [vmem:[%s1 + $0x28] sm:$0xff]
        %v853 = vld [vmem:[%s1 + $0x30] sm:$0xff]
        %v854 = vld [vmem:[%s1 + $0x38] sm:$0xff]
        %v855 = vld [vmem:[%s1 + $0x40] sm:$0xff]
        %v856 = vld [vmem:[%s1 + $0x48] sm:$0xff]
        %v857 = vld [vmem:[%s1 + $0x50] sm:$0xff]
        %v858 = vld [vmem:[%s1 + $0x58] sm:$0xff]
        %v859 = vld [vmem:[%s1 + $0x60] sm:$0xff]
        %v860 = vld [vmem:[%s1 + $0x68] sm:$0xff]
        %v861 = vld [vmem:[%s1 + $0x70] sm:$0xff]
        %v862 = vld [vmem:[%s1 + $0x78] sm:$0xff]
        %v863 = vld [vmem:[%s1 + $0x80] sm:$0xff]
        %v864 = vld [vmem:[%s1 + $0x88] sm:$0xff]
        %v865 = vld [vmem:[%s1 + $0x90] sm:$0xff]
        %v866 = vld [vmem:[%s1 + $0x98] sm:$0xff]
        %v867 = vld [vmem:[%s1 + $0xa0] sm:$0xff]
        %v868 = vld [vmem:[%s1 + $0xa8] sm:$0xff]
        %v869 = vld [vmem:[%s1 + $0xb0] sm:$0xff]
        %v870 = vld [vmem:[%s1 + $0xb8] sm:$0xff]
        %v871 = vld [vmem:[%s1 + $0xc0] sm:$0xff]
        %v872 = vld [vmem:[%s1 + $0xc8] sm:$0xff]
        %v873 = vld [vmem:[%s1 + $0xd0] sm:$0xff]
        %v874 = vld [vmem:[%s1 + $0xd8] sm:$0xff]
        %v875 = vld [vmem:[%s1 + $0xe0] sm:$0xff]
        %v876 = vld [vmem:[%s1 + $0xe8] sm:$0xff]
        %v877 = vld [vmem:[%s1 + $0xf0] sm:$0xff]
        %v878 = vld [vmem:[%s1 + $0xf8] sm:$0xff]
        %v879 = vld [vmem:[%s1 + $0x100] sm:$0xff]
        %v880 = vld [vmem:[%s1 + $0x108] sm:$0xff]
        %v881 = vld [vmem:[%s1 + $0x110] sm:$0xff]
        %v882 = vld [vmem:[%s1 + $0x118] sm:$0xff]
        %v883 = vld [vmem:[%s1 + $0x120] sm:$0xff]
        %v884 = vld [vmem:[%s1 + $0x128] sm:$0xff]
        %v885 = vld [vmem:[%s1 + $0x130] sm:$0xff]
        %v886 = vld [vmem:[%s1 + $0x138] sm:$0xff]
        %v887 = vld [vmem:[%s1 + $0x140] sm:$0xff]
        %v888 = vld [vmem:[%s1 + $0x148] sm:$0xff]
        %v889 = vld [vmem:[%s1 + $0x150] sm:$0xff]
        %v890 = vld [vmem:[%s1 + $0x158] sm:$0xff]
        %v891 = vld [vmem:[%s1 + $0x160] sm:$0xff]
        %v892 = vld [vmem:[%s1 + $0x168] sm:$0xff]
        %v893 = vld [vmem:[%s1 + $0x170] sm:$0xff]
        %v894 = vld [vmem:[%s1 + $0x178] sm:$0xff]
        %v895 = vld [vmem:[%s1 + $0x180] sm:$0xff]
        %v896 = vld [vmem:[%s1 + $0x188] sm:$0xff]
        %v897 = vld [vmem:[%s1 + $0x190] sm:$0xff]
        %v898 = vld [vmem:[%s1 + $0x198] sm:$0xff]
        %v899 = vld [vmem:[%s1 + $0x1a0] sm:$0xff]
        %v900 = vld [vmem:[%s1 + $0x1a8] sm:$0xff]
        %v901 = vld [vmem:[%s1 + $0x1b0] sm:$0xff]
        %v902 = vld [vmem:[%s1 + $0x1b8] sm:$0xff]
        %v903 = vld [vmem:[%s1 + $0x1c0] sm:$0xff]
        %v904 = vld [vmem:[%s1 + $0x1c8] sm:$0xff]
        %v905 = vld [vmem:[%s1 + $0x1d0] sm:$0xff]
        %v906 = vld [vmem:[%s1 + $0x1d8] sm:$0xff]
        %v907 = vld [vmem:[%s1 + $0x1e0] sm:$0xff]
        %v908 = vld [vmem:[%s1 + $0x1e8] sm:$0xff]
        %v909 = vld [vmem:[%s1 + $0x1f0] sm:$0xff]
        %v910 = vld [vmem:[%s1 + $0x1f8] sm:$0xff]
        %v911 = vld [vmem:[%s1 + $0x200] sm:$0xff]
        %v912 = vld [vmem:[%s1 + $0x208] sm:$0xff]
        %v913 = vld [vmem:[%s1 + $0x210] sm:$0xff]
        %v914 = vld [vmem:[%s1 + $0x218] sm:$0xff]
        %v915 = vld [vmem:[%s1 + $0x220] sm:$0xff]
        %v916 = vld [vmem:[%s1 + $0x228] sm:$0xff]
        %v917 = vld [vmem:[%s1 + $0x230] sm:$0xff]
        %v918 = vld [vmem:[%s1 + $0x238] sm:$0xff]
        %v919 = vld [vmem:[%s1 + $0x240] sm:$0xff]
        %v920 = vld [vmem:[%s1 + $0x248] sm:$0xff]
        %v921 = vld [vmem:[%s1 + $0x250] sm:$0xff]
        %v922 = vld [vmem:[%s1 + $0x258] sm:$0xff]
        %v923 = vld [vmem:[%s1 + $0x260] sm:$0xff]
        %v924 = vld [vmem:[%s1 + $0x268] sm:$0xff]
        %v925 = vld [vmem:[%s1 + $0x270] sm:$0xff]
        %v926 = vld [vmem:[%s1 + $0x278] sm:$0xff]
        %v927 = vld [vmem:[%s1 + $0x280] sm:$0xff]
        %v928 = vld [vmem:[%s1 + $0x288] sm:$0xff]
        %v929 = vld [vmem:[%s1 + $0x290] sm:$0xff]
        %v930 = vld [vmem:[%s1 + $0x298] sm:$0xff]
        %v931 = vld [vmem:[%s1 + $0x2a0] sm:$0xff]
        %v932 = vld [vmem:[%s1 + $0x2a8] sm:$0xff]
        %v933 = vld [vmem:[%s1 + $0x2b0] sm:$0xff]
        %v934 = vld [vmem:[%s1 + $0x2b8] sm:$0xff]
        %v935 = vld [vmem:[%s1 + $0x2c0] sm:$0xff]
        %v936 = vld [vmem:[%s1 + $0x2c8] sm:$0xff]
        %v937 = vld [vmem:[%s1 + $0x2d0] sm:$0xff]
        %v938 = vld [vmem:[%s1 + $0x2d8] sm:$0xff]
        %v939 = vld [vmem:[%s1 + $0x2e0] sm:$0xff]
        %v940 = vld [vmem:[%s1 + $0x2e8] sm:$0xff]
        %v941 = vld [vmem:[%s1 + $0x2f0] sm:$0xff]
        %v942 = vld [vmem:[%s1 + $0x2f8] sm:$0xff]
        %v943 = vld [vmem:[%s1 + $0x300] sm:$0xff]
        %v944 = vld [vmem:[%s1 + $0x308] sm:$0xff]
        %v945 = vld [vmem:[%s1 + $0x310] sm:$0xff]
        %v946 = vld [vmem:[%s1 + $0x318] sm:$0xff]
        %v947 = vld [vmem:[%s1 + $0x320] sm:$0xff]
        %v948 = vld [vmem:[%s1 + $0x328] sm:$0xff]
        %v949 = vld [vmem:[%s1 + $0x330] sm:$0xff]
        %v950 = vld [vmem:[%s1 + $0x338] sm:$0xff]
        %v951 = vld [vmem:[%s1 + $0x340] sm:$0xff]
        %v952 = vld [vmem:[%s1 + $0x348] sm:$0xff]
        %v953 = vld [vmem:[%s1 + $0x350] sm:$0xff]
        %v954 = vld [vmem:[%s1 + $0x358] sm:$0xff]
        %v955 = vld [vmem:[%s1 + $0x360] sm:$0xff]
        %v956 = vld [vmem:[%s1 + $0x368] sm:$0xff]
        %v957 = vld [vmem:[%s1 + $0x370] sm:$0xff]
        %v958 = vld [vmem:[%s1 + $0x378] sm:$0xff]
        %v959 = vld [vmem:[%s1 + $0x380] sm:$0xff]
        %v960 = vld [vmem:[%s1 + $0x388] sm:$0xff]
        %v961 = vld [vmem:[%s1 + $0x390] sm:$0xff]
        %v962 = vld [vmem:[%s1 + $0x398] sm:$0xff]
        %v963 = vld [vmem:[%s1 + $0x3a0] sm:$0xff]
        %v964 = vld [vmem:[%s1 + $0x3a8] sm:$0xff]
        %v965 = vld [vmem:[%s1 + $0x3b0] sm:$0xff]
        %v966 = vld [vmem:[%s1 + $0x3b8] sm:$0xff]
        %v967 = vld [vmem:[%s1 + $0x3c0] sm:$0xff]
        %v968 = vld [vmem:[%s1 + $0x3c8] sm:$0xff]
        %v969 = vld [vmem:[%s1 + $0x3d0] sm:$0xff]
        %v970 = vld [vmem:[%s1 + $0x3d8] sm:$0xff]
        %v971 = vld [vmem:[%s1 + $0x3e0] sm:$0xff]
        %v972 = vld [vmem:[%s1 + $0x3e8] sm:$0xff]
        %v973 = vld [vmem:[%s1 + $0x3f0] sm:$0xff]
        %v974 = vld [vmem:[%s1 + $0x3f8] sm:$0xff]
        %v975 = vld [vmem:[%s1 + $0x400] sm:$0xff]
        %v976 = vld [vmem:[%s1 + $0x408] sm:$0xff]
        %v977 = vld [vmem:[%s1 + $0x410] sm:$0xff]
        %v978 = vld [vmem:[%s1 + $0x418] sm:$0xff]
        %v979 = vld [vmem:[%s1 + $0x420] sm:$0xff]
        %v980 = vld [vmem:[%s1 + $0x428] sm:$0xff]
        %v981 = vld [vmem:[%s1 + $0x430] sm:$0xff]
        %v982 = vld [vmem:[%s1 + $0x438] sm:$0xff]
        %v983 = vld [vmem:[%s1 + $0x440] sm:$0xff]
        %v984 = vld [vmem:[%s1 + $0x448] sm:$0xff]
        %v985 = vld [vmem:[%s1 + $0x450] sm:$0xff]
        %v986 = vld [vmem:[%s1 + $0x458] sm:$0xff]
        %v987 = vld [vmem:[%s1 + $0x460] sm:$0xff]
        %v988 = vld [vmem:[%s1 + $0x468] sm:$0xff]
        %v989 = vld [vmem:[%s1 + $0x470] sm:$0xff]
        %v990 = vld [vmem:[%s1 + $0x478] sm:$0xff]
        %v991 = vld [vmem:[%s1 + $0x480] sm:$0xff]
        %v992 = vld [vmem:[%s1 + $0x488] sm:$0xff]
        %v993 = vld [vmem:[%s1 + $0x490] sm:$0xff]
        %v994 = vld [vmem:[%s1 + $0x498] sm:$0xff]
        %v995 = vld [vmem:[%s1 + $0x4a0] sm:$0xff]
        %v996 = vld [vmem:[%s1 + $0x4a8] sm:$0xff]
        %v997 = vld [vmem:[%s1 + $0x4b0] sm:$0xff]
        %v998 = vld [vmem:[%s1 + $0x4b8] sm:$0xff]
        %v999 = vld [vmem:[%s1 + $0x4c0] sm:$0xff]
        %v1000 = vld [vmem:[%s1 + $0x4c8] sm:$0xff]
        %v1001 = vld [vmem:[%s1 + $0x4d0] sm:$0xff]
        %v1002 = vld [vmem:[%s1 + $0x4d8] sm:$0xff]
        %v1003 = vld [vmem:[%s1 + $0x4e0] sm:$0xff]
        %v1004 = vld [vmem:[%s1 + $0x4e8] sm:$0xff]
        %v1005 = vld [vmem:[%s1 + $0x4f0] sm:$0xff]
        %v1006 = vld [vmem:[%s1 + $0x4f8] sm:$0xff]
        %v1007 = vld [vmem:[%s1 + $0x500] sm:$0xff]
        %v1008 = vld [vmem:[%s1 + $0x508] sm:$0xff]
        %v1009 = vld [vmem:[%s2] sm:$0xff]
        %v1010 = vld [vmem:[%s2 + $0x8] sm:$0x3]
        %vm1011 = vcmask 130048
        %v1013 = vsel %vm1011, %v835, 0
        %v1016 = vsel %vm1011, %v846, 0
        %1018 = vmatprep.subr.mxu0 0.0
        %1019 = vmatpush1.msra.mxu0 %v862
        %1020 = vmatprep.subr.mxu0 0.0
        %1021 = vmatpush1.msra.mxu0 %v861
        %1022 = vmatprep.subr.mxu0 0.0
        %1023 = vmatpush1.msra.mxu0 %v860
        %1024 = vmatprep.subr.mxu0 0.0
        %1025 = vmatpush1.msra.mxu0 %v859
        %1026 = vmatprep.subr.mxu0 0.0
        %1027 = vmatpush1.msra.mxu0 %v858
        %1028 = vmatprep.subr.mxu0 0.0
        %1029 = vmatpush1.msra.mxu0 %v857
        %1030 = vmatprep.subr.mxu0 0.0
        %1031 = vmatpush1.msra.mxu0 %v856
        %1032 = vmatprep.subr.mxu0 0.0
        %1033 = vmatpush1.msra.mxu0 %v855
        %1034 = vmatprep.subr.mxu0 0.0
        %1035 = vmatpush1.msra.mxu0 %v854
        %1036 = vmatprep.subr.mxu0 0.0
        %1037 = vmatpush1.msra.mxu0 %v853
        %1038 = vmatprep.subr.mxu0 0.0
        %1039 = vmatpush1.msra.mxu0 %v852
        %1040 = vmatprep.subr.mxu0 0.0
        %1041 = vmatpush1.msra.mxu0 %v851
        %1042 = vmatprep.subr.mxu0 0.0
        %1043 = vmatpush1.msra.mxu0 %v850
        %1044 = vmatprep.subr.mxu0 0.0
        %1045 = vmatpush1.msra.mxu0 %v849
        %1046 = vmatprep.subr.mxu0 0.0
        %1047 = vmatpush1.msra.mxu0 %v848
        %1048 = vmatprep.subr.mxu0 0.0
        %1049 = vmatpush1.msra.mxu0 %v847
        %1050 = vmatprep.subr.mxu0 0.0
        %1051 = vmatpush2.msra.mxu0 %v878
        %1052 = vmatprep.subr.mxu0 0.0
        %1053 = vmatpush2.msra.mxu0 %v877
        %1054 = vmatprep.subr.mxu0 0.0
        %1055 = vmatpush2.msra.mxu0 %v876
        %1056 = vmatprep.subr.mxu0 0.0
        %1057 = vmatpush2.msra.mxu0 %v875
        %1058 = vmatprep.subr.mxu0 0.0
        %1059 = vmatpush2.msra.mxu0 %v874
        %1060 = vmatprep.subr.mxu0 0.0
        %1061 = vmatpush2.msra.mxu0 %v873
        %1062 = vmatprep.subr.mxu0 0.0
        %1063 = vmatpush2.msra.mxu0 %v872
        %1064 = vmatprep.subr.mxu0 0.0
        %1065 = vmatpush2.msra.mxu0 %v871
        %1066 = vmatprep.subr.mxu0 0.0
        %1067 = vmatpush2.msra.mxu0 %v870
        %1068 = vmatprep.subr.mxu0 0.0
        %1069 = vmatpush2.msra.mxu0 %v869
        %1070 = vmatprep.subr.mxu0 0.0
        %1071 = vmatpush2.msra.mxu0 %v868
        %1072 = vmatprep.subr.mxu0 0.0
        %1073 = vmatpush2.msra.mxu0 %v867
        %1074 = vmatprep.subr.mxu0 0.0
        %1075 = vmatpush2.msra.mxu0 %v866
        %1076 = vmatprep.subr.mxu0 0.0
        %1077 = vmatpush2.msra.mxu0 %v865
        %1078 = vmatprep.subr.mxu0 0.0
        %1079 = vmatpush2.msra.mxu0 %v864
        %1080 = vmatprep.subr.mxu0 0.0
        %1081 = vmatpush2.msra.mxu0 %v863
        %1082 = vmatprep.mubr.f32.mxu0 %v826
        %1083 = vmatmul.mubr.f32.gmra.mxu0 %v825
        %v1084 = vpop.f32.mrf.mxu0
        %v1085 = vadd.f32 %v1009, %v1084
        %v1086 = vpop.f32.mrf.mxu0
        %1087 = vmatprep.mubr.f32.mxu0 %v837
        %1088 = vmatmul.mubr.f32.gmra.mxu0 %v836
        %v1089 = vpop.f32.mrf.mxu0
        %v1090 = vadd.f32 %v1010, %v1089
        %v1091 = vpop.f32.mrf.mxu0
        %1092 = vdwg.mxu0
        %1093 = vmatprep.subr.mxu0 0.0
        %1094 = vmatpush1.msra.mxu0 %v894
        %1095 = vmatprep.subr.mxu0 0.0
        %1096 = vmatpush1.msra.mxu0 %v893
        %1097 = vmatprep.subr.mxu0 0.0
        %1098 = vmatpush1.msra.mxu0 %v892
        %1099 = vmatprep.subr.mxu0 0.0
        %1100 = vmatpush1.msra.mxu0 %v891
        %1101 = vmatprep.subr.mxu0 0.0
        %1102 = vmatpush1.msra.mxu0 %v890
        %1103 = vmatprep.subr.mxu0 0.0
        %1104 = vmatpush1.msra.mxu0 %v889
        %1105 = vmatprep.subr.mxu0 0.0
        %1106 = vmatpush1.msra.mxu0 %v888
        %1107 = vmatprep.subr.mxu0 0.0
        %1108 = vmatpush1.msra.mxu0 %v887
        %1109 = vmatprep.subr.mxu0 0.0
        %1110 = vmatpush1.msra.mxu0 %v886
        %1111 = vmatprep.subr.mxu0 0.0
        %1112 = vmatpush1.msra.mxu0 %v885
        %1113 = vmatprep.subr.mxu0 0.0
        %1114 = vmatpush1.msra.mxu0 %v884
        %1115 = vmatprep.subr.mxu0 0.0
        %1116 = vmatpush1.msra.mxu0 %v883
        %1117 = vmatprep.subr.mxu0 0.0
        %1118 = vmatpush1.msra.mxu0 %v882
        %1119 = vmatprep.subr.mxu0 0.0
        %1120 = vmatpush1.msra.mxu0 %v881
        %1121 = vmatprep.subr.mxu0 0.0
        %1122 = vmatpush1.msra.mxu0 %v880
        %1123 = vmatprep.subr.mxu0 0.0
        %1124 = vmatpush1.msra.mxu0 %v879
        %1125 = vmatprep.subr.mxu0 0.0
        %1126 = vmatpush2.msra.mxu0 %v910
        %1127 = vmatprep.subr.mxu0 0.0
        %1128 = vmatpush2.msra.mxu0 %v909
        %1129 = vmatprep.subr.mxu0 0.0
        %1130 = vmatpush2.msra.mxu0 %v908
        %1131 = vmatprep.subr.mxu0 0.0
        %1132 = vmatpush2.msra.mxu0 %v907
        %1133 = vmatprep.subr.mxu0 0.0
        %1134 = vmatpush2.msra.mxu0 %v906
        %1135 = vmatprep.subr.mxu0 0.0
        %1136 = vmatpush2.msra.mxu0 %v905
        %1137 = vmatprep.subr.mxu0 0.0
        %1138 = vmatpush2.msra.mxu0 %v904
        %1139 = vmatprep.subr.mxu0 0.0
        %1140 = vmatpush2.msra.mxu0 %v903
        %1141 = vmatprep.subr.mxu0 0.0
        %1142 = vmatpush2.msra.mxu0 %v902
        %1143 = vmatprep.subr.mxu0 0.0
        %1144 = vmatpush2.msra.mxu0 %v901
        %1145 = vmatprep.subr.mxu0 0.0
        %1146 = vmatpush2.msra.mxu0 %v900
        %1147 = vmatprep.subr.mxu0 0.0
        %1148 = vmatpush2.msra.mxu0 %v899
        %1149 = vmatprep.subr.mxu0 0.0
        %1150 = vmatpush2.msra.mxu0 %v898
        %1151 = vmatprep.subr.mxu0 0.0
        %1152 = vmatpush2.msra.mxu0 %v897
        %1153 = vmatprep.subr.mxu0 0.0
        %1154 = vmatpush2.msra.mxu0 %v896
        %1155 = vmatprep.subr.mxu0 0.0
        %1156 = vmatpush2.msra.mxu0 %v895
        %1157 = vmatprep.mubr.f32.mxu0 %v828
        %1158 = vmatmul.mubr.f32.gmra.mxu0 %v827
        %v1159 = vpop.f32.mrf.mxu0
        %v1160 = vadd.f32 %v1085, %v1159
        %v1161 = vpop.f32.mrf.mxu0
        %1162 = vmatprep.mubr.f32.mxu0 %v839
        %1163 = vmatmul.mubr.f32.gmra.mxu0 %v838
        %v1164 = vpop.f32.mrf.mxu0
        %v1165 = vadd.f32 %v1090, %v1164
        %v1166 = vpop.f32.mrf.mxu0
        %1167 = vdwg.mxu0
        %1168 = vmatprep.subr.mxu0 0.0
        %1169 = vmatpush1.msra.mxu0 %v926
        %1170 = vmatprep.subr.mxu0 0.0
        %1171 = vmatpush1.msra.mxu0 %v925
        %1172 = vmatprep.subr.mxu0 0.0
        %1173 = vmatpush1.msra.mxu0 %v924
        %1174 = vmatprep.subr.mxu0 0.0
        %1175 = vmatpush1.msra.mxu0 %v923
        %1176 = vmatprep.subr.mxu0 0.0
        %1177 = vmatpush1.msra.mxu0 %v922
        %1178 = vmatprep.subr.mxu0 0.0
        %1179 = vmatpush1.msra.mxu0 %v921
        %1180 = vmatprep.subr.mxu0 0.0
        %1181 = vmatpush1.msra.mxu0 %v920
        %1182 = vmatprep.subr.mxu0 0.0
        %1183 = vmatpush1.msra.mxu0 %v919
        %1184 = vmatprep.subr.mxu0 0.0
        %1185 = vmatpush1.msra.mxu0 %v918
        %1186 = vmatprep.subr.mxu0 0.0
        %1187 = vmatpush1.msra.mxu0 %v917
        %1188 = vmatprep.subr.mxu0 0.0
        %1189 = vmatpush1.msra.mxu0 %v916
        %1190 = vmatprep.subr.mxu0 0.0
        %1191 = vmatpush1.msra.mxu0 %v915
        %1192 = vmatprep.subr.mxu0 0.0
        %1193 = vmatpush1.msra.mxu0 %v914
        %1194 = vmatprep.subr.mxu0 0.0
        %1195 = vmatpush1.msra.mxu0 %v913
        %1196 = vmatprep.subr.mxu0 0.0
        %1197 = vmatpush1.msra.mxu0 %v912
        %1198 = vmatprep.subr.mxu0 0.0
        %1199 = vmatpush1.msra.mxu0 %v911
        %1200 = vmatprep.subr.mxu0 0.0
        %1201 = vmatpush2.msra.mxu0 %v942
        %1202 = vmatprep.subr.mxu0 0.0
        %1203 = vmatpush2.msra.mxu0 %v941
        %1204 = vmatprep.subr.mxu0 0.0
        %1205 = vmatpush2.msra.mxu0 %v940
        %1206 = vmatprep.subr.mxu0 0.0
        %1207 = vmatpush2.msra.mxu0 %v939
        %1208 = vmatprep.subr.mxu0 0.0
        %1209 = vmatpush2.msra.mxu0 %v938
        %1210 = vmatprep.subr.mxu0 0.0
        %1211 = vmatpush2.msra.mxu0 %v937
        %1212 = vmatprep.subr.mxu0 0.0
        %1213 = vmatpush2.msra.mxu0 %v936
        %1214 = vmatprep.subr.mxu0 0.0
        %1215 = vmatpush2.msra.mxu0 %v935
        %1216 = vmatprep.subr.mxu0 0.0
        %1217 = vmatpush2.msra.mxu0 %v934
        %1218 = vmatprep.subr.mxu0 0.0
        %1219 = vmatpush2.msra.mxu0 %v933
        %1220 = vmatprep.subr.mxu0 0.0
        %1221 = vmatpush2.msra.mxu0 %v932
        %1222 = vmatprep.subr.mxu0 0.0
        %1223 = vmatpush2.msra.mxu0 %v931
        %1224 = vmatprep.subr.mxu0 0.0
        %1225 = vmatpush2.msra.mxu0 %v930
        %1226 = vmatprep.subr.mxu0 0.0
        %1227 = vmatpush2.msra.mxu0 %v929
        %1228 = vmatprep.subr.mxu0 0.0
        %1229 = vmatpush2.msra.mxu0 %v928
        %1230 = vmatprep.subr.mxu0 0.0
        %1231 = vmatpush2.msra.mxu0 %v927
        %1232 = vmatprep.mubr.f32.mxu0 %v830
        %1233 = vmatmul.mubr.f32.gmra.mxu0 %v829
        %v1234 = vpop.f32.mrf.mxu0
        %v1235 = vadd.f32 %v1160, %v1234
        %v1236 = vpop.f32.mrf.mxu0
        %1237 = vmatprep.mubr.f32.mxu0 %v841
        %1238 = vmatmul.mubr.f32.gmra.mxu0 %v840
        %v1239 = vpop.f32.mrf.mxu0
        %v1240 = vadd.f32 %v1165, %v1239
        %v1241 = vpop.f32.mrf.mxu0
        %1242 = vdwg.mxu0
        %1243 = vmatprep.subr.mxu0 0.0
        %1244 = vmatpush1.msra.mxu0 %v958
        %1245 = vmatprep.subr.mxu0 0.0
        %1246 = vmatpush1.msra.mxu0 %v957
        %1247 = vmatprep.subr.mxu0 0.0
        %1248 = vmatpush1.msra.mxu0 %v956
        %1249 = vmatprep.subr.mxu0 0.0
        %1250 = vmatpush1.msra.mxu0 %v955
        %1251 = vmatprep.subr.mxu0 0.0
        %1252 = vmatpush1.msra.mxu0 %v954
        %1253 = vmatprep.subr.mxu0 0.0
        %1254 = vmatpush1.msra.mxu0 %v953
        %1255 = vmatprep.subr.mxu0 0.0
        %1256 = vmatpush1.msra.mxu0 %v952
        %1257 = vmatprep.subr.mxu0 0.0
        %1258 = vmatpush1.msra.mxu0 %v951
        %1259 = vmatprep.subr.mxu0 0.0
        %1260 = vmatpush1.msra.mxu0 %v950
        %1261 = vmatprep.subr.mxu0 0.0
        %1262 = vmatpush1.msra.mxu0 %v949
        %1263 = vmatprep.subr.mxu0 0.0
        %1264 = vmatpush1.msra.mxu0 %v948
        %1265 = vmatprep.subr.mxu0 0.0
        %1266 = vmatpush1.msra.mxu0 %v947
        %1267 = vmatprep.subr.mxu0 0.0
        %1268 = vmatpush1.msra.mxu0 %v946
        %1269 = vmatprep.subr.mxu0 0.0
        %1270 = vmatpush1.msra.mxu0 %v945
        %1271 = vmatprep.subr.mxu0 0.0
        %1272 = vmatpush1.msra.mxu0 %v944
        %1273 = vmatprep.subr.mxu0 0.0
        %1274 = vmatpush1.msra.mxu0 %v943
        %1275 = vmatprep.subr.mxu0 0.0
        %1276 = vmatpush2.msra.mxu0 %v974
        %1277 = vmatprep.subr.mxu0 0.0
        %1278 = vmatpush2.msra.mxu0 %v973
        %1279 = vmatprep.subr.mxu0 0.0
        %1280 = vmatpush2.msra.mxu0 %v972
        %1281 = vmatprep.subr.mxu0 0.0
        %1282 = vmatpush2.msra.mxu0 %v971
        %1283 = vmatprep.subr.mxu0 0.0
        %1284 = vmatpush2.msra.mxu0 %v970
        %1285 = vmatprep.subr.mxu0 0.0
        %1286 = vmatpush2.msra.mxu0 %v969
        %1287 = vmatprep.subr.mxu0 0.0
        %1288 = vmatpush2.msra.mxu0 %v968
        %1289 = vmatprep.subr.mxu0 0.0
        %1290 = vmatpush2.msra.mxu0 %v967
        %1291 = vmatprep.subr.mxu0 0.0
        %1292 = vmatpush2.msra.mxu0 %v966
        %1293 = vmatprep.subr.mxu0 0.0
        %1294 = vmatpush2.msra.mxu0 %v965
        %1295 = vmatprep.subr.mxu0 0.0
        %1296 = vmatpush2.msra.mxu0 %v964
        %1297 = vmatprep.subr.mxu0 0.0
        %1298 = vmatpush2.msra.mxu0 %v963
        %1299 = vmatprep.subr.mxu0 0.0
        %1300 = vmatpush2.msra.mxu0 %v962
        %1301 = vmatprep.subr.mxu0 0.0
        %1302 = vmatpush2.msra.mxu0 %v961
        %1303 = vmatprep.subr.mxu0 0.0
        %1304 = vmatpush2.msra.mxu0 %v960
        %1305 = vmatprep.subr.mxu0 0.0
        %1306 = vmatpush2.msra.mxu0 %v959
        %1307 = vmatprep.mubr.f32.mxu0 %v832
        %1308 = vmatmul.mubr.f32.gmra.mxu0 %v831
        %v1309 = vpop.f32.mrf.mxu0
        %v1310 = vadd.f32 %v1235, %v1309
        %v1311 = vpop.f32.mrf.mxu0
        %1312 = vmatprep.mubr.f32.mxu0 %v843
        %1313 = vmatmul.mubr.f32.gmra.mxu0 %v842
        %v1314 = vpop.f32.mrf.mxu0
        %v1315 = vadd.f32 %v1240, %v1314
        %v1316 = vpop.f32.mrf.mxu0
        %1317 = vdwg.mxu0
        %1318 = vmatprep.subr.mxu0 0.0
        %1319 = vmatpush1.msra.mxu0 %v990
        %1320 = vmatprep.subr.mxu0 0.0
        %1321 = vmatpush1.msra.mxu0 %v989
        %1322 = vmatprep.subr.mxu0 0.0
        %1323 = vmatpush1.msra.mxu0 %v988
        %1324 = vmatprep.subr.mxu0 0.0
        %1325 = vmatpush1.msra.mxu0 %v987
        %1326 = vmatprep.subr.mxu0 0.0
        %1327 = vmatpush1.msra.mxu0 %v986
        %1328 = vmatprep.subr.mxu0 0.0
        %1329 = vmatpush1.msra.mxu0 %v985
        %1330 = vmatprep.subr.mxu0 0.0
        %1331 = vmatpush1.msra.mxu0 %v984
        %1332 = vmatprep.subr.mxu0 0.0
        %1333 = vmatpush1.msra.mxu0 %v983
        %1334 = vmatprep.subr.mxu0 0.0
        %1335 = vmatpush1.msra.mxu0 %v982
        %1336 = vmatprep.subr.mxu0 0.0
        %1337 = vmatpush1.msra.mxu0 %v981
        %1338 = vmatprep.subr.mxu0 0.0
        %1339 = vmatpush1.msra.mxu0 %v980
        %1340 = vmatprep.subr.mxu0 0.0
        %1341 = vmatpush1.msra.mxu0 %v979
        %1342 = vmatprep.subr.mxu0 0.0
        %1343 = vmatpush1.msra.mxu0 %v978
        %1344 = vmatprep.subr.mxu0 0.0
        %1345 = vmatpush1.msra.mxu0 %v977
        %1346 = vmatprep.subr.mxu0 0.0
        %1347 = vmatpush1.msra.mxu0 %v976
        %1348 = vmatprep.subr.mxu0 0.0
        %1349 = vmatpush1.msra.mxu0 %v975
        %1350 = vmatprep.subr.mxu0 0.0
        %1351 = vmatpush2.msra.mxu0 %v1006
        %1352 = vmatprep.subr.mxu0 0.0
        %1353 = vmatpush2.msra.mxu0 %v1005
        %1354 = vmatprep.subr.mxu0 0.0
        %1355 = vmatpush2.msra.mxu0 %v1004
        %1356 = vmatprep.subr.mxu0 0.0
        %1357 = vmatpush2.msra.mxu0 %v1003
        %1358 = vmatprep.subr.mxu0 0.0
        %1359 = vmatpush2.msra.mxu0 %v1002
        %1360 = vmatprep.subr.mxu0 0.0
        %1361 = vmatpush2.msra.mxu0 %v1001
        %1362 = vmatprep.subr.mxu0 0.0
        %1363 = vmatpush2.msra.mxu0 %v1000
        %1364 = vmatprep.subr.mxu0 0.0
        %1365 = vmatpush2.msra.mxu0 %v999
        %1366 = vmatprep.subr.mxu0 0.0
        %1367 = vmatpush2.msra.mxu0 %v998
        %1368 = vmatprep.subr.mxu0 0.0
        %1369 = vmatpush2.msra.mxu0 %v997
        %1370 = vmatprep.subr.mxu0 0.0
        %1371 = vmatpush2.msra.mxu0 %v996
        %1372 = vmatprep.subr.mxu0 0.0
        %1373 = vmatpush2.msra.mxu0 %v995
        %1374 = vmatprep.subr.mxu0 0.0
        %1375 = vmatpush2.msra.mxu0 %v994
        %1376 = vmatprep.subr.mxu0 0.0
        %1377 = vmatpush2.msra.mxu0 %v993
        %1378 = vmatprep.subr.mxu0 0.0
        %1379 = vmatpush2.msra.mxu0 %v992
        %1380 = vmatprep.subr.mxu0 0.0
        %1381 = vmatpush2.msra.mxu0 %v991
        %1382 = vmatprep.mubr.f32.mxu0 %v834
        %1383 = vmatmul.mubr.f32.gmra.mxu0 %v833
        %v1384 = vpop.f32.mrf.mxu0
        %v1385 = vadd.f32 %v1310, %v1384
        %v1386 = vpop.f32.mrf.mxu0
        %1387 = vmatprep.mubr.f32.mxu0 %v845
        %1388 = vmatmul.mubr.f32.gmra.mxu0 %v844
        %v1389 = vpop.f32.mrf.mxu0
        %v1390 = vadd.f32 %v1315, %v1389
        %v1391 = vpop.f32.mrf.mxu0
        %1392 = vdwg.mxu0
        %1393 = vmatprep.subr.mxu0 0.0
        %1394 = vmatpush1.msra.mxu0 0.0
        %1395 = vmatprep.subr.mxu0 0.0
        %1396 = vmatpush1.msra.mxu0 0.0
        %1397 = vmatprep.subr.mxu0 0.0
        %1398 = vmatpush1.msra.mxu0 0.0
        %1399 = vmatprep.subr.mxu0 0.0
        %1400 = vmatpush1.msra.mxu0 0.0
        %1401 = vmatprep.subr.mxu0 0.0
        %1402 = vmatpush1.msra.mxu0 0.0
        %1403 = vmatprep.subr.mxu0 0.0
        %1404 = vmatpush1.msra.mxu0 0.0
        %1405 = vmatprep.subr.mxu0 0.0
        %1406 = vmatpush1.msra.mxu0 0.0
        %1407 = vmatprep.subr.mxu0 0.0
        %1408 = vmatpush1.msra.mxu0 0.0
        %1409 = vmatprep.subr.mxu0 0.0
        %1410 = vmatpush1.msra.mxu0 0.0
        %1411 = vmatprep.subr.mxu0 0.0
        %1412 = vmatpush1.msra.mxu0 0.0
        %1413 = vmatprep.subr.mxu0 0.0
        %1414 = vmatpush1.msra.mxu0 0.0
        %1415 = vmatprep.subr.mxu0 0.0
        %1416 = vmatpush1.msra.mxu0 0.0
        %1417 = vmatprep.subr.mxu0 0.0
        %1418 = vmatpush1.msra.mxu0 0.0
        %1419 = vmatprep.subr.mxu0 0.0
        %1420 = vmatpush1.msra.mxu0 0.0
        %1421 = vmatprep.subr.mxu0 0.0
        %1422 = vmatpush1.msra.mxu0 %v1008
        %1423 = vmatprep.subr.mxu0 0.0
        %1424 = vmatpush1.msra.mxu0 %v1007
        %1425 = vmatprep.subr.mxu0 0.0
        %1426 = vmatpush2.msra.mxu0 0.0
        %1427 = vmatprep.subr.mxu0 0.0
        %1428 = vmatpush2.msra.mxu0 0.0
        %1429 = vmatprep.subr.mxu0 0.0
        %1430 = vmatpush2.msra.mxu0 0.0
        %1431 = vmatprep.subr.mxu0 0.0
        %1432 = vmatpush2.msra.mxu0 0.0
        %1433 = vmatprep.subr.mxu0 0.0
        %1434 = vmatpush2.msra.mxu0 0.0
        %1435 = vmatprep.subr.mxu0 0.0
        %1436 = vmatpush2.msra.mxu0 0.0
        %1437 = vmatprep.subr.mxu0 0.0
        %1438 = vmatpush2.msra.mxu0 0.0
        %1439 = vmatprep.subr.mxu0 0.0
        %1440 = vmatpush2.msra.mxu0 0.0
        %1441 = vmatprep.subr.mxu0 0.0
        %1442 = vmatpush2.msra.mxu0 0.0
        %1443 = vmatprep.subr.mxu0 0.0
        %1444 = vmatpush2.msra.mxu0 0.0
        %1445 = vmatprep.subr.mxu0 0.0
        %1446 = vmatpush2.msra.mxu0 0.0
        %1447 = vmatprep.subr.mxu0 0.0
        %1448 = vmatpush2.msra.mxu0 0.0
        %1449 = vmatprep.subr.mxu0 0.0
        %1450 = vmatpush2.msra.mxu0 0.0
        %1451 = vmatprep.subr.mxu0 0.0
        %1452 = vmatpush2.msra.mxu0 0.0
        %1453 = vmatprep.subr.mxu0 0.0
        %1454 = vmatpush2.msra.mxu0 0.0
        %1455 = vmatprep.subr.mxu0 0.0
        %1456 = vmatpush2.msra.mxu0 0.0
        %1457 = vmatprep.mubr.f32.mxu0 0.0
        %1458 = vmatmul.mubr.f32.gmra.mxu0 %v1013
        %v1459 = vpop.f32.mrf.mxu0
        %v1460 = vadd.f32 %v1385, %v1459
        %v1461 = vpop.f32.mrf.mxu0
        %1462 = vmatprep.mubr.f32.mxu0 0.0
        %1463 = vmatmul.mubr.f32.gmra.mxu0 %v1016
        %v1464 = vpop.f32.mrf.mxu0
        %v1465 = vadd.f32 %v1390, %v1464
        %v1466 = vpop.f32.mrf.mxu0
        %1467 = vdwg.mxu0
        %v1468 = vld [vmem:[%s3] sm:$0x1]
        %v1469 = vld [vmem:[%s4] sm:$0x1]
        %1470 = vadd.xlane.f32.xlu0 %v1460
        %v1471 = vpop.xlane.xlu0 %1470
        %vm1472 = vcmask 1041408
        %v1473 = vsel %vm1472, %v1465, 0.0
        %1474 = vadd.xlane.f32.xlu0 %v1473
        %v1475 = vpop.xlane.xlu0 %1474
        %v1476 = vrcp.pop 128.0
        %v1477 = vmul.f32 %v1471, %v1476
        %v1478 = vmul.f32 %v1475, %v1476
        %v1479 = vsub.f32 %v1460, %v1477
        %v1480 = vsub.f32 %v1465, %v1478
        %v1481 = vmul.f32 %v1479, %v1479
        %v1482 = vmul.f32 %v1480, %v1480
        %1483 = vadd.xlane.f32.xlu0 %v1481
        %v1484 = vpop.xlane.xlu0 %1483
        %v1485 = vsel %vm1472, %v1482, 0.0
        %1486 = vadd.xlane.f32.xlu0 %v1485
        %v1487 = vpop.xlane.xlu0 %1486
        %v1488 = vmul.f32 %v1484, %v1476
        %v1489 = vmul.f32 %v1487, %v1476
        %v1490 = vadd.f32 %v1488, 1e-05
        %v1491 = vadd.f32 %v1489, 1e-05
        %v1492 = vrsqrt.pop %v1490
        %v1493 = vrsqrt.pop %v1491
        %v1494 = vmul.f32 %v1479, %v1492
        %v1495 = vmul.f32 %v1480, %v1493
        %v1497 = vlaneseq
        %v1498 = vshrl.u32 %v1497, 7
        %v1499 = vsub.s32 0, %v1498
        %v1500 = vrot.slane %v1468, %v1499
        %v1502 = vmul.f32 %v1494, %v1500
        %v1503 = vmul.f32 %v1495, %v1500
        %v1505 = vlaneseq
        %v1506 = vshrl.u32 %v1505, 7
        %v1507 = vsub.s32 0, %v1506
        %v1508 = vrot.slane %v1469, %v1507
        %v1510 = vadd.f32 %v1502, %v1508
        %v1511 = vadd.f32 %v1503, %v1508
        %1512 = vst [vmem:[#allocation2] sm:$0xff] %v1510
        %1513 = vst [vmem:[#allocation2 + $0x8] sm:$0x3] %v1511
      $region108: #{vision_transformer_forward.1} parent=103 // pred_fallthru
        _
      %v1514 = vld [vmem:[#allocation2] sm:$0xff]
      %v1515 = vld [vmem:[#allocation2 + $0x8] sm:$0x3]
      %v1516 = vld [vmem:[%s5] sm:$0xff]
      %v1517 = vld [vmem:[%s5 + $0x8] sm:$0x3]
      %v1518 = vld [vmem:[%s776] sm:$0x1]
      %v1519 = vld [vmem:[%s779] sm:$0x1]
      %1520 = vadd.xlane.f32.xlu0 %v1514
      %v1521 = vpop.xlane.xlu0 %1520
      %vm1522 = vcmask 1041408
      %v1523 = vsel %vm1522, %v1515, 0.0
      %1524 = vadd.xlane.f32.xlu0 %v1523
      %v1525 = vpop.xlane.xlu0 %1524
      %v1526 = vrcp.pop 128.0
      %v1527 = vmul.f32 %v1521, %v1526
      %v1528 = vmul.f32 %v1525, %v1526
      %v1529 = vsub.f32 %v1514, %v1527
      %v1530 = vsub.f32 %v1515, %v1528
      %v1531 = vmul.f32 %v1529, %v1529
      %v1532 = vmul.f32 %v1530, %v1530
      %1533 = vadd.xlane.f32.xlu0 %v1531
      %v1534 = vpop.xlane.xlu0 %1533
      %v1535 = vsel %vm1522, %v1532, 0.0
      %1536 = vadd.xlane.f32.xlu0 %v1535
      %v1537 = vpop.xlane.xlu0 %1536
      %v1538 = vmul.f32 %v1534, %v1526
      %v1539 = vmul.f32 %v1537, %v1526
      %v1540 = vadd.f32 %v1538, 1e-05
      %v1541 = vadd.f32 %v1539, 1e-05
      %v1542 = vrsqrt.pop %v1540
      %v1543 = vrsqrt.pop %v1541
      %v1544 = vmul.f32 %v1529, %v1542
      %v1545 = vmul.f32 %v1530, %v1543
      %v1547 = vlaneseq
      %v1548 = vshrl.u32 %v1547, 7
      %v1549 = vsub.s32 0, %v1548
      %v1550 = vrot.slane %v1518, %v1549
      %v1552 = vmul.f32 %v1544, %v1550
      %v1553 = vmul.f32 %v1545, %v1550
      %v1555 = vlaneseq
      %v1556 = vshrl.u32 %v1555, 7
      %v1557 = vsub.s32 0, %v1556
      %v1558 = vrot.slane %v1519, %v1557
      %v1560 = vadd.f32 %v1552, %v1558
      %v1561 = vadd.f32 %v1553, %v1558
      %v1562 = vpack.c.bf16 %v1561, %v1560
      %v1563 = vld [vmem:[%s784] sm:$0xff]
      %v1564 = vld [vmem:[%s784 + $0x8] sm:$0xf]
      %v1565 = vld [vmem:[%s784 + $0xc] sm:$0xff]
      %v1566 = vld [vmem:[%s784 + $0x14] sm:$0xf]
      %v1567 = vld [vmem:[%s784 + $0x18] sm:$0xff]
      %v1568 = vld [vmem:[%s784 + $0x20] sm:$0xf]
      %v1569 = vld [vmem:[%s784 + $0x24] sm:$0xff]
      %v1570 = vld [vmem:[%s784 + $0x2c] sm:$0xf]
      %v1571 = vld [vmem:[%s784 + $0x30] sm:$0xff]
      %v1572 = vld [vmem:[%s784 + $0x38] sm:$0xf]
      %v1573 = vld [vmem:[%s784 + $0x3c] sm:$0xff]
      %v1574 = vld [vmem:[%s784 + $0x44] sm:$0xf]
      %v1575 = vld [vmem:[%s784 + $0x48] sm:$0xff]
      %v1576 = vld [vmem:[%s784 + $0x50] sm:$0xf]
      %v1577 = vld [vmem:[%s784 + $0x54] sm:$0xff]
      %v1578 = vld [vmem:[%s784 + $0x5c] sm:$0xf]
      %v1579 = vld [vmem:[%s784 + $0x60] sm:$0xff]
      %v1580 = vld [vmem:[%s784 + $0x68] sm:$0xf]
      %v1581 = vld [vmem:[%s784 + $0x6c] sm:$0xff]
      %v1582 = vld [vmem:[%s784 + $0x74] sm:$0xf]
      %v1583 = vld [vmem:[%s784 + $0x78] sm:$0xff]
      %v1584 = vld [vmem:[%s784 + $0x80] sm:$0xf]
      %v1585 = vld [vmem:[%s784 + $0x84] sm:$0xff]
      %v1586 = vld [vmem:[%s784 + $0x8c] sm:$0xf]
      %v1587 = vld [vmem:[%s784 + $0x90] sm:$0xff]
      %v1588 = vld [vmem:[%s784 + $0x98] sm:$0xf]
      %v1589 = vld [vmem:[%s784 + $0x9c] sm:$0xff]
      %v1590 = vld [vmem:[%s784 + $0xa4] sm:$0xf]
      %v1591 = vld [vmem:[%s784 + $0xa8] sm:$0xff]
      %v1592 = vld [vmem:[%s784 + $0xb0] sm:$0xf]
      %v1593 = vld [vmem:[%s784 + $0xb4] sm:$0xff]
      %v1594 = vld [vmem:[%s784 + $0xbc] sm:$0xf]
      %v1595 = vld [vmem:[%s788] sm:$0x7]
      %v1597 = vlaneseq
      %v1598 = vshrl.u32 %v1597, 7
      %v1599 = vsub.s32 0, %v1598
      %v1600 = vrot.slane %v1595, %v1599
      %v1601 = vlaneseq
      %v1602 = vshrl.u32 %v1601, 7
      %v1603 = vsub.s32 1, %v1602
      %v1604 = vrot.slane %v1595, %v1603
      %v1605 = vlaneseq
      %v1606 = vshrl.u32 %v1605, 7
      %v1607 = vsub.s32 2, %v1606
      %v1608 = vrot.slane %v1595, %v1607
      %v1644 = vunpack.c.l.b16 %v1563
      %v1645 = vunpack.c.h.b16 %v1563
      %v1646 = vunpack.c.l.b16 %v1564
      %v1647 = vunpack.c.l.b16 %v1565
      %v1648 = vunpack.c.h.b16 %v1565
      %v1649 = vunpack.c.l.b16 %v1566
      %v1650 = vunpack.c.l.b16 %v1567
      %v1651 = vunpack.c.h.b16 %v1567
      %v1652 = vunpack.c.l.b16 %v1568
      %v1653 = vunpack.c.l.b16 %v1569
      %v1654 = vunpack.c.h.b16 %v1569
      %v1655 = vunpack.c.l.b16 %v1570
      %v1656 = vunpack.c.l.b16 %v1571
      %v1657 = vunpack.c.h.b16 %v1571
      %v1658 = vunpack.c.l.b16 %v1572
      %v1659 = vunpack.c.l.b16 %v1573
      %v1660 = vunpack.c.h.b16 %v1573
      %v1661 = vunpack.c.l.b16 %v1574
      %v1662 = vunpack.c.l.b16 %v1575
      %v1663 = vunpack.c.h.b16 %v1575
      %v1664 = vunpack.c.l.b16 %v1576
      %v1665 = vunpack.c.l.b16 %v1577
      %v1666 = vunpack.c.h.b16 %v1577
      %v1667 = vunpack.c.l.b16 %v1578
      %v1668 = vunpack.c.l.b16 %v1579
      %v1669 = vunpack.c.h.b16 %v1579
      %v1670 = vunpack.c.l.b16 %v1580
      %v1671 = vunpack.c.l.b16 %v1581
      %v1672 = vunpack.c.h.b16 %v1581
      %v1673 = vunpack.c.l.b16 %v1582
      %v1674 = vunpack.c.l.b16 %v1583
      %v1675 = vunpack.c.h.b16 %v1583
      %v1676 = vunpack.c.l.b16 %v1584
      %v1677 = vunpack.c.l.b16 %v1585
      %v1678 = vunpack.c.h.b16 %v1585
      %v1679 = vunpack.c.l.b16 %v1586
      %v1680 = vunpack.c.l.b16 %v1587
      %v1681 = vunpack.c.h.b16 %v1587
      %v1682 = vunpack.c.l.b16 %v1588
      %v1683 = vunpack.c.l.b16 %v1589
      %v1684 = vunpack.c.h.b16 %v1589
      %v1685 = vunpack.c.l.b16 %v1590
      %v1686 = vunpack.c.l.b16 %v1591
      %v1687 = vunpack.c.h.b16 %v1591
      %v1688 = vunpack.c.l.b16 %v1592
      %v1689 = vunpack.c.l.b16 %v1593
      %v1690 = vunpack.c.h.b16 %v1593
      %v1691 = vunpack.c.l.b16 %v1594
      %v1692 = vpack.c.b16 %v1647, %v1644
      %v1693 = vpack.c.b16 %v1648, %v1645
      %v1694 = vpack.c.b16 %v1649, %v1646
      %v1695 = vpack.c.b16 %v1653, %v1650
      %v1696 = vpack.c.b16 %v1654, %v1651
      %v1697 = vpack.c.b16 %v1655, %v1652
      %v1698 = vpack.c.b16 %v1659, %v1656
      %v1699 = vpack.c.b16 %v1660, %v1657
      %v1700 = vpack.c.b16 %v1661, %v1658
      %v1701 = vpack.c.b16 %v1665, %v1662
      %v1702 = vpack.c.b16 %v1666, %v1663
      %v1703 = vpack.c.b16 %v1667, %v1664
      %v1704 = vpack.c.b16 %v1671, %v1668
      %v1705 = vpack.c.b16 %v1672, %v1669
      %v1706 = vpack.c.b16 %v1673, %v1670
      %v1707 = vpack.c.b16 %v1677, %v1674
      %v1708 = vpack.c.b16 %v1678, %v1675
      %v1709 = vpack.c.b16 %v1679, %v1676
      %v1710 = vpack.c.b16 %v1683, %v1680
      %v1711 = vpack.c.b16 %v1684, %v1681
      %v1712 = vpack.c.b16 %v1685, %v1682
      %v1713 = vpack.c.b16 %v1689, %v1686
      %v1714 = vpack.c.b16 %v1690, %v1687
      %v1715 = vpack.c.b16 %v1691, %v1688
      %1740 = vmatprep.subr.bf16.mxu0 %v1714
      %1741 = vmatpush1.bf16.msra.mxu0 %v1713
      %1742 = vmatprep.subr.bf16.mxu0 %v1711
      %1743 = vmatpush1.bf16.msra.mxu0 %v1710
      %1744 = vmatprep.subr.bf16.mxu0 %v1708
      %1745 = vmatpush1.bf16.msra.mxu0 %v1707
      %1746 = vmatprep.subr.bf16.mxu0 %v1705
      %1747 = vmatpush1.bf16.msra.mxu0 %v1704
      %1748 = vmatprep.subr.bf16.mxu0 %v1702
      %1749 = vmatpush1.bf16.msra.mxu0 %v1701
      %1750 = vmatprep.subr.bf16.mxu0 %v1699
      %1751 = vmatpush1.bf16.msra.mxu0 %v1698
      %1752 = vmatprep.subr.bf16.mxu0 %v1696
      %1753 = vmatpush1.bf16.msra.mxu0 %v1695
      %1754 = vmatprep.subr.bf16.mxu0 %v1693
      %1755 = vmatpush1.bf16.msra.mxu0 %v1692
      %1756 = vmatprep.subr.bf16.mxu0 0
      %1757 = vmatpush2.bf16.msra.mxu0 0
      %1758 = vmatprep.subr.bf16.mxu0 0
      %1759 = vmatpush2.bf16.msra.mxu0 0
      %1760 = vmatprep.subr.bf16.mxu0 0
      %1761 = vmatpush2.bf16.msra.mxu0 0
      %1762 = vmatprep.subr.bf16.mxu0 0
      %1763 = vmatpush2.bf16.msra.mxu0 0
      %1764 = vmatprep.subr.bf16.mxu0 0
      %1765 = vmatpush2.bf16.msra.mxu0 0
      %1766 = vmatprep.subr.bf16.mxu0 0
      %1767 = vmatpush2.bf16.msra.mxu0 0
      %1768 = vmatprep.subr.bf16.mxu0 0
      %1769 = vmatpush2.bf16.msra.mxu0 0
      %1770 = vmatprep.subr.bf16.mxu0 0
      %1771 = vmatpush2.bf16.msra.mxu0 0
      %1772 = vmatprep.mubr.bf16.mxu0 0
      %1773 = vmatmul.mubr.bf16.gmra.mxu0 %v1562
      %v1774 = vpop.f32.mrf.mxu0
      %v1775 = vadd.f32 %v1600, %v1774
      %v1776 = vpop.f32.mrf.mxu0
      %v1777 = vadd.f32 %v1604, %v1776
      %v1778 = vpop.f32.mrf.mxu0
      %v1779 = vadd.f32 %v1600, %v1778
      %v1780 = vpop.f32.mrf.mxu0
      %v1781 = vadd.f32 %v1604, %v1780
      %1782 = vdwg.mxu0
      %1783 = vmatprep.subr.bf16.mxu0 0
      %1784 = vmatpush1.bf16.msra.mxu0 %v1715
      %1785 = vmatprep.subr.bf16.mxu0 0
      %1786 = vmatpush1.bf16.msra.mxu0 %v1712
      %1787 = vmatprep.subr.bf16.mxu0 0
      %1788 = vmatpush1.bf16.msra.mxu0 %v1709
      %1789 = vmatprep.subr.bf16.mxu0 0
      %1790 = vmatpush1.bf16.msra.mxu0 %v1706
      %1791 = vmatprep.subr.bf16.mxu0 0
      %1792 = vmatpush1.bf16.msra.mxu0 %v1703
      %1793 = vmatprep.subr.bf16.mxu0 0
      %1794 = vmatpush1.bf16.msra.mxu0 %v1700
      %1795 = vmatprep.subr.bf16.mxu0 0
      %1796 = vmatpush1.bf16.msra.mxu0 %v1697
      %1797 = vmatprep.subr.bf16.mxu0 0
      %1798 = vmatpush1.bf16.msra.mxu0 %v1694
      %1799 = vmatprep.subr.bf16.mxu0 0
      %1800 = vmatpush2.bf16.msra.mxu0 0
      %1801 = vmatprep.subr.bf16.mxu0 0
      %1802 = vmatpush2.bf16.msra.mxu0 0
      %1803 = vmatprep.subr.bf16.mxu0 0
      %1804 = vmatpush2.bf16.msra.mxu0 0
      %1805 = vmatprep.subr.bf16.mxu0 0
      %1806 = vmatpush2.bf16.msra.mxu0 0
      %1807 = vmatprep.subr.bf16.mxu0 0
      %1808 = vmatpush2.bf16.msra.mxu0 0
      %1809 = vmatprep.subr.bf16.mxu0 0
      %1810 = vmatpush2.bf16.msra.mxu0 0
      %1811 = vmatprep.subr.bf16.mxu0 0
      %1812 = vmatpush2.bf16.msra.mxu0 0
      %1813 = vmatprep.subr.bf16.mxu0 0
      %1814 = vmatpush2.bf16.msra.mxu0 0
      %1815 = vmatprep.mubr.bf16.mxu0 0
      %1816 = vmatmul.mubr.bf16.gmra.mxu0 %v1562
      %v1817 = vpop.f32.mrf.mxu0
      %v1818 = vadd.f32 %v1608, %v1817
      %v1819 = vpop.f32.mrf.mxu0
      %v1820 = vpop.f32.mrf.mxu0
      %v1821 = vadd.f32 %v1608, %v1820
      %v1822 = vpop.f32.mrf.mxu0
      %1823 = vdwg.mxu0
      %v1824 = vld [vmem:[%s793] sm:$0xf]
      %v1825 = vld [vmem:[%s793 + $0x4] sm:$0xf]
      %v1826 = vld [vmem:[%s793 + $0x8] sm:$0xf]
      %v1827 = vld [vmem:[%s793 + $0xc] sm:$0xf]
      %v1828 = vld [vmem:[%s793 + $0x10] sm:$0xf]
      %v1829 = vld [vmem:[%s793 + $0x14] sm:$0xf]
      %v1830 = vld [vmem:[%s793 + $0x18] sm:$0xf]
      %v1831 = vld [vmem:[%s793 + $0x1c] sm:$0xf]
      %v1832 = vld [vmem:[%s793 + $0x20] sm:$0xf]
      %v1833 = vld [vmem:[%s793 + $0x24] sm:$0xf]
      %v1834 = vld [vmem:[%s793 + $0x28] sm:$0xf]
      %v1835 = vld [vmem:[%s793 + $0x2c] sm:$0xf]
      %v1836 = vld [vmem:[%s793 + $0x30] sm:$0xf]
      %v1837 = vld [vmem:[%s793 + $0x34] sm:$0xf]
      %v1838 = vld [vmem:[%s793 + $0x38] sm:$0xf]
      %v1839 = vld [vmem:[%s793 + $0x3c] sm:$0xf]
      %v1840 = vmul.f32 %v1775, 0.17677669
      %v1841 = vmul.f32 %v1779, 0.17677669
      %vm1842 = vcmask 261120
      %v1844 = vsel %vm1842, %v1840, 0
      %v1847 = vsel %vm1842, %v1841, 0
      %v1850 = vsel %vm1842, %v1777, 0
      %v1853 = vsel %vm1842, %v1781, 0
      %1855 = vmatprep.subr.mxu0 0.0
      %1856 = vmatpush1.xpose.msra.mxu0 0.0
      %1857 = vmatprep.subr.mxu0 0.0
      %1858 = vmatpush1.xpose.msra.mxu0 0.0
      %1859 = vmatprep.subr.mxu0 0.0
      %1860 = vmatpush1.xpose.msra.mxu0 0.0
      %1861 = vmatprep.subr.mxu0 0.0
      %1862 = vmatpush1.xpose.msra.mxu0 0.0
      %1863 = vmatprep.subr.mxu0 0.0
      %1864 = vmatpush1.xpose.msra.mxu0 0.0
      %1865 = vmatprep.subr.mxu0 0.0
      %1866 = vmatpush1.xpose.msra.mxu0 0.0
      %1867 = vmatprep.subr.mxu0 0.0
      %1868 = vmatpush1.xpose.msra.mxu0 0.0
      %1869 = vmatprep.subr.mxu0 0.0
      %1870 = vmatpush1.xpose.msra.mxu0 0.0
      %1871 = vmatprep.subr.mxu0 0.0
      %1872 = vmatpush1.xpose.msra.mxu0 0.0
      %1873 = vmatprep.subr.mxu0 0.0
      %1874 = vmatpush1.xpose.msra.mxu0 0.0
      %1875 = vmatprep.subr.mxu0 0.0
      %1876 = vmatpush1.xpose.msra.mxu0 0.0
      %1877 = vmatprep.subr.mxu0 0.0
      %1878 = vmatpush1.xpose.msra.mxu0 0.0
      %1879 = vmatprep.subr.mxu0 0.0
      %1880 = vmatpush1.xpose.msra.mxu0 0.0
      %1881 = vmatprep.subr.mxu0 0.0
      %1882 = vmatpush1.xpose.msra.mxu0 0.0
      %1883 = vmatprep.subr.mxu0 0.0
      %1884 = vmatpush1.xpose.msra.mxu0 %v1853
      %1885 = vmatprep.subr.mxu0 0.0
      %1886 = vmatpush1.xpose.msra.mxu0 %v1850
      %1887 = vmatprep.subr.mxu0 0.0
      %1888 = vmatpush2.xpose.msra.mxu0 0.0
      %1889 = vmatprep.subr.mxu0 0.0
      %1890 = vmatpush2.xpose.msra.mxu0 0.0
      %1891 = vmatprep.subr.mxu0 0.0
      %1892 = vmatpush2.xpose.msra.mxu0 0.0
      %1893 = vmatprep.subr.mxu0 0.0
      %1894 = vmatpush2.xpose.msra.mxu0 0.0
      %1895 = vmatprep.subr.mxu0 0.0
      %1896 = vmatpush2.xpose.msra.mxu0 0.0
      %1897 = vmatprep.subr.mxu0 0.0
      %1898 = vmatpush2.xpose.msra.mxu0 0.0
      %1899 = vmatprep.subr.mxu0 0.0
      %1900 = vmatpush2.xpose.msra.mxu0 0.0
      %1901 = vmatprep.subr.mxu0 0.0
      %1902 = vmatpush2.xpose.msra.mxu0 0.0
      %1903 = vmatprep.subr.mxu0 0.0
      %1904 = vmatpush2.xpose.msra.mxu0 0.0
      %1905 = vmatprep.subr.mxu0 0.0
      %1906 = vmatpush2.xpose.msra.mxu0 0.0
      %1907 = vmatprep.subr.mxu0 0.0
      %1908 = vmatpush2.xpose.msra.mxu0 0.0
      %1909 = vmatprep.subr.mxu0 0.0
      %1910 = vmatpush2.xpose.msra.mxu0 0.0
      %1911 = vmatprep.subr.mxu0 0.0
      %1912 = vmatpush2.xpose.msra.mxu0 0.0
      %1913 = vmatprep.subr.mxu0 0.0
      %1914 = vmatpush2.xpose.msra.mxu0 0.0
      %1915 = vmatprep.subr.mxu0 0.0
      %1916 = vmatpush2.xpose.msra.mxu0 0.0
      %1917 = vmatprep.subr.mxu0 0.0
      %1918 = vmatpush2.xpose.msra.mxu0 0.0
      %1919 = vmatprep.mubr.f32.mxu0 0.0
      %1920 = vmatmul.mubr.f32.gmra.mxu0 %v1844
      %v1921 = vpop.f32.mrf.mxu0
      %v1922 = vadd.f32 %v1516, %v1921
      %v1923 = vpop.f32.mrf.mxu0
      %1924 = vmatprep.mubr.f32.mxu0 0.0
      %1925 = vmatmul.mubr.f32.gmra.mxu0 %v1847
      %v1926 = vpop.f32.mrf.mxu0
      %v1927 = vadd.f32 %v1517, %v1926
      %v1928 = vpop.f32.mrf.mxu0
      %1929 = vdwg.mxu0
      %vm1930 = vcmask 80896
      %v1931 = vsel %vm1930, %v1922, -inf
      %1932 = vmax.xlane.f32.xlu0 %v1931
      %v1933 = vpop.xlane.xlu0 %1932
      %vm1934 = vcmask 74752
      %v1935 = vsel %vm1934, %v1927, -inf
      %1936 = vmax.xlane.f32.xlu0 %v1935
      %v1937 = vpop.xlane.xlu0 %1936
      %v1938 = vsub.f32 %v1922, %v1933
      %v1939 = vsub.f32 %v1927, %v1937
      %v1940 = vmul.f32 %v1938, 1.442695
      %v1941 = vpow.pop %v1940
      %v1942 = vmul.f32 %v1939, 1.442695
      %v1943 = vpow.pop %v1942
      %v1944 = vsel %vm1930, %v1941, 0.0
      %1945 = vadd.xlane.f32.xlu0 %v1944
      %v1946 = vpop.xlane.xlu0 %1945
      %v1947 = vsel %vm1934, %v1943, 0.0
      %1948 = vadd.xlane.f32.xlu0 %v1947
      %v1949 = vpop.xlane.xlu0 %1948
      %v1950 = vrcp.pop %v1946
      %v1951 = vmul.f32 %v1941, %v1950
      %v1952 = vrcp.pop %v1949
      %v1953 = vmul.f32 %v1943, %v1952
      %v1955 = vsel %vm1930, %v1951, 0
      %v1958 = vsel %vm1930, %v1953, 0
      %v1961 = vsel %vm1522, %v1821, 0
      %1963 = vmatprep.subr.mxu0 0.0
      %1964 = vmatpush1.msra.mxu0 0.0
      %1965 = vmatprep.subr.mxu0 0.0
      %1966 = vmatpush1.msra.mxu0 0.0
      %1967 = vmatprep.subr.mxu0 0.0
      %1968 = vmatpush1.msra.mxu0 0.0
      %1969 = vmatprep.subr.mxu0 0.0
      %1970 = vmatpush1.msra.mxu0 0.0
      %1971 = vmatprep.subr.mxu0 0.0
      %1972 = vmatpush1.msra.mxu0 0.0
      %1973 = vmatprep.subr.mxu0 0.0
      %1974 = vmatpush1.msra.mxu0 0.0
      %1975 = vmatprep.subr.mxu0 0.0
      %1976 = vmatpush1.msra.mxu0 0.0
      %1977 = vmatprep.subr.mxu0 0.0
      %1978 = vmatpush1.msra.mxu0 0.0
      %1979 = vmatprep.subr.mxu0 0.0
      %1980 = vmatpush1.msra.mxu0 0.0
      %1981 = vmatprep.subr.mxu0 0.0
      %1982 = vmatpush1.msra.mxu0 0.0
      %1983 = vmatprep.subr.mxu0 0.0
      %1984 = vmatpush1.msra.mxu0 0.0
      %1985 = vmatprep.subr.mxu0 0.0
      %1986 = vmatpush1.msra.mxu0 0.0
      %1987 = vmatprep.subr.mxu0 0.0
      %1988 = vmatpush1.msra.mxu0 0.0
      %1989 = vmatprep.subr.mxu0 0.0
      %1990 = vmatpush1.msra.mxu0 0.0
      %1991 = vmatprep.subr.mxu0 0.0
      %1992 = vmatpush1.msra.mxu0 %v1961
      %1993 = vmatprep.subr.mxu0 0.0
      %1994 = vmatpush1.msra.mxu0 %v1818
      %1995 = vmatprep.subr.mxu0 0.0
      %1996 = vmatpush2.msra.mxu0 0.0
      %1997 = vmatprep.subr.mxu0 0.0
      %1998 = vmatpush2.msra.mxu0 0.0
      %1999 = vmatprep.subr.mxu0 0.0
      %2000 = vmatpush2.msra.mxu0 0.0
      %2001 = vmatprep.subr.mxu0 0.0
      %2002 = vmatpush2.msra.mxu0 0.0
      %2003 = vmatprep.subr.mxu0 0.0
      %2004 = vmatpush2.msra.mxu0 0.0
      %2005 = vmatprep.subr.mxu0 0.0
      %2006 = vmatpush2.msra.mxu0 0.0
      %2007 = vmatprep.subr.mxu0 0.0
      %2008 = vmatpush2.msra.mxu0 0.0
      %2009 = vmatprep.subr.mxu0 0.0
      %2010 = vmatpush2.msra.mxu0 0.0
      %2011 = vmatprep.subr.mxu0 0.0
      %2012 = vmatpush2.msra.mxu0 0.0
      %2013 = vmatprep.subr.mxu0 0.0
      %2014 = vmatpush2.msra.mxu0 0.0
      %2015 = vmatprep.subr.mxu0 0.0
      %2016 = vmatpush2.msra.mxu0 0.0
      %2017 = vmatprep.subr.mxu0 0.0
      %2018 = vmatpush2.msra.mxu0 0.0
      %2019 = vmatprep.subr.mxu0 0.0
      %2020 = vmatpush2.msra.mxu0 0.0
      %2021 = vmatprep.subr.mxu0 0.0
      %2022 = vmatpush2.msra.mxu0 0.0
      %2023 = vmatprep.subr.mxu0 0.0
      %2024 = vmatpush2.msra.mxu0 0.0
      %2025 = vmatprep.subr.mxu0 0.0
      %2026 = vmatpush2.msra.mxu0 0.0
      %2027 = vmatprep.mubr.f32.mxu0 0.0
      %2028 = vmatmul.mubr.f32.gmra.mxu0 %v1955
      %v2029 = vpop.f32.mrf.mxu0
      %v2030 = vadd.f32 0.0, %v2029
      %v2031 = vpop.f32.mrf.mxu0
      %2032 = vmatprep.mubr.f32.mxu0 0.0
      %2033 = vmatmul.mubr.f32.gmra.mxu0 %v1958
      %v2034 = vpop.f32.mrf.mxu0
      %v2035 = vadd.f32 0.0, %v2034
      %v2036 = vpop.f32.mrf.mxu0
      %2037 = vdwg.mxu0
      %v2038 = vpack.c.bf16 %v2035, %v2030
      %2039 = vrot.lane.b32.xlu0 %v1840, 96
      %v2040 = vpop.permute.xlu0 %2039
      %2041 = vrot.lane.b32.xlu0 %v1841, 96
      %v2042 = vpop.permute.xlu0 %2041
      %2043 = vrot.lane.b32.xlu0 %v1777, 96
      %v2044 = vpop.permute.xlu0 %2043
      %2045 = vrot.lane.b32.xlu0 %v1781, 96
      %v2046 = vpop.permute.xlu0 %2045
      %v2047 = vsel %vm1842, %v2040, 0
      %v2049 = vsel %vm1842, %v2042, 0
      %v2051 = vsel %vm1842, %v2044, 0
      %v2053 = vsel %vm1842, %v2046, 0
      %2055 = vmatprep.subr.mxu0 0.0
      %2056 = vmatpush1.xpose.msra.mxu0 0.0
      %2057 = vmatprep.subr.mxu0 0.0
      %2058 = vmatpush1.xpose.msra.mxu0 0.0
      %2059 = vmatprep.subr.mxu0 0.0
      %2060 = vmatpush1.xpose.msra.mxu0 0.0
      %2061 = vmatprep.subr.mxu0 0.0
      %2062 = vmatpush1.xpose.msra.mxu0 0.0
      %2063 = vmatprep.subr.mxu0 0.0
      %2064 = vmatpush1.xpose.msra.mxu0 0.0
      %2065 = vmatprep.subr.mxu0 0.0
      %2066 = vmatpush1.xpose.msra.mxu0 0.0
      %2067 = vmatprep.subr.mxu0 0.0
      %2068 = vmatpush1.xpose.msra.mxu0 0.0
      %2069 = vmatprep.subr.mxu0 0.0
      %2070 = vmatpush1.xpose.msra.mxu0 0.0
      %2071 = vmatprep.subr.mxu0 0.0
      %2072 = vmatpush1.xpose.msra.mxu0 0.0
      %2073 = vmatprep.subr.mxu0 0.0
      %2074 = vmatpush1.xpose.msra.mxu0 0.0
      %2075 = vmatprep.subr.mxu0 0.0
      %2076 = vmatpush1.xpose.msra.mxu0 0.0
      %2077 = vmatprep.subr.mxu0 0.0
      %2078 = vmatpush1.xpose.msra.mxu0 0.0
      %2079 = vmatprep.subr.mxu0 0.0
      %2080 = vmatpush1.xpose.msra.mxu0 0.0
      %2081 = vmatprep.subr.mxu0 0.0
      %2082 = vmatpush1.xpose.msra.mxu0 0.0
      %2083 = vmatprep.subr.mxu0 0.0
      %2084 = vmatpush1.xpose.msra.mxu0 %v2053
      %2085 = vmatprep.subr.mxu0 0.0
      %2086 = vmatpush1.xpose.msra.mxu0 %v2051
      %2087 = vmatprep.subr.mxu0 0.0
      %2088 = vmatpush2.xpose.msra.mxu0 0.0
      %2089 = vmatprep.subr.mxu0 0.0
      %2090 = vmatpush2.xpose.msra.mxu0 0.0
      %2091 = vmatprep.subr.mxu0 0.0
      %2092 = vmatpush2.xpose.msra.mxu0 0.0
      %2093 = vmatprep.subr.mxu0 0.0
      %2094 = vmatpush2.xpose.msra.mxu0 0.0
      %2095 = vmatprep.subr.mxu0 0.0
      %2096 = vmatpush2.xpose.msra.mxu0 0.0
      %2097 = vmatprep.subr.mxu0 0.0
      %2098 = vmatpush2.xpose.msra.mxu0 0.0
      %2099 = vmatprep.subr.mxu0 0.0
      %2100 = vmatpush2.xpose.msra.mxu0 0.0
      %2101 = vmatprep.subr.mxu0 0.0
      %2102 = vmatpush2.xpose.msra.mxu0 0.0
      %2103 = vmatprep.subr.mxu0 0.0
      %2104 = vmatpush2.xpose.msra.mxu0 0.0
      %2105 = vmatprep.subr.mxu0 0.0
      %2106 = vmatpush2.xpose.msra.mxu0 0.0
      %2107 = vmatprep.subr.mxu0 0.0
      %2108 = vmatpush2.xpose.msra.mxu0 0.0
      %2109 = vmatprep.subr.mxu0 0.0
      %2110 = vmatpush2.xpose.msra.mxu0 0.0
      %2111 = vmatprep.subr.mxu0 0.0
      %2112 = vmatpush2.xpose.msra.mxu0 0.0
      %2113 = vmatprep.subr.mxu0 0.0
      %2114 = vmatpush2.xpose.msra.mxu0 0.0
      %2115 = vmatprep.subr.mxu0 0.0
      %2116 = vmatpush2.xpose.msra.mxu0 0.0
      %2117 = vmatprep.subr.mxu0 0.0
      %2118 = vmatpush2.xpose.msra.mxu0 0.0
      %2119 = vmatprep.mubr.f32.mxu0 0.0
      %2120 = vmatmul.mubr.f32.gmra.mxu0 %v2047
      %v2121 = vpop.f32.mrf.mxu0
      %v2122 = vadd.f32 %v1516, %v2121
      %v2123 = vpop.f32.mrf.mxu0
      %2124 = vmatprep.mubr.f32.mxu0 0.0
      %2125 = vmatmul.mubr.f32.gmra.mxu0 %v2049
      %v2126 = vpop.f32.mrf.mxu0
      %v2127 = vadd.f32 %v1517, %v2126
      %v2128 = vpop.f32.mrf.mxu0
      %2129 = vdwg.mxu0
      %v2130 = vsel %vm1930, %v2122, -inf
      %2131 = vmax.xlane.f32.xlu0 %v2130
      %v2132 = vpop.xlane.xlu0 %2131
      %v2133 = vsel %vm1934, %v2127, -inf
      %2134 = vmax.xlane.f32.xlu0 %v2133
      %v2135 = vpop.xlane.xlu0 %2134
      %v2136 = vsub.f32 %v2122, %v2132
      %v2137 = vsub.f32 %v2127, %v2135
      %v2138 = vmul.f32 %v2136, 1.442695
      %v2139 = vpow.pop %v2138
      %v2140 = vmul.f32 %v2137, 1.442695
      %v2141 = vpow.pop %v2140
      %v2142 = vsel %vm1930, %v2139, 0.0
      %2143 = vadd.xlane.f32.xlu0 %v2142
      %v2144 = vpop.xlane.xlu0 %2143
      %v2145 = vsel %vm1934, %v2141, 0.0
      %2146 = vadd.xlane.f32.xlu0 %v2145
      %v2147 = vpop.xlane.xlu0 %2146
      %v2148 = vrcp.pop %v2144
      %v2149 = vmul.f32 %v2139, %v2148
      %v2150 = vrcp.pop %v2147
      %v2151 = vmul.f32 %v2141, %v2150
      %2153 = vrot.lane.b32.xlu0 %v1818, 96
      %v2154 = vpop.permute.xlu0 %2153
      %2155 = vrot.lane.b32.xlu0 %v1821, 96
      %v2156 = vpop.permute.xlu0 %2155
      %v2159 = vsel %vm1930, %v2149, 0
      %v2162 = vsel %vm1930, %v2151, 0
      %v2164 = vsel %vm1522, %v2156, 0
      %2166 = vmatprep.subr.mxu0 0.0
      %2167 = vmatpush1.msra.mxu0 0.0
      %2168 = vmatprep.subr.mxu0 0.0
      %2169 = vmatpush1.msra.mxu0 0.0
      %2170 = vmatprep.subr.mxu0 0.0
      %2171 = vmatpush1.msra.mxu0 0.0
      %2172 = vmatprep.subr.mxu0 0.0
      %2173 = vmatpush1.msra.mxu0 0.0
      %2174 = vmatprep.subr.mxu0 0.0
      %2175 = vmatpush1.msra.mxu0 0.0
      %2176 = vmatprep.subr.mxu0 0.0
      %2177 = vmatpush1.msra.mxu0 0.0
      %2178 = vmatprep.subr.mxu0 0.0
      %2179 = vmatpush1.msra.mxu0 0.0
      %2180 = vmatprep.subr.mxu0 0.0
      %2181 = vmatpush1.msra.mxu0 0.0
      %2182 = vmatprep.subr.mxu0 0.0
      %2183 = vmatpush1.msra.mxu0 0.0
      %2184 = vmatprep.subr.mxu0 0.0
      %2185 = vmatpush1.msra.mxu0 0.0
      %2186 = vmatprep.subr.mxu0 0.0
      %2187 = vmatpush1.msra.mxu0 0.0
      %2188 = vmatprep.subr.mxu0 0.0
      %2189 = vmatpush1.msra.mxu0 0.0
      %2190 = vmatprep.subr.mxu0 0.0
      %2191 = vmatpush1.msra.mxu0 0.0
      %2192 = vmatprep.subr.mxu0 0.0
      %2193 = vmatpush1.msra.mxu0 0.0
      %2194 = vmatprep.subr.mxu0 0.0
      %2195 = vmatpush1.msra.mxu0 %v2164
      %2196 = vmatprep.subr.mxu0 0.0
      %2197 = vmatpush1.msra.mxu0 %v2154
      %2198 = vmatprep.subr.mxu0 0.0
      %2199 = vmatpush2.msra.mxu0 0.0
      %2200 = vmatprep.subr.mxu0 0.0
      %2201 = vmatpush2.msra.mxu0 0.0
      %2202 = vmatprep.subr.mxu0 0.0
      %2203 = vmatpush2.msra.mxu0 0.0
      %2204 = vmatprep.subr.mxu0 0.0
      %2205 = vmatpush2.msra.mxu0 0.0
      %2206 = vmatprep.subr.mxu0 0.0
      %2207 = vmatpush2.msra.mxu0 0.0
      %2208 = vmatprep.subr.mxu0 0.0
      %2209 = vmatpush2.msra.mxu0 0.0
      %2210 = vmatprep.subr.mxu0 0.0
      %2211 = vmatpush2.msra.mxu0 0.0
      %2212 = vmatprep.subr.mxu0 0.0
      %2213 = vmatpush2.msra.mxu0 0.0
      %2214 = vmatprep.subr.mxu0 0.0
      %2215 = vmatpush2.msra.mxu0 0.0
      %2216 = vmatprep.subr.mxu0 0.0
      %2217 = vmatpush2.msra.mxu0 0.0
      %2218 = vmatprep.subr.mxu0 0.0
      %2219 = vmatpush2.msra.mxu0 0.0
      %2220 = vmatprep.subr.mxu0 0.0
      %2221 = vmatpush2.msra.mxu0 0.0
      %2222 = vmatprep.subr.mxu0 0.0
      %2223 = vmatpush2.msra.mxu0 0.0
      %2224 = vmatprep.subr.mxu0 0.0
      %2225 = vmatpush2.msra.mxu0 0.0
      %2226 = vmatprep.subr.mxu0 0.0
      %2227 = vmatpush2.msra.mxu0 0.0
      %2228 = vmatprep.subr.mxu0 0.0
      %2229 = vmatpush2.msra.mxu0 0.0
      %2230 = vmatprep.mubr.f32.mxu0 0.0
      %2231 = vmatmul.mubr.f32.gmra.mxu0 %v2159
      %v2232 = vpop.f32.mrf.mxu0
      %v2233 = vadd.f32 0.0, %v2232
      %v2234 = vpop.f32.mrf.mxu0
      %2235 = vmatprep.mubr.f32.mxu0 0.0
      %2236 = vmatmul.mubr.f32.gmra.mxu0 %v2162
      %v2237 = vpop.f32.mrf.mxu0
      %v2238 = vadd.f32 0.0, %v2237
      %v2239 = vpop.f32.mrf.mxu0
      %2240 = vdwg.mxu0
      %v2241 = vpack.c.bf16 %v2238, %v2233
      %v2246 = vunpack.c.l.b16 %v1828
      %v2247 = vunpack.c.l.b16 %v1829
      %v2248 = vunpack.c.l.b16 %v1830
      %v2249 = vunpack.c.l.b16 %v1831
      %v2250 = vpack.c.b16 %v2247, %v2246
      %v2251 = vpack.c.b16 %v2249, %v2248
      %v2255 = vsel %vm1842, %v2241, 0
      %2257 = vmatprep.subr.bf16.mxu0 0
      %2258 = vmatpush1.bf16.msra.mxu0 0
      %2259 = vmatprep.subr.bf16.mxu0 0
      %2260 = vmatpush1.bf16.msra.mxu0 0
      %2261 = vmatprep.subr.bf16.mxu0 0
      %2262 = vmatpush1.bf16.msra.mxu0 0
      %2263 = vmatprep.subr.bf16.mxu0 0
      %2264 = vmatpush1.bf16.msra.mxu0 0
      %2265 = vmatprep.subr.bf16.mxu0 0
      %2266 = vmatpush1.bf16.msra.mxu0 0
      %2267 = vmatprep.subr.bf16.mxu0 0
      %2268 = vmatpush1.bf16.msra.mxu0 0
      %2269 = vmatprep.subr.bf16.mxu0 0
      %2270 = vmatpush1.bf16.msra.mxu0 %v2251
      %2271 = vmatprep.subr.bf16.mxu0 0
      %2272 = vmatpush1.bf16.msra.mxu0 %v2250
      %2273 = vmatprep.subr.bf16.mxu0 0
      %2274 = vmatpush2.bf16.msra.mxu0 0
      %2275 = vmatprep.subr.bf16.mxu0 0
      %2276 = vmatpush2.bf16.msra.mxu0 0
      %2277 = vmatprep.subr.bf16.mxu0 0
      %2278 = vmatpush2.bf16.msra.mxu0 0
      %2279 = vmatprep.subr.bf16.mxu0 0
      %2280 = vmatpush2.bf16.msra.mxu0 0
      %2281 = vmatprep.subr.bf16.mxu0 0
      %2282 = vmatpush2.bf16.msra.mxu0 0
      %2283 = vmatprep.subr.bf16.mxu0 0
      %2284 = vmatpush2.bf16.msra.mxu0 0
      %2285 = vmatprep.subr.bf16.mxu0 0
      %2286 = vmatpush2.bf16.msra.mxu0 0
      %2287 = vmatprep.subr.bf16.mxu0 0
      %2288 = vmatpush2.bf16.msra.mxu0 0
      %2289 = vmatprep.mubr.bf16.mxu0 0
      %2290 = vmatmul.mubr.bf16.gmra.mxu0 %v2255
      %v2291 = vpop.f32.mrf.mxu0
      %v2292 = vadd.f32 0.0, %v2291
      %v2293 = vpop.f32.mrf.mxu0
      %v2294 = vpop.f32.mrf.mxu0
      %v2295 = vadd.f32 0.0, %v2294
      %v2296 = vpop.f32.mrf.mxu0
      %2297 = vdwg.mxu0
      %v2302 = vunpack.c.l.b16 %v1824
      %v2303 = vunpack.c.l.b16 %v1825
      %v2304 = vunpack.c.l.b16 %v1826
      %v2305 = vunpack.c.l.b16 %v1827
      %v2306 = vpack.c.b16 %v2303, %v2302
      %v2307 = vpack.c.b16 %v2305, %v2304
      %v2311 = vsel %vm1842, %v2038, 0
      %2313 = vmatprep.subr.bf16.mxu0 0
      %2314 = vmatpush1.bf16.msra.mxu0 0
      %2315 = vmatprep.subr.bf16.mxu0 0
      %2316 = vmatpush1.bf16.msra.mxu0 0
      %2317 = vmatprep.subr.bf16.mxu0 0
      %2318 = vmatpush1.bf16.msra.mxu0 0
      %2319 = vmatprep.subr.bf16.mxu0 0
      %2320 = vmatpush1.bf16.msra.mxu0 0
      %2321 = vmatprep.subr.bf16.mxu0 0
      %2322 = vmatpush1.bf16.msra.mxu0 0
      %2323 = vmatprep.subr.bf16.mxu0 0
      %2324 = vmatpush1.bf16.msra.mxu0 0
      %2325 = vmatprep.subr.bf16.mxu0 0
      %2326 = vmatpush1.bf16.msra.mxu0 %v2307
      %2327 = vmatprep.subr.bf16.mxu0 0
      %2328 = vmatpush1.bf16.msra.mxu0 %v2306
      %2329 = vmatprep.subr.bf16.mxu0 0
      %2330 = vmatpush2.bf16.msra.mxu0 0
      %2331 = vmatprep.subr.bf16.mxu0 0
      %2332 = vmatpush2.bf16.msra.mxu0 0
      %2333 = vmatprep.subr.bf16.mxu0 0
      %2334 = vmatpush2.bf16.msra.mxu0 0
      %2335 = vmatprep.subr.bf16.mxu0 0
      %2336 = vmatpush2.bf16.msra.mxu0 0
      %2337 = vmatprep.subr.bf16.mxu0 0
      %2338 = vmatpush2.bf16.msra.mxu0 0
      %2339 = vmatprep.subr.bf16.mxu0 0
      %2340 = vmatpush2.bf16.msra.mxu0 0
      %2341 = vmatprep.subr.bf16.mxu0 0
      %2342 = vmatpush2.bf16.msra.mxu0 0
      %2343 = vmatprep.subr.bf16.mxu0 0
      %2344 = vmatpush2.bf16.msra.mxu0 0
      %2345 = vmatprep.mubr.bf16.mxu0 0
      %2346 = vmatmul.mubr.bf16.gmra.mxu0 %v2311
      %v2347 = vpop.f32.mrf.mxu0
      %v2348 = vadd.f32 %v2292, %v2347
      %v2349 = vpop.f32.mrf.mxu0
      %v2350 = vpop.f32.mrf.mxu0
      %v2351 = vadd.f32 %v2295, %v2350
      %v2352 = vpop.f32.mrf.mxu0
      %2353 = vdwg.mxu0
      %2354 = vrot.lane.b32.xlu0 %v1840, 64
      %v2355 = vpop.permute.xlu0 %2354
      %2356 = vrot.lane.b32.xlu0 %v1841, 64
      %v2357 = vpop.permute.xlu0 %2356
      %2358 = vrot.lane.b32.xlu0 %v1777, 64
      %v2359 = vpop.permute.xlu0 %2358
      %2360 = vrot.lane.b32.xlu0 %v1781, 64
      %v2361 = vpop.permute.xlu0 %2360
      %v2362 = vsel %vm1842, %v2355, 0
      %v2364 = vsel %vm1842, %v2357, 0
      %v2366 = vsel %vm1842, %v2359, 0
      %v2368 = vsel %vm1842, %v2361, 0
      %2370 = vmatprep.subr.mxu0 0.0
      %2371 = vmatpush1.xpose.msra.mxu0 0.0
      %2372 = vmatprep.subr.mxu0 0.0
      %2373 = vmatpush1.xpose.msra.mxu0 0.0
      %2374 = vmatprep.subr.mxu0 0.0
      %2375 = vmatpush1.xpose.msra.mxu0 0.0
      %2376 = vmatprep.subr.mxu0 0.0
      %2377 = vmatpush1.xpose.msra.mxu0 0.0
      %2378 = vmatprep.subr.mxu0 0.0
      %2379 = vmatpush1.xpose.msra.mxu0 0.0
      %2380 = vmatprep.subr.mxu0 0.0
      %2381 = vmatpush1.xpose.msra.mxu0 0.0
      %2382 = vmatprep.subr.mxu0 0.0
      %2383 = vmatpush1.xpose.msra.mxu0 0.0
      %2384 = vmatprep.subr.mxu0 0.0
      %2385 = vmatpush1.xpose.msra.mxu0 0.0
      %2386 = vmatprep.subr.mxu0 0.0
      %2387 = vmatpush1.xpose.msra.mxu0 0.0
      %2388 = vmatprep.subr.mxu0 0.0
      %2389 = vmatpush1.xpose.msra.mxu0 0.0
      %2390 = vmatprep.subr.mxu0 0.0
      %2391 = vmatpush1.xpose.msra.mxu0 0.0
      %2392 = vmatprep.subr.mxu0 0.0
      %2393 = vmatpush1.xpose.msra.mxu0 0.0
      %2394 = vmatprep.subr.mxu0 0.0
      %2395 = vmatpush1.xpose.msra.mxu0 0.0
      %2396 = vmatprep.subr.mxu0 0.0
      %2397 = vmatpush1.xpose.msra.mxu0 0.0
      %2398 = vmatprep.subr.mxu0 0.0
      %2399 = vmatpush1.xpose.msra.mxu0 %v2368
      %2400 = vmatprep.subr.mxu0 0.0
      %2401 = vmatpush1.xpose.msra.mxu0 %v2366
      %2402 = vmatprep.subr.mxu0 0.0
      %2403 = vmatpush2.xpose.msra.mxu0 0.0
      %2404 = vmatprep.subr.mxu0 0.0
      %2405 = vmatpush2.xpose.msra.mxu0 0.0
      %2406 = vmatprep.subr.mxu0 0.0
      %2407 = vmatpush2.xpose.msra.mxu0 0.0
      %2408 = vmatprep.subr.mxu0 0.0
      %2409 = vmatpush2.xpose.msra.mxu0 0.0
      %2410 = vmatprep.subr.mxu0 0.0
      %2411 = vmatpush2.xpose.msra.mxu0 0.0
      %2412 = vmatprep.subr.mxu0 0.0
      %2413 = vmatpush2.xpose.msra.mxu0 0.0
      %2414 = vmatprep.subr.mxu0 0.0
      %2415 = vmatpush2.xpose.msra.mxu0 0.0
      %2416 = vmatprep.subr.mxu0 0.0
      %2417 = vmatpush2.xpose.msra.mxu0 0.0
      %2418 = vmatprep.subr.mxu0 0.0
      %2419 = vmatpush2.xpose.msra.mxu0 0.0
      %2420 = vmatprep.subr.mxu0 0.0
      %2421 = vmatpush2.xpose.msra.mxu0 0.0
      %2422 = vmatprep.subr.mxu0 0.0
      %2423 = vmatpush2.xpose.msra.mxu0 0.0
      %2424 = vmatprep.subr.mxu0 0.0
      %2425 = vmatpush2.xpose.msra.mxu0 0.0
      %2426 = vmatprep.subr.mxu0 0.0
      %2427 = vmatpush2.xpose.msra.mxu0 0.0
      %2428 = vmatprep.subr.mxu0 0.0
      %2429 = vmatpush2.xpose.msra.mxu0 0.0
      %2430 = vmatprep.subr.mxu0 0.0
      %2431 = vmatpush2.xpose.msra.mxu0 0.0
      %2432 = vmatprep.subr.mxu0 0.0
      %2433 = vmatpush2.xpose.msra.mxu0 0.0
      %2434 = vmatprep.mubr.f32.mxu0 0.0
      %2435 = vmatmul.mubr.f32.gmra.mxu0 %v2362
      %v2436 = vpop.f32.mrf.mxu0
      %v2437 = vadd.f32 %v1516, %v2436
      %v2438 = vpop.f32.mrf.mxu0
      %2439 = vmatprep.mubr.f32.mxu0 0.0
      %2440 = vmatmul.mubr.f32.gmra.mxu0 %v2364
      %v2441 = vpop.f32.mrf.mxu0
      %v2442 = vadd.f32 %v1517, %v2441
      %v2443 = vpop.f32.mrf.mxu0
      %2444 = vdwg.mxu0
      %v2445 = vsel %vm1930, %v2437, -inf
      %2446 = vmax.xlane.f32.xlu0 %v2445
      %v2447 = vpop.xlane.xlu0 %2446
      %v2448 = vsel %vm1934, %v2442, -inf
      %2449 = vmax.xlane.f32.xlu0 %v2448
      %v2450 = vpop.xlane.xlu0 %2449
      %v2451 = vsub.f32 %v2437, %v2447
      %v2452 = vsub.f32 %v2442, %v2450
      %v2453 = vmul.f32 %v2451, 1.442695
      %v2454 = vpow.pop %v2453
      %v2455 = vmul.f32 %v2452, 1.442695
      %v2456 = vpow.pop %v2455
      %v2457 = vsel %vm1930, %v2454, 0.0
      %2458 = vadd.xlane.f32.xlu0 %v2457
      %v2459 = vpop.xlane.xlu0 %2458
      %v2460 = vsel %vm1934, %v2456, 0.0
      %2461 = vadd.xlane.f32.xlu0 %v2460
      %v2462 = vpop.xlane.xlu0 %2461
      %v2463 = vrcp.pop %v2459
      %v2464 = vmul.f32 %v2454, %v2463
      %v2465 = vrcp.pop %v2462
      %v2466 = vmul.f32 %v2456, %v2465
      %2467 = vrot.lane.b32.xlu0 %v1818, 64
      %v2468 = vpop.permute.xlu0 %2467
      %2469 = vrot.lane.b32.xlu0 %v1821, 64
      %v2470 = vpop.permute.xlu0 %2469
      %v2473 = vsel %vm1930, %v2464, 0
      %v2476 = vsel %vm1930, %v2466, 0
      %v2478 = vsel %vm1522, %v2470, 0
      %2480 = vmatprep.subr.mxu0 0.0
      %2481 = vmatpush1.msra.mxu0 0.0
      %2482 = vmatprep.subr.mxu0 0.0
      %2483 = vmatpush1.msra.mxu0 0.0
      %2484 = vmatprep.subr.mxu0 0.0
      %2485 = vmatpush1.msra.mxu0 0.0
      %2486 = vmatprep.subr.mxu0 0.0
      %2487 = vmatpush1.msra.mxu0 0.0
      %2488 = vmatprep.subr.mxu0 0.0
      %2489 = vmatpush1.msra.mxu0 0.0
      %2490 = vmatprep.subr.mxu0 0.0
      %2491 = vmatpush1.msra.mxu0 0.0
      %2492 = vmatprep.subr.mxu0 0.0
      %2493 = vmatpush1.msra.mxu0 0.0
      %2494 = vmatprep.subr.mxu0 0.0
      %2495 = vmatpush1.msra.mxu0 0.0
      %2496 = vmatprep.subr.mxu0 0.0
      %2497 = vmatpush1.msra.mxu0 0.0
      %2498 = vmatprep.subr.mxu0 0.0
      %2499 = vmatpush1.msra.mxu0 0.0
      %2500 = vmatprep.subr.mxu0 0.0
      %2501 = vmatpush1.msra.mxu0 0.0
      %2502 = vmatprep.subr.mxu0 0.0
      %2503 = vmatpush1.msra.mxu0 0.0
      %2504 = vmatprep.subr.mxu0 0.0
      %2505 = vmatpush1.msra.mxu0 0.0
      %2506 = vmatprep.subr.mxu0 0.0
      %2507 = vmatpush1.msra.mxu0 0.0
      %2508 = vmatprep.subr.mxu0 0.0
      %2509 = vmatpush1.msra.mxu0 %v2478
      %2510 = vmatprep.subr.mxu0 0.0
      %2511 = vmatpush1.msra.mxu0 %v2468
      %2512 = vmatprep.subr.mxu0 0.0
      %2513 = vmatpush2.msra.mxu0 0.0
      %2514 = vmatprep.subr.mxu0 0.0
      %2515 = vmatpush2.msra.mxu0 0.0
      %2516 = vmatprep.subr.mxu0 0.0
      %2517 = vmatpush2.msra.mxu0 0.0
      %2518 = vmatprep.subr.mxu0 0.0
      %2519 = vmatpush2.msra.mxu0 0.0
      %2520 = vmatprep.subr.mxu0 0.0
      %2521 = vmatpush2.msra.mxu0 0.0
      %2522 = vmatprep.subr.mxu0 0.0
      %2523 = vmatpush2.msra.mxu0 0.0
      %2524 = vmatprep.subr.mxu0 0.0
      %2525 = vmatpush2.msra.mxu0 0.0
      %2526 = vmatprep.subr.mxu0 0.0
      %2527 = vmatpush2.msra.mxu0 0.0
      %2528 = vmatprep.subr.mxu0 0.0
      %2529 = vmatpush2.msra.mxu0 0.0
      %2530 = vmatprep.subr.mxu0 0.0
      %2531 = vmatpush2.msra.mxu0 0.0
      %2532 = vmatprep.subr.mxu0 0.0
      %2533 = vmatpush2.msra.mxu0 0.0
      %2534 = vmatprep.subr.mxu0 0.0
      %2535 = vmatpush2.msra.mxu0 0.0
      %2536 = vmatprep.subr.mxu0 0.0
      %2537 = vmatpush2.msra.mxu0 0.0
      %2538 = vmatprep.subr.mxu0 0.0
      %2539 = vmatpush2.msra.mxu0 0.0
      %2540 = vmatprep.subr.mxu0 0.0
      %2541 = vmatpush2.msra.mxu0 0.0
      %2542 = vmatprep.subr.mxu0 0.0
      %2543 = vmatpush2.msra.mxu0 0.0
      %2544 = vmatprep.mubr.f32.mxu0 0.0
      %2545 = vmatmul.mubr.f32.gmra.mxu0 %v2473
      %v2546 = vpop.f32.mrf.mxu0
      %v2547 = vadd.f32 0.0, %v2546
      %v2548 = vpop.f32.mrf.mxu0
      %2549 = vmatprep.mubr.f32.mxu0 0.0
      %2550 = vmatmul.mubr.f32.gmra.mxu0 %v2476
      %v2551 = vpop.f32.mrf.mxu0
      %v2552 = vadd.f32 0.0, %v2551
      %v2553 = vpop.f32.mrf.mxu0
      %2554 = vdwg.mxu0
      %v2555 = vpack.c.bf16 %v2552, %v2547
      %v2560 = vunpack.c.l.b16 %v1832
      %v2561 = vunpack.c.l.b16 %v1833
      %v2562 = vunpack.c.l.b16 %v1834
      %v2563 = vunpack.c.l.b16 %v1835
      %v2564 = vpack.c.b16 %v2561, %v2560
      %v2565 = vpack.c.b16 %v2563, %v2562
      %v2569 = vsel %vm1842, %v2555, 0
      %2571 = vmatprep.subr.bf16.mxu0 0
      %2572 = vmatpush1.bf16.msra.mxu0 0
      %2573 = vmatprep.subr.bf16.mxu0 0
      %2574 = vmatpush1.bf16.msra.mxu0 0
      %2575 = vmatprep.subr.bf16.mxu0 0
      %2576 = vmatpush1.bf16.msra.mxu0 0
      %2577 = vmatprep.subr.bf16.mxu0 0
      %2578 = vmatpush1.bf16.msra.mxu0 0
      %2579 = vmatprep.subr.bf16.mxu0 0
      %2580 = vmatpush1.bf16.msra.mxu0 0
      %2581 = vmatprep.subr.bf16.mxu0 0
      %2582 = vmatpush1.bf16.msra.mxu0 0
      %2583 = vmatprep.subr.bf16.mxu0 0
      %2584 = vmatpush1.bf16.msra.mxu0 %v2565
      %2585 = vmatprep.subr.bf16.mxu0 0
      %2586 = vmatpush1.bf16.msra.mxu0 %v2564
      %2587 = vmatprep.subr.bf16.mxu0 0
      %2588 = vmatpush2.bf16.msra.mxu0 0
      %2589 = vmatprep.subr.bf16.mxu0 0
      %2590 = vmatpush2.bf16.msra.mxu0 0
      %2591 = vmatprep.subr.bf16.mxu0 0
      %2592 = vmatpush2.bf16.msra.mxu0 0
      %2593 = vmatprep.subr.bf16.mxu0 0
      %2594 = vmatpush2.bf16.msra.mxu0 0
      %2595 = vmatprep.subr.bf16.mxu0 0
      %2596 = vmatpush2.bf16.msra.mxu0 0
      %2597 = vmatprep.subr.bf16.mxu0 0
      %2598 = vmatpush2.bf16.msra.mxu0 0
      %2599 = vmatprep.subr.bf16.mxu0 0
      %2600 = vmatpush2.bf16.msra.mxu0 0
      %2601 = vmatprep.subr.bf16.mxu0 0
      %2602 = vmatpush2.bf16.msra.mxu0 0
      %2603 = vmatprep.mubr.bf16.mxu0 0
      %2604 = vmatmul.mubr.bf16.gmra.mxu0 %v2569
      %v2605 = vpop.f32.mrf.mxu0
      %v2606 = vadd.f32 0.0, %v2605
      %v2607 = vpop.f32.mrf.mxu0
      %v2608 = vpop.f32.mrf.mxu0
      %v2609 = vadd.f32 0.0, %v2608
      %v2610 = vpop.f32.mrf.mxu0
      %2611 = vdwg.mxu0
      %v2612 = vadd.f32 %v2348, %v2606
      %v2613 = vadd.f32 %v2351, %v2609
      %2614 = vrot.lane.b32.xlu0 %v1840, 32
      %v2615 = vpop.permute.xlu0 %2614
      %2616 = vrot.lane.b32.xlu0 %v1841, 32
      %v2617 = vpop.permute.xlu0 %2616
      %2618 = vrot.lane.b32.xlu0 %v1777, 32
      %v2619 = vpop.permute.xlu0 %2618
      %2620 = vrot.lane.b32.xlu0 %v1781, 32
      %v2621 = vpop.permute.xlu0 %2620
      %v2622 = vsel %vm1842, %v2615, 0
      %v2624 = vsel %vm1842, %v2617, 0
      %v2626 = vsel %vm1842, %v2619, 0
      %v2628 = vsel %vm1842, %v2621, 0
      %2630 = vmatprep.subr.mxu0 0.0
      %2631 = vmatpush1.xpose.msra.mxu0 0.0
      %2632 = vmatprep.subr.mxu0 0.0
      %2633 = vmatpush1.xpose.msra.mxu0 0.0
      %2634 = vmatprep.subr.mxu0 0.0
      %2635 = vmatpush1.xpose.msra.mxu0 0.0
      %2636 = vmatprep.subr.mxu0 0.0
      %2637 = vmatpush1.xpose.msra.mxu0 0.0
      %2638 = vmatprep.subr.mxu0 0.0
      %2639 = vmatpush1.xpose.msra.mxu0 0.0
      %2640 = vmatprep.subr.mxu0 0.0
      %2641 = vmatpush1.xpose.msra.mxu0 0.0
      %2642 = vmatprep.subr.mxu0 0.0
      %2643 = vmatpush1.xpose.msra.mxu0 0.0
      %2644 = vmatprep.subr.mxu0 0.0
      %2645 = vmatpush1.xpose.msra.mxu0 0.0
      %2646 = vmatprep.subr.mxu0 0.0
      %2647 = vmatpush1.xpose.msra.mxu0 0.0
      %2648 = vmatprep.subr.mxu0 0.0
      %2649 = vmatpush1.xpose.msra.mxu0 0.0
      %2650 = vmatprep.subr.mxu0 0.0
      %2651 = vmatpush1.xpose.msra.mxu0 0.0
      %2652 = vmatprep.subr.mxu0 0.0
      %2653 = vmatpush1.xpose.msra.mxu0 0.0
      %2654 = vmatprep.subr.mxu0 0.0
      %2655 = vmatpush1.xpose.msra.mxu0 0.0
      %2656 = vmatprep.subr.mxu0 0.0
      %2657 = vmatpush1.xpose.msra.mxu0 0.0
      %2658 = vmatprep.subr.mxu0 0.0
      %2659 = vmatpush1.xpose.msra.mxu0 %v2628
      %2660 = vmatprep.subr.mxu0 0.0
      %2661 = vmatpush1.xpose.msra.mxu0 %v2626
      %2662 = vmatprep.subr.mxu0 0.0
      %2663 = vmatpush2.xpose.msra.mxu0 0.0
      %2664 = vmatprep.subr.mxu0 0.0
      %2665 = vmatpush2.xpose.msra.mxu0 0.0
      %2666 = vmatprep.subr.mxu0 0.0
      %2667 = vmatpush2.xpose.msra.mxu0 0.0
      %2668 = vmatprep.subr.mxu0 0.0
      %2669 = vmatpush2.xpose.msra.mxu0 0.0
      %2670 = vmatprep.subr.mxu0 0.0
      %2671 = vmatpush2.xpose.msra.mxu0 0.0
      %2672 = vmatprep.subr.mxu0 0.0
      %2673 = vmatpush2.xpose.msra.mxu0 0.0
      %2674 = vmatprep.subr.mxu0 0.0
      %2675 = vmatpush2.xpose.msra.mxu0 0.0
      %2676 = vmatprep.subr.mxu0 0.0
      %2677 = vmatpush2.xpose.msra.mxu0 0.0
      %2678 = vmatprep.subr.mxu0 0.0
      %2679 = vmatpush2.xpose.msra.mxu0 0.0
      %2680 = vmatprep.subr.mxu0 0.0
      %2681 = vmatpush2.xpose.msra.mxu0 0.0
      %2682 = vmatprep.subr.mxu0 0.0
      %2683 = vmatpush2.xpose.msra.mxu0 0.0
      %2684 = vmatprep.subr.mxu0 0.0
      %2685 = vmatpush2.xpose.msra.mxu0 0.0
      %2686 = vmatprep.subr.mxu0 0.0
      %2687 = vmatpush2.xpose.msra.mxu0 0.0
      %2688 = vmatprep.subr.mxu0 0.0
      %2689 = vmatpush2.xpose.msra.mxu0 0.0
      %2690 = vmatprep.subr.mxu0 0.0
      %2691 = vmatpush2.xpose.msra.mxu0 0.0
      %2692 = vmatprep.subr.mxu0 0.0
      %2693 = vmatpush2.xpose.msra.mxu0 0.0
      %2694 = vmatprep.mubr.f32.mxu0 0.0
      %2695 = vmatmul.mubr.f32.gmra.mxu0 %v2622
      %v2696 = vpop.f32.mrf.mxu0
      %v2697 = vadd.f32 %v1516, %v2696
      %v2698 = vpop.f32.mrf.mxu0
      %2699 = vmatprep.mubr.f32.mxu0 0.0
      %2700 = vmatmul.mubr.f32.gmra.mxu0 %v2624
      %v2701 = vpop.f32.mrf.mxu0
      %v2702 = vadd.f32 %v1517, %v2701
      %v2703 = vpop.f32.mrf.mxu0
      %2704 = vdwg.mxu0
      %v2705 = vsel %vm1930, %v2697, -inf
      %2706 = vmax.xlane.f32.xlu0 %v2705
      %v2707 = vpop.xlane.xlu0 %2706
      %v2708 = vsel %vm1934, %v2702, -inf
      %2709 = vmax.xlane.f32.xlu0 %v2708
      %v2710 = vpop.xlane.xlu0 %2709
      %v2711 = vsub.f32 %v2697, %v2707
      %v2712 = vsub.f32 %v2702, %v2710
      %v2713 = vmul.f32 %v2711, 1.442695
      %v2714 = vpow.pop %v2713
      %v2715 = vmul.f32 %v2712, 1.442695
      %v2716 = vpow.pop %v2715
      %v2717 = vsel %vm1930, %v2714, 0.0
      %2718 = vadd.xlane.f32.xlu0 %v2717
      %v2719 = vpop.xlane.xlu0 %2718
      %v2720 = vsel %vm1934, %v2716, 0.0
      %2721 = vadd.xlane.f32.xlu0 %v2720
      %v2722 = vpop.xlane.xlu0 %2721
      %v2723 = vrcp.pop %v2719
      %v2724 = vmul.f32 %v2714, %v2723
      %v2725 = vrcp.pop %v2722
      %v2726 = vmul.f32 %v2716, %v2725
      %2727 = vrot.lane.b32.xlu0 %v1818, 32
      %v2728 = vpop.permute.xlu0 %2727
      %2729 = vrot.lane.b32.xlu0 %v1821, 32
      %v2730 = vpop.permute.xlu0 %2729
      %v2733 = vsel %vm1930, %v2724, 0
      %v2736 = vsel %vm1930, %v2726, 0
      %v2738 = vsel %vm1522, %v2730, 0
      %2740 = vmatprep.subr.mxu0 0.0
      %2741 = vmatpush1.msra.mxu0 0.0
      %2742 = vmatprep.subr.mxu0 0.0
      %2743 = vmatpush1.msra.mxu0 0.0
      %2744 = vmatprep.subr.mxu0 0.0
      %2745 = vmatpush1.msra.mxu0 0.0
      %2746 = vmatprep.subr.mxu0 0.0
      %2747 = vmatpush1.msra.mxu0 0.0
      %2748 = vmatprep.subr.mxu0 0.0
      %2749 = vmatpush1.msra.mxu0 0.0
      %2750 = vmatprep.subr.mxu0 0.0
      %2751 = vmatpush1.msra.mxu0 0.0
      %2752 = vmatprep.subr.mxu0 0.0
      %2753 = vmatpush1.msra.mxu0 0.0
      %2754 = vmatprep.subr.mxu0 0.0
      %2755 = vmatpush1.msra.mxu0 0.0
      %2756 = vmatprep.subr.mxu0 0.0
      %2757 = vmatpush1.msra.mxu0 0.0
      %2758 = vmatprep.subr.mxu0 0.0
      %2759 = vmatpush1.msra.mxu0 0.0
      %2760 = vmatprep.subr.mxu0 0.0
      %2761 = vmatpush1.msra.mxu0 0.0
      %2762 = vmatprep.subr.mxu0 0.0
      %2763 = vmatpush1.msra.mxu0 0.0
      %2764 = vmatprep.subr.mxu0 0.0
      %2765 = vmatpush1.msra.mxu0 0.0
      %2766 = vmatprep.subr.mxu0 0.0
      %2767 = vmatpush1.msra.mxu0 0.0
      %2768 = vmatprep.subr.mxu0 0.0
      %2769 = vmatpush1.msra.mxu0 %v2738
      %2770 = vmatprep.subr.mxu0 0.0
      %2771 = vmatpush1.msra.mxu0 %v2728
      %2772 = vmatprep.subr.mxu0 0.0
      %2773 = vmatpush2.msra.mxu0 0.0
      %2774 = vmatprep.subr.mxu0 0.0
      %2775 = vmatpush2.msra.mxu0 0.0
      %2776 = vmatprep.subr.mxu0 0.0
      %2777 = vmatpush2.msra.mxu0 0.0
      %2778 = vmatprep.subr.mxu0 0.0
      %2779 = vmatpush2.msra.mxu0 0.0
      %2780 = vmatprep.subr.mxu0 0.0
      %2781 = vmatpush2.msra.mxu0 0.0
      %2782 = vmatprep.subr.mxu0 0.0
      %2783 = vmatpush2.msra.mxu0 0.0
      %2784 = vmatprep.subr.mxu0 0.0
      %2785 = vmatpush2.msra.mxu0 0.0
      %2786 = vmatprep.subr.mxu0 0.0
      %2787 = vmatpush2.msra.mxu0 0.0
      %2788 = vmatprep.subr.mxu0 0.0
      %2789 = vmatpush2.msra.mxu0 0.0
      %2790 = vmatprep.subr.mxu0 0.0
      %2791 = vmatpush2.msra.mxu0 0.0
      %2792 = vmatprep.subr.mxu0 0.0
      %2793 = vmatpush2.msra.mxu0 0.0
      %2794 = vmatprep.subr.mxu0 0.0
      %2795 = vmatpush2.msra.mxu0 0.0
      %2796 = vmatprep.subr.mxu0 0.0
      %2797 = vmatpush2.msra.mxu0 0.0
      %2798 = vmatprep.subr.mxu0 0.0
      %2799 = vmatpush2.msra.mxu0 0.0
      %2800 = vmatprep.subr.mxu0 0.0
      %2801 = vmatpush2.msra.mxu0 0.0
      %2802 = vmatprep.subr.mxu0 0.0
      %2803 = vmatpush2.msra.mxu0 0.0
      %2804 = vmatprep.mubr.f32.mxu0 0.0
      %2805 = vmatmul.mubr.f32.gmra.mxu0 %v2733
      %v2806 = vpop.f32.mrf.mxu0
      %v2807 = vadd.f32 0.0, %v2806
      %v2808 = vpop.f32.mrf.mxu0
      %2809 = vmatprep.mubr.f32.mxu0 0.0
      %2810 = vmatmul.mubr.f32.gmra.mxu0 %v2736
      %v2811 = vpop.f32.mrf.mxu0
      %v2812 = vadd.f32 0.0, %v2811
      %v2813 = vpop.f32.mrf.mxu0
      %2814 = vdwg.mxu0
      %v2815 = vpack.c.bf16 %v2812, %v2807
      %v2820 = vunpack.c.l.b16 %v1836
      %v2821 = vunpack.c.l.b16 %v1837
      %v2822 = vunpack.c.l.b16 %v1838
      %v2823 = vunpack.c.l.b16 %v1839
      %v2824 = vpack.c.b16 %v2821, %v2820
      %v2825 = vpack.c.b16 %v2823, %v2822
      %v2829 = vsel %vm1842, %v2815, 0
      %2831 = vmatprep.subr.bf16.mxu0 0
      %2832 = vmatpush1.bf16.msra.mxu0 0
      %2833 = vmatprep.subr.bf16.mxu0 0
      %2834 = vmatpush1.bf16.msra.mxu0 0
      %2835 = vmatprep.subr.bf16.mxu0 0
      %2836 = vmatpush1.bf16.msra.mxu0 0
      %2837 = vmatprep.subr.bf16.mxu0 0
      %2838 = vmatpush1.bf16.msra.mxu0 0
      %2839 = vmatprep.subr.bf16.mxu0 0
      %2840 = vmatpush1.bf16.msra.mxu0 0
      %2841 = vmatprep.subr.bf16.mxu0 0
      %2842 = vmatpush1.bf16.msra.mxu0 0
      %2843 = vmatprep.subr.bf16.mxu0 0
      %2844 = vmatpush1.bf16.msra.mxu0 %v2825
      %2845 = vmatprep.subr.bf16.mxu0 0
      %2846 = vmatpush1.bf16.msra.mxu0 %v2824
      %2847 = vmatprep.subr.bf16.mxu0 0
      %2848 = vmatpush2.bf16.msra.mxu0 0
      %2849 = vmatprep.subr.bf16.mxu0 0
      %2850 = vmatpush2.bf16.msra.mxu0 0
      %2851 = vmatprep.subr.bf16.mxu0 0
      %2852 = vmatpush2.bf16.msra.mxu0 0
      %2853 = vmatprep.subr.bf16.mxu0 0
      %2854 = vmatpush2.bf16.msra.mxu0 0
      %2855 = vmatprep.subr.bf16.mxu0 0
      %2856 = vmatpush2.bf16.msra.mxu0 0
      %2857 = vmatprep.subr.bf16.mxu0 0
      %2858 = vmatpush2.bf16.msra.mxu0 0
      %2859 = vmatprep.subr.bf16.mxu0 0
      %2860 = vmatpush2.bf16.msra.mxu0 0
      %2861 = vmatprep.subr.bf16.mxu0 0
      %2862 = vmatpush2.bf16.msra.mxu0 0
      %2863 = vmatprep.mubr.bf16.mxu0 0
      %2864 = vmatmul.mubr.bf16.gmra.mxu0 %v2829
      %v2865 = vpop.f32.mrf.mxu0
      %v2866 = vadd.f32 0.0, %v2865
      %v2867 = vpop.f32.mrf.mxu0
      %v2868 = vpop.f32.mrf.mxu0
      %v2869 = vadd.f32 0.0, %v2868
      %v2870 = vpop.f32.mrf.mxu0
      %2871 = vdwg.mxu0
      %v2872 = vadd.f32 %v2612, %v2866
      %v2873 = vadd.f32 %v2613, %v2869
      %v2874 = vadd.f32 %v1514, %v2872
      %v2875 = vadd.f32 %v1515, %v2873
      %v2876 = vld [vmem:[%s796] sm:$0x1]
      %v2878 = vlaneseq
      %v2879 = vshrl.u32 %v2878, 7
      %v2880 = vsub.s32 0, %v2879
      %v2881 = vrot.slane %v2876, %v2880
      %v2883 = vadd.f32 %v2874, %v2881
      %v2884 = vadd.f32 %v2875, %v2881
      %v2885 = vld [vmem:[%s799] sm:$0x1]
      %v2886 = vld [vmem:[%s802] sm:$0x1]
      %2887 = vadd.xlane.f32.xlu0 %v2883
      %v2888 = vpop.xlane.xlu0 %2887
      %v2889 = vsel %vm1522, %v2884, 0.0
      %2890 = vadd.xlane.f32.xlu0 %v2889
      %v2891 = vpop.xlane.xlu0 %2890
      %v2892 = vmul.f32 %v2888, %v1526
      %v2893 = vmul.f32 %v2891, %v1526
      %v2894 = vsub.f32 %v2883, %v2892
      %v2895 = vsub.f32 %v2884, %v2893
      %v2896 = vmul.f32 %v2894, %v2894
      %v2897 = vmul.f32 %v2895, %v2895
      %2898 = vadd.xlane.f32.xlu0 %v2896
      %v2899 = vpop.xlane.xlu0 %2898
      %v2900 = vsel %vm1522, %v2897, 0.0
      %2901 = vadd.xlane.f32.xlu0 %v2900
      %v2902 = vpop.xlane.xlu0 %2901
      %v2903 = vmul.f32 %v2899, %v1526
      %v2904 = vmul.f32 %v2902, %v1526
      %v2905 = vadd.f32 %v2903, 1e-05
      %v2906 = vadd.f32 %v2904, 1e-05
      %v2907 = vrsqrt.pop %v2905
      %v2908 = vrsqrt.pop %v2906
      %v2909 = vmul.f32 %v2894, %v2907
      %v2910 = vmul.f32 %v2895, %v2908
      %v2912 = vlaneseq
      %v2913 = vshrl.u32 %v2912, 7
      %v2914 = vsub.s32 0, %v2913
      %v2915 = vrot.slane %v2885, %v2914
      %v2917 = vmul.f32 %v2909, %v2915
      %v2918 = vmul.f32 %v2910, %v2915
      %v2920 = vlaneseq
      %v2921 = vshrl.u32 %v2920, 7
      %v2922 = vsub.s32 0, %v2921
      %v2923 = vrot.slane %v2886, %v2922
      %v2925 = vadd.f32 %v2917, %v2923
      %v2926 = vadd.f32 %v2918, %v2923
      %v2927 = vpack.c.bf16 %v2926, %v2925
      %v2928 = vld [vmem:[%s807] sm:$0xff]
      %v2929 = vld [vmem:[%s807 + $0x8] sm:$0xff]
      %v2930 = vld [vmem:[%s807 + $0x10] sm:$0xff]
      %v2931 = vld [vmem:[%s807 + $0x18] sm:$0xff]
      %v2932 = vld [vmem:[%s807 + $0x20] sm:$0xff]
      %v2933 = vld [vmem:[%s807 + $0x28] sm:$0xff]
      %v2934 = vld [vmem:[%s807 + $0x30] sm:$0xff]
      %v2935 = vld [vmem:[%s807 + $0x38] sm:$0xff]
      %v2936 = vld [vmem:[%s807 + $0x40] sm:$0xff]
      %v2937 = vld [vmem:[%s807 + $0x48] sm:$0xff]
      %v2938 = vld [vmem:[%s807 + $0x50] sm:$0xff]
      %v2939 = vld [vmem:[%s807 + $0x58] sm:$0xff]
      %v2940 = vld [vmem:[%s807 + $0x60] sm:$0xff]
      %v2941 = vld [vmem:[%s807 + $0x68] sm:$0xff]
      %v2942 = vld [vmem:[%s807 + $0x70] sm:$0xff]
      %v2943 = vld [vmem:[%s807 + $0x78] sm:$0xff]
      %v2944 = vld [vmem:[%s807 + $0x80] sm:$0xff]
      %v2945 = vld [vmem:[%s807 + $0x88] sm:$0xff]
      %v2946 = vld [vmem:[%s807 + $0x90] sm:$0xff]
      %v2947 = vld [vmem:[%s807 + $0x98] sm:$0xff]
      %v2948 = vld [vmem:[%s807 + $0xa0] sm:$0xff]
      %v2949 = vld [vmem:[%s807 + $0xa8] sm:$0xff]
      %v2950 = vld [vmem:[%s807 + $0xb0] sm:$0xff]
      %v2951 = vld [vmem:[%s807 + $0xb8] sm:$0xff]
      %v2952 = vld [vmem:[%s807 + $0xc0] sm:$0xff]
      %v2953 = vld [vmem:[%s807 + $0xc8] sm:$0xff]
      %v2954 = vld [vmem:[%s807 + $0xd0] sm:$0xff]
      %v2955 = vld [vmem:[%s807 + $0xd8] sm:$0xff]
      %v2956 = vld [vmem:[%s807 + $0xe0] sm:$0xff]
      %v2957 = vld [vmem:[%s807 + $0xe8] sm:$0xff]
      %v2958 = vld [vmem:[%s807 + $0xf0] sm:$0xff]
      %v2959 = vld [vmem:[%s807 + $0xf8] sm:$0xff]
      %v2960 = vld [vmem:[%s811] sm:$0xf]
      %v2962 = vlaneseq
      %v2963 = vshrl.u32 %v2962, 7
      %v2964 = vsub.s32 0, %v2963
      %v2965 = vrot.slane %v2960, %v2964
      %v2966 = vlaneseq
      %v2967 = vshrl.u32 %v2966, 7
      %v2968 = vsub.s32 1, %v2967
      %v2969 = vrot.slane %v2960, %v2968
      %v2970 = vlaneseq
      %v2971 = vshrl.u32 %v2970, 7
      %v2972 = vsub.s32 2, %v2971
      %v2973 = vrot.slane %v2960, %v2972
      %v2974 = vlaneseq
      %v2975 = vshrl.u32 %v2974, 7
      %v2976 = vsub.s32 3, %v2975
      %v2977 = vrot.slane %v2960, %v2976
      %v3014 = vunpack.c.l.b16 %v2928
      %v3015 = vunpack.c.h.b16 %v2928
      %v3016 = vunpack.c.l.b16 %v2929
      %v3017 = vunpack.c.h.b16 %v2929
      %v3018 = vunpack.c.l.b16 %v2930
      %v3019 = vunpack.c.h.b16 %v2930
      %v3020 = vunpack.c.l.b16 %v2931
      %v3021 = vunpack.c.h.b16 %v2931
      %v3022 = vunpack.c.l.b16 %v2932
      %v3023 = vunpack.c.h.b16 %v2932
      %v3024 = vunpack.c.l.b16 %v2933
      %v3025 = vunpack.c.h.b16 %v2933
      %v3026 = vunpack.c.l.b16 %v2934
      %v3027 = vunpack.c.h.b16 %v2934
      %v3028 = vunpack.c.l.b16 %v2935
      %v3029 = vunpack.c.h.b16 %v2935
      %v3030 = vunpack.c.l.b16 %v2936
      %v3031 = vunpack.c.h.b16 %v2936
      %v3032 = vunpack.c.l.b16 %v2937
      %v3033 = vunpack.c.h.b16 %v2937
      %v3034 = vunpack.c.l.b16 %v2938
      %v3035 = vunpack.c.h.b16 %v2938
      %v3036 = vunpack.c.l.b16 %v2939
      %v3037 = vunpack.c.h.b16 %v2939
      %v3038 = vunpack.c.l.b16 %v2940
      %v3039 = vunpack.c.h.b16 %v2940
      %v3040 = vunpack.c.l.b16 %v2941
      %v3041 = vunpack.c.h.b16 %v2941
      %v3042 = vunpack.c.l.b16 %v2942
      %v3043 = vunpack.c.h.b16 %v2942
      %v3044 = vunpack.c.l.b16 %v2943
      %v3045 = vunpack.c.h.b16 %v2943
      %v3046 = vunpack.c.l.b16 %v2944
      %v3047 = vunpack.c.h.b16 %v2944
      %v3048 = vunpack.c.l.b16 %v2945
      %v3049 = vunpack.c.h.b16 %v2945
      %v3050 = vunpack.c.l.b16 %v2946
      %v3051 = vunpack.c.h.b16 %v2946
      %v3052 = vunpack.c.l.b16 %v2947
      %v3053 = vunpack.c.h.b16 %v2947
      %v3054 = vunpack.c.l.b16 %v2948
      %v3055 = vunpack.c.h.b16 %v2948
      %v3056 = vunpack.c.l.b16 %v2949
      %v3057 = vunpack.c.h.b16 %v2949
      %v3058 = vunpack.c.l.b16 %v2950
      %v3059 = vunpack.c.h.b16 %v2950
      %v3060 = vunpack.c.l.b16 %v2951
      %v3061 = vunpack.c.h.b16 %v2951
      %v3062 = vunpack.c.l.b16 %v2952
      %v3063 = vunpack.c.h.b16 %v2952
      %v3064 = vunpack.c.l.b16 %v2953
      %v3065 = vunpack.c.h.b16 %v2953
      %v3066 = vunpack.c.l.b16 %v2954
      %v3067 = vunpack.c.h.b16 %v2954
      %v3068 = vunpack.c.l.b16 %v2955
      %v3069 = vunpack.c.h.b16 %v2955
      %v3070 = vunpack.c.l.b16 %v2956
      %v3071 = vunpack.c.h.b16 %v2956
      %v3072 = vunpack.c.l.b16 %v2957
      %v3073 = vunpack.c.h.b16 %v2957
      %v3074 = vunpack.c.l.b16 %v2958
      %v3075 = vunpack.c.h.b16 %v2958
      %v3076 = vunpack.c.l.b16 %v2959
      %v3077 = vunpack.c.h.b16 %v2959
      %v3078 = vpack.c.b16 %v3018, %v3014
      %v3079 = vpack.c.b16 %v3019, %v3015
      %v3080 = vpack.c.b16 %v3020, %v3016
      %v3081 = vpack.c.b16 %v3021, %v3017
      %v3082 = vpack.c.b16 %v3026, %v3022
      %v3083 = vpack.c.b16 %v3027, %v3023
      %v3084 = vpack.c.b16 %v3028, %v3024
      %v3085 = vpack.c.b16 %v3029, %v3025
      %v3086 = vpack.c.b16 %v3034, %v3030
      %v3087 = vpack.c.b16 %v3035, %v3031
      %v3088 = vpack.c.b16 %v3036, %v3032
      %v3089 = vpack.c.b16 %v3037, %v3033
      %v3090 = vpack.c.b16 %v3042, %v3038
      %v3091 = vpack.c.b16 %v3043, %v3039
      %v3092 = vpack.c.b16 %v3044, %v3040
      %v3093 = vpack.c.b16 %v3045, %v3041
      %v3094 = vpack.c.b16 %v3050, %v3046
      %v3095 = vpack.c.b16 %v3051, %v3047
      %v3096 = vpack.c.b16 %v3052, %v3048
      %v3097 = vpack.c.b16 %v3053, %v3049
      %v3098 = vpack.c.b16 %v3058, %v3054
      %v3099 = vpack.c.b16 %v3059, %v3055
      %v3100 = vpack.c.b16 %v3060, %v3056
      %v3101 = vpack.c.b16 %v3061, %v3057
      %v3102 = vpack.c.b16 %v3066, %v3062
      %v3103 = vpack.c.b16 %v3067, %v3063
      %v3104 = vpack.c.b16 %v3068, %v3064
      %v3105 = vpack.c.b16 %v3069, %v3065
      %v3106 = vpack.c.b16 %v3074, %v3070
      %v3107 = vpack.c.b16 %v3075, %v3071
      %v3108 = vpack.c.b16 %v3076, %v3072
      %v3109 = vpack.c.b16 %v3077, %v3073
      %3142 = vmatprep.subr.bf16.mxu0 %v3107
      %3143 = vmatpush1.bf16.msra.mxu0 %v3106
      %3144 = vmatprep.subr.bf16.mxu0 %v3103
      %3145 = vmatpush1.bf16.msra.mxu0 %v3102
      %3146 = vmatprep.subr.bf16.mxu0 %v3099
      %3147 = vmatpush1.bf16.msra.mxu0 %v3098
      %3148 = vmatprep.subr.bf16.mxu0 %v3095
      %3149 = vmatpush1.bf16.msra.mxu0 %v3094
      %3150 = vmatprep.subr.bf16.mxu0 %v3091
      %3151 = vmatpush1.bf16.msra.mxu0 %v3090
      %3152 = vmatprep.subr.bf16.mxu0 %v3087
      %3153 = vmatpush1.bf16.msra.mxu0 %v3086
      %3154 = vmatprep.subr.bf16.mxu0 %v3083
      %3155 = vmatpush1.bf16.msra.mxu0 %v3082
      %3156 = vmatprep.subr.bf16.mxu0 %v3079
      %3157 = vmatpush1.bf16.msra.mxu0 %v3078
      %3158 = vmatprep.subr.bf16.mxu0 0
      %3159 = vmatpush2.bf16.msra.mxu0 0
      %3160 = vmatprep.subr.bf16.mxu0 0
      %3161 = vmatpush2.bf16.msra.mxu0 0
      %3162 = vmatprep.subr.bf16.mxu0 0
      %3163 = vmatpush2.bf16.msra.mxu0 0
      %3164 = vmatprep.subr.bf16.mxu0 0
      %3165 = vmatpush2.bf16.msra.mxu0 0
      %3166 = vmatprep.subr.bf16.mxu0 0
      %3167 = vmatpush2.bf16.msra.mxu0 0
      %3168 = vmatprep.subr.bf16.mxu0 0
      %3169 = vmatpush2.bf16.msra.mxu0 0
      %3170 = vmatprep.subr.bf16.mxu0 0
      %3171 = vmatpush2.bf16.msra.mxu0 0
      %3172 = vmatprep.subr.bf16.mxu0 0
      %3173 = vmatpush2.bf16.msra.mxu0 0
      %3174 = vmatprep.mubr.bf16.mxu0 0
      %3175 = vmatmul.mubr.bf16.gmra.mxu0 %v2927
      %v3176 = vpop.f32.mrf.mxu0
      %v3177 = vadd.f32 %v2965, %v3176
      %v3178 = vpop.f32.mrf.mxu0
      %v3179 = vadd.f32 %v2969, %v3178
      %v3180 = vpop.f32.mrf.mxu0
      %v3181 = vadd.f32 %v2965, %v3180
      %v3182 = vpop.f32.mrf.mxu0
      %v3183 = vadd.f32 %v2969, %v3182
      %3184 = vdwg.mxu0
      %3185 = vmatprep.subr.bf16.mxu0 %v3109
      %3186 = vmatpush1.bf16.msra.mxu0 %v3108
      %3187 = vmatprep.subr.bf16.mxu0 %v3105
      %3188 = vmatpush1.bf16.msra.mxu0 %v3104
      %3189 = vmatprep.subr.bf16.mxu0 %v3101
      %3190 = vmatpush1.bf16.msra.mxu0 %v3100
      %3191 = vmatprep.subr.bf16.mxu0 %v3097
      %3192 = vmatpush1.bf16.msra.mxu0 %v3096
      %3193 = vmatprep.subr.bf16.mxu0 %v3093
      %3194 = vmatpush1.bf16.msra.mxu0 %v3092
      %3195 = vmatprep.subr.bf16.mxu0 %v3089
      %3196 = vmatpush1.bf16.msra.mxu0 %v3088
      %3197 = vmatprep.subr.bf16.mxu0 %v3085
      %3198 = vmatpush1.bf16.msra.mxu0 %v3084
      %3199 = vmatprep.subr.bf16.mxu0 %v3081
      %3200 = vmatpush1.bf16.msra.mxu0 %v3080
      %3201 = vmatprep.subr.bf16.mxu0 0
      %3202 = vmatpush2.bf16.msra.mxu0 0
      %3203 = vmatprep.subr.bf16.mxu0 0
      %3204 = vmatpush2.bf16.msra.mxu0 0
      %3205 = vmatprep.subr.bf16.mxu0 0
      %3206 = vmatpush2.bf16.msra.mxu0 0
      %3207 = vmatprep.subr.bf16.mxu0 0
      %3208 = vmatpush2.bf16.msra.mxu0 0
      %3209 = vmatprep.subr.bf16.mxu0 0
      %3210 = vmatpush2.bf16.msra.mxu0 0
      %3211 = vmatprep.subr.bf16.mxu0 0
      %3212 = vmatpush2.bf16.msra.mxu0 0
      %3213 = vmatprep.subr.bf16.mxu0 0
      %3214 = vmatpush2.bf16.msra.mxu0 0
      %3215 = vmatprep.subr.bf16.mxu0 0
      %3216 = vmatpush2.bf16.msra.mxu0 0
      %3217 = vmatprep.mubr.bf16.mxu0 0
      %3218 = vmatmul.mubr.bf16.gmra.mxu0 %v2927
      %v3219 = vpop.f32.mrf.mxu0
      %v3220 = vadd.f32 %v2973, %v3219
      %v3221 = vpop.f32.mrf.mxu0
      %v3222 = vadd.f32 %v2977, %v3221
      %v3223 = vpop.f32.mrf.mxu0
      %v3224 = vadd.f32 %v2973, %v3223
      %v3225 = vpop.f32.mrf.mxu0
      %v3226 = vadd.f32 %v2977, %v3225
      %3227 = vdwg.mxu0
      %v3228 = vmul.f32 %v3177, 1.702
      %v3229 = vmul.f32 %v3179, 1.702
      %v3230 = vmul.f32 %v3220, 1.702
      %v3231 = vmul.f32 %v3222, 1.702
      %v3232 = vmul.f32 %v3181, 1.702
      %v3233 = vmul.f32 %v3183, 1.702
      %v3234 = vmul.f32 %v3224, 1.702
      %v3235 = vmul.f32 %v3226, 1.702
      %v3236 = vxor.u32 %v3228, 2147483648
      %v3237 = vxor.u32 %v3229, 2147483648
      %v3238 = vxor.u32 %v3230, 2147483648
      %v3239 = vxor.u32 %v3231, 2147483648
      %v3240 = vxor.u32 %v3232, 2147483648
      %v3241 = vxor.u32 %v3233, 2147483648
      %v3242 = vxor.u32 %v3234, 2147483648
      %v3243 = vxor.u32 %v3235, 2147483648
      %v3244 = vmul.f32 %v3236, 1.442695
      %v3245 = vpow.pop %v3244
      %v3246 = vmul.f32 %v3237, 1.442695
      %v3247 = vpow.pop %v3246
      %v3248 = vmul.f32 %v3238, 1.442695
      %v3249 = vpow.pop %v3248
      %v3250 = vmul.f32 %v3239, 1.442695
      %v3251 = vpow.pop %v3250
      %v3252 = vmul.f32 %v3240, 1.442695
      %v3253 = vpow.pop %v3252
      %v3254 = vmul.f32 %v3241, 1.442695
      %v3255 = vpow.pop %v3254
      %v3256 = vmul.f32 %v3242, 1.442695
      %v3257 = vpow.pop %v3256
      %v3258 = vmul.f32 %v3243, 1.442695
      %v3259 = vpow.pop %v3258
      %v3260 = vadd.f32 %v3245, 1.0
      %v3261 = vadd.f32 %v3247, 1.0
      %v3262 = vadd.f32 %v3249, 1.0
      %v3263 = vadd.f32 %v3251, 1.0
      %v3264 = vadd.f32 %v3253, 1.0
      %v3265 = vadd.f32 %v3255, 1.0
      %v3266 = vadd.f32 %v3257, 1.0
      %v3267 = vadd.f32 %v3259, 1.0
      %v3268 = vrcp.pop %v3260
      %v3269 = vmul.f32 1.0, %v3268
      %v3270 = vrcp.pop %v3261
      %v3271 = vmul.f32 1.0, %v3270
      %v3272 = vrcp.pop %v3262
      %v3273 = vmul.f32 1.0, %v3272
      %v3274 = vrcp.pop %v3263
      %v3275 = vmul.f32 1.0, %v3274
      %v3276 = vrcp.pop %v3264
      %v3277 = vmul.f32 1.0, %v3276
      %v3278 = vrcp.pop %v3265
      %v3279 = vmul.f32 1.0, %v3278
      %v3280 = vrcp.pop %v3266
      %v3281 = vmul.f32 1.0, %v3280
      %v3282 = vrcp.pop %v3267
      %v3283 = vmul.f32 1.0, %v3282
      %v3284 = vmul.f32 %v3177, %v3269
      %v3285 = vmul.f32 %v3179, %v3271
      %v3286 = vmul.f32 %v3220, %v3273
      %v3287 = vmul.f32 %v3222, %v3275
      %v3288 = vmul.f32 %v3181, %v3277
      %v3289 = vmul.f32 %v3183, %v3279
      %v3290 = vmul.f32 %v3224, %v3281
      %v3291 = vmul.f32 %v3226, %v3283
      %v3292 = vpack.c.bf16 %v3288, %v3284
      %v3293 = vpack.c.bf16 %v3289, %v3285
      %v3294 = vpack.c.bf16 %v3290, %v3286
      %v3295 = vpack.c.bf16 %v3291, %v3287
      %v3296 = vld [vmem:[%s816] sm:$0xf]
      %v3297 = vld [vmem:[%s816 + $0x4] sm:$0xf]
      %v3298 = vld [vmem:[%s816 + $0x8] sm:$0xf]
      %v3299 = vld [vmem:[%s816 + $0xc] sm:$0xf]
      %v3300 = vld [vmem:[%s816 + $0x10] sm:$0xf]
      %v3301 = vld [vmem:[%s816 + $0x14] sm:$0xf]
      %v3302 = vld [vmem:[%s816 + $0x18] sm:$0xf]
      %v3303 = vld [vmem:[%s816 + $0x1c] sm:$0xf]
      %v3304 = vld [vmem:[%s816 + $0x20] sm:$0xf]
      %v3305 = vld [vmem:[%s816 + $0x24] sm:$0xf]
      %v3306 = vld [vmem:[%s816 + $0x28] sm:$0xf]
      %v3307 = vld [vmem:[%s816 + $0x2c] sm:$0xf]
      %v3308 = vld [vmem:[%s816 + $0x30] sm:$0xf]
      %v3309 = vld [vmem:[%s816 + $0x34] sm:$0xf]
      %v3310 = vld [vmem:[%s816 + $0x38] sm:$0xf]
      %v3311 = vld [vmem:[%s816 + $0x3c] sm:$0xf]
      %v3312 = vld [vmem:[%s816 + $0x40] sm:$0xf]
      %v3313 = vld [vmem:[%s816 + $0x44] sm:$0xf]
      %v3314 = vld [vmem:[%s816 + $0x48] sm:$0xf]
      %v3315 = vld [vmem:[%s816 + $0x4c] sm:$0xf]
      %v3316 = vld [vmem:[%s816 + $0x50] sm:$0xf]
      %v3317 = vld [vmem:[%s816 + $0x54] sm:$0xf]
      %v3318 = vld [vmem:[%s816 + $0x58] sm:$0xf]
      %v3319 = vld [vmem:[%s816 + $0x5c] sm:$0xf]
      %v3320 = vld [vmem:[%s816 + $0x60] sm:$0xf]
      %v3321 = vld [vmem:[%s816 + $0x64] sm:$0xf]
      %v3322 = vld [vmem:[%s816 + $0x68] sm:$0xf]
      %v3323 = vld [vmem:[%s816 + $0x6c] sm:$0xf]
      %v3324 = vld [vmem:[%s816 + $0x70] sm:$0xf]
      %v3325 = vld [vmem:[%s816 + $0x74] sm:$0xf]
      %v3326 = vld [vmem:[%s816 + $0x78] sm:$0xf]
      %v3327 = vld [vmem:[%s816 + $0x7c] sm:$0xf]
      %v3328 = vld [vmem:[%s816 + $0x80] sm:$0xf]
      %v3329 = vld [vmem:[%s816 + $0x84] sm:$0xf]
      %v3330 = vld [vmem:[%s816 + $0x88] sm:$0xf]
      %v3331 = vld [vmem:[%s816 + $0x8c] sm:$0xf]
      %v3332 = vld [vmem:[%s816 + $0x90] sm:$0xf]
      %v3333 = vld [vmem:[%s816 + $0x94] sm:$0xf]
      %v3334 = vld [vmem:[%s816 + $0x98] sm:$0xf]
      %v3335 = vld [vmem:[%s816 + $0x9c] sm:$0xf]
      %v3336 = vld [vmem:[%s816 + $0xa0] sm:$0xf]
      %v3337 = vld [vmem:[%s816 + $0xa4] sm:$0xf]
      %v3338 = vld [vmem:[%s816 + $0xa8] sm:$0xf]
      %v3339 = vld [vmem:[%s816 + $0xac] sm:$0xf]
      %v3340 = vld [vmem:[%s816 + $0xb0] sm:$0xf]
      %v3341 = vld [vmem:[%s816 + $0xb4] sm:$0xf]
      %v3342 = vld [vmem:[%s816 + $0xb8] sm:$0xf]
      %v3343 = vld [vmem:[%s816 + $0xbc] sm:$0xf]
      %v3344 = vld [vmem:[%s816 + $0xc0] sm:$0xf]
      %v3345 = vld [vmem:[%s816 + $0xc4] sm:$0xf]
      %v3346 = vld [vmem:[%s816 + $0xc8] sm:$0xf]
      %v3347 = vld [vmem:[%s816 + $0xcc] sm:$0xf]
      %v3348 = vld [vmem:[%s816 + $0xd0] sm:$0xf]
      %v3349 = vld [vmem:[%s816 + $0xd4] sm:$0xf]
      %v3350 = vld [vmem:[%s816 + $0xd8] sm:$0xf]
      %v3351 = vld [vmem:[%s816 + $0xdc] sm:$0xf]
      %v3352 = vld [vmem:[%s816 + $0xe0] sm:$0xf]
      %v3353 = vld [vmem:[%s816 + $0xe4] sm:$0xf]
      %v3354 = vld [vmem:[%s816 + $0xe8] sm:$0xf]
      %v3355 = vld [vmem:[%s816 + $0xec] sm:$0xf]
      %v3356 = vld [vmem:[%s816 + $0xf0] sm:$0xf]
      %v3357 = vld [vmem:[%s816 + $0xf4] sm:$0xf]
      %v3358 = vld [vmem:[%s816 + $0xf8] sm:$0xf]
      %v3359 = vld [vmem:[%s816 + $0xfc] sm:$0xf]
      %v3360 = vld [vmem:[%s819] sm:$0x1]
      %v3362 = vlaneseq
      %v3363 = vshrl.u32 %v3362, 7
      %v3364 = vsub.s32 0, %v3363
      %v3365 = vrot.slane %v3360, %v3364
      %v3431 = vunpack.c.l.b16 %v3296
      %v3432 = vunpack.c.l.b16 %v3297
      %v3433 = vunpack.c.l.b16 %v3298
      %v3434 = vunpack.c.l.b16 %v3299
      %v3435 = vunpack.c.l.b16 %v3300
      %v3436 = vunpack.c.l.b16 %v3301
      %v3437 = vunpack.c.l.b16 %v3302
      %v3438 = vunpack.c.l.b16 %v3303
      %v3439 = vunpack.c.l.b16 %v3304
      %v3440 = vunpack.c.l.b16 %v3305
      %v3441 = vunpack.c.l.b16 %v3306
      %v3442 = vunpack.c.l.b16 %v3307
      %v3443 = vunpack.c.l.b16 %v3308
      %v3444 = vunpack.c.l.b16 %v3309
      %v3445 = vunpack.c.l.b16 %v3310
      %v3446 = vunpack.c.l.b16 %v3311
      %v3447 = vunpack.c.l.b16 %v3312
      %v3448 = vunpack.c.l.b16 %v3313
      %v3449 = vunpack.c.l.b16 %v3314
      %v3450 = vunpack.c.l.b16 %v3315
      %v3451 = vunpack.c.l.b16 %v3316
      %v3452 = vunpack.c.l.b16 %v3317
      %v3453 = vunpack.c.l.b16 %v3318
      %v3454 = vunpack.c.l.b16 %v3319
      %v3455 = vunpack.c.l.b16 %v3320
      %v3456 = vunpack.c.l.b16 %v3321
      %v3457 = vunpack.c.l.b16 %v3322
      %v3458 = vunpack.c.l.b16 %v3323
      %v3459 = vunpack.c.l.b16 %v3324
      %v3460 = vunpack.c.l.b16 %v3325
      %v3461 = vunpack.c.l.b16 %v3326
      %v3462 = vunpack.c.l.b16 %v3327
      %v3463 = vunpack.c.l.b16 %v3328
      %v3464 = vunpack.c.l.b16 %v3329
      %v3465 = vunpack.c.l.b16 %v3330
      %v3466 = vunpack.c.l.b16 %v3331
      %v3467 = vunpack.c.l.b16 %v3332
      %v3468 = vunpack.c.l.b16 %v3333
      %v3469 = vunpack.c.l.b16 %v3334
      %v3470 = vunpack.c.l.b16 %v3335
      %v3471 = vunpack.c.l.b16 %v3336
      %v3472 = vunpack.c.l.b16 %v3337
      %v3473 = vunpack.c.l.b16 %v3338
      %v3474 = vunpack.c.l.b16 %v3339
      %v3475 = vunpack.c.l.b16 %v3340
      %v3476 = vunpack.c.l.b16 %v3341
      %v3477 = vunpack.c.l.b16 %v3342
      %v3478 = vunpack.c.l.b16 %v3343
      %v3479 = vunpack.c.l.b16 %v3344
      %v3480 = vunpack.c.l.b16 %v3345
      %v3481 = vunpack.c.l.b16 %v3346
      %v3482 = vunpack.c.l.b16 %v3347
      %v3483 = vunpack.c.l.b16 %v3348
      %v3484 = vunpack.c.l.b16 %v3349
      %v3485 = vunpack.c.l.b16 %v3350
      %v3486 = vunpack.c.l.b16 %v3351
      %v3487 = vunpack.c.l.b16 %v3352
      %v3488 = vunpack.c.l.b16 %v3353
      %v3489 = vunpack.c.l.b16 %v3354
      %v3490 = vunpack.c.l.b16 %v3355
      %v3491 = vunpack.c.l.b16 %v3356
      %v3492 = vunpack.c.l.b16 %v3357
      %v3493 = vunpack.c.l.b16 %v3358
      %v3494 = vunpack.c.l.b16 %v3359
      %v3495 = vpack.c.b16 %v3432, %v3431
      %v3496 = vpack.c.b16 %v3434, %v3433
      %v3497 = vpack.c.b16 %v3436, %v3435
      %v3498 = vpack.c.b16 %v3438, %v3437
      %v3499 = vpack.c.b16 %v3440, %v3439
      %v3500 = vpack.c.b16 %v3442, %v3441
      %v3501 = vpack.c.b16 %v3444, %v3443
      %v3502 = vpack.c.b16 %v3446, %v3445
      %v3503 = vpack.c.b16 %v3448, %v3447
      %v3504 = vpack.c.b16 %v3450, %v3449
      %v3505 = vpack.c.b16 %v3452, %v3451
      %v3506 = vpack.c.b16 %v3454, %v3453
      %v3507 = vpack.c.b16 %v3456, %v3455
      %v3508 = vpack.c.b16 %v3458, %v3457
      %v3509 = vpack.c.b16 %v3460, %v3459
      %v3510 = vpack.c.b16 %v3462, %v3461
      %v3511 = vpack.c.b16 %v3464, %v3463
      %v3512 = vpack.c.b16 %v3466, %v3465
      %v3513 = vpack.c.b16 %v3468, %v3467
      %v3514 = vpack.c.b16 %v3470, %v3469
      %v3515 = vpack.c.b16 %v3472, %v3471
      %v3516 = vpack.c.b16 %v3474, %v3473
      %v3517 = vpack.c.b16 %v3476, %v3475
      %v3518 = vpack.c.b16 %v3478, %v3477
      %v3519 = vpack.c.b16 %v3480, %v3479
      %v3520 = vpack.c.b16 %v3482, %v3481
      %v3521 = vpack.c.b16 %v3484, %v3483
      %v3522 = vpack.c.b16 %v3486, %v3485
      %v3523 = vpack.c.b16 %v3488, %v3487
      %v3524 = vpack.c.b16 %v3490, %v3489
      %v3525 = vpack.c.b16 %v3492, %v3491
      %v3526 = vpack.c.b16 %v3494, %v3493
      %3559 = vmatprep.subr.bf16.mxu0 0
      %3560 = vmatpush1.bf16.msra.mxu0 %v3502
      %3561 = vmatprep.subr.bf16.mxu0 0
      %3562 = vmatpush1.bf16.msra.mxu0 %v3501
      %3563 = vmatprep.subr.bf16.mxu0 0
      %3564 = vmatpush1.bf16.msra.mxu0 %v3500
      %3565 = vmatprep.subr.bf16.mxu0 0
      %3566 = vmatpush1.bf16.msra.mxu0 %v3499
      %3567 = vmatprep.subr.bf16.mxu0 0
      %3568 = vmatpush1.bf16.msra.mxu0 %v3498
      %3569 = vmatprep.subr.bf16.mxu0 0
      %3570 = vmatpush1.bf16.msra.mxu0 %v3497
      %3571 = vmatprep.subr.bf16.mxu0 0
      %3572 = vmatpush1.bf16.msra.mxu0 %v3496
      %3573 = vmatprep.subr.bf16.mxu0 0
      %3574 = vmatpush1.bf16.msra.mxu0 %v3495
      %3575 = vmatprep.subr.bf16.mxu0 0
      %3576 = vmatpush2.bf16.msra.mxu0 %v3510
      %3577 = vmatprep.subr.bf16.mxu0 0
      %3578 = vmatpush2.bf16.msra.mxu0 %v3509
      %3579 = vmatprep.subr.bf16.mxu0 0
      %3580 = vmatpush2.bf16.msra.mxu0 %v3508
      %3581 = vmatprep.subr.bf16.mxu0 0
      %3582 = vmatpush2.bf16.msra.mxu0 %v3507
      %3583 = vmatprep.subr.bf16.mxu0 0
      %3584 = vmatpush2.bf16.msra.mxu0 %v3506
      %3585 = vmatprep.subr.bf16.mxu0 0
      %3586 = vmatpush2.bf16.msra.mxu0 %v3505
      %3587 = vmatprep.subr.bf16.mxu0 0
      %3588 = vmatpush2.bf16.msra.mxu0 %v3504
      %3589 = vmatprep.subr.bf16.mxu0 0
      %3590 = vmatpush2.bf16.msra.mxu0 %v3503
      %3591 = vmatprep.mubr.bf16.mxu0 %v3293
      %3592 = vmatmul.mubr.bf16.gmra.mxu0 %v3292
      %v3593 = vpop.f32.mrf.mxu0
      %v3594 = vadd.f32 %v3365, %v3593
      %v3595 = vpop.f32.mrf.mxu0
      %v3596 = vpop.f32.mrf.mxu0
      %v3597 = vadd.f32 %v3365, %v3596
      %v3598 = vpop.f32.mrf.mxu0
      %3599 = vdwg.mxu0
      %3600 = vmatprep.subr.bf16.mxu0 0
      %3601 = vmatpush1.bf16.msra.mxu0 %v3518
      %3602 = vmatprep.subr.bf16.mxu0 0
      %3603 = vmatpush1.bf16.msra.mxu0 %v3517
      %3604 = vmatprep.subr.bf16.mxu0 0
      %3605 = vmatpush1.bf16.msra.mxu0 %v3516
      %3606 = vmatprep.subr.bf16.mxu0 0
      %3607 = vmatpush1.bf16.msra.mxu0 %v3515
      %3608 = vmatprep.subr.bf16.mxu0 0
      %3609 = vmatpush1.bf16.msra.mxu0 %v3514
      %3610 = vmatprep.subr.bf16.mxu0 0
      %3611 = vmatpush1.bf16.msra.mxu0 %v3513
      %3612 = vmatprep.subr.bf16.mxu0 0
      %3613 = vmatpush1.bf16.msra.mxu0 %v3512
      %3614 = vmatprep.subr.bf16.mxu0 0
      %3615 = vmatpush1.bf16.msra.mxu0 %v3511
      %3616 = vmatprep.subr.bf16.mxu0 0
      %3617 = vmatpush2.bf16.msra.mxu0 %v3526
      %3618 = vmatprep.subr.bf16.mxu0 0
      %3619 = vmatpush2.bf16.msra.mxu0 %v3525
      %3620 = vmatprep.subr.bf16.mxu0 0
      %3621 = vmatpush2.bf16.msra.mxu0 %v3524
      %3622 = vmatprep.subr.bf16.mxu0 0
      %3623 = vmatpush2.bf16.msra.mxu0 %v3523
      %3624 = vmatprep.subr.bf16.mxu0 0
      %3625 = vmatpush2.bf16.msra.mxu0 %v3522
      %3626 = vmatprep.subr.bf16.mxu0 0
      %3627 = vmatpush2.bf16.msra.mxu0 %v3521
      %3628 = vmatprep.subr.bf16.mxu0 0
      %3629 = vmatpush2.bf16.msra.mxu0 %v3520
      %3630 = vmatprep.subr.bf16.mxu0 0
      %3631 = vmatpush2.bf16.msra.mxu0 %v3519
      %3632 = vmatprep.mubr.bf16.mxu0 %v3295
      %3633 = vmatmul.mubr.bf16.gmra.mxu0 %v3294
      %v3634 = vpop.f32.mrf.mxu0
      %v3635 = vadd.f32 %v3594, %v3634
      %v3636 = vpop.f32.mrf.mxu0
      %v3637 = vpop.f32.mrf.mxu0
      %v3638 = vadd.f32 %v3597, %v3637
      %v3639 = vpop.f32.mrf.mxu0
      %3640 = vdwg.mxu0
      %v3641 = vadd.f32 %v2883, %v3635
      %v3642 = vadd.f32 %v2884, %v3638
      %3643 = vst [vmem:[#allocation2] sm:$0xff] %v3641
      %3644 = vst [vmem:[#allocation2 + $0x8] sm:$0x3] %v3642
      %p3645 = scmp.eq.s32.totalorder %s32, 1
      // Predicated region
      $region109: #{vision_transformer_forward.1} parent=103 // pred_check
        %p3646 = pneg %p3645
      $region110: #{vision_transformer_forward.1} parent=103 // pred_check_branch
        %3648 = sbr.rel (%p3646) target = $region112
      $region111: #{vision_transformer_forward.1} parent=103 // pred_region
        %v3649 = vld [vmem:[%s18] sm:$0x1]
        %v3650 = vld [vmem:[%s19] sm:$0x1]
        %v3651 = vld [vmem:[%s20] sm:$0xff]
        %v3652 = vld [vmem:[%s20 + $0x8] sm:$0xff]
        %v3653 = vld [vmem:[%s20 + $0x10] sm:$0xff]
        %v3654 = vld [vmem:[%s20 + $0x18] sm:$0xff]
        %v3655 = vld [vmem:[%s20 + $0x20] sm:$0xff]
        %v3656 = vld [vmem:[%s20 + $0x28] sm:$0xff]
        %v3657 = vld [vmem:[%s20 + $0x30] sm:$0xff]
        %v3658 = vld [vmem:[%s20 + $0x38] sm:$0xff]
        %v3659 = vld [vmem:[%s20 + $0x40] sm:$0xff]
        %v3660 = vld [vmem:[%s20 + $0x48] sm:$0xff]
        %v3661 = vld [vmem:[%s20 + $0x50] sm:$0xff]
        %v3662 = vld [vmem:[%s20 + $0x58] sm:$0xff]
        %v3663 = vld [vmem:[%s20 + $0x60] sm:$0xff]
        %v3664 = vld [vmem:[%s20 + $0x68] sm:$0xff]
        %v3665 = vld [vmem:[%s20 + $0x70] sm:$0xff]
        %v3666 = vld [vmem:[%s20 + $0x78] sm:$0xff]
        %v3667 = vld [vmem:[%s20 + $0x80] sm:$0xff]
        %v3668 = vld [vmem:[%s20 + $0x88] sm:$0xff]
        %v3669 = vld [vmem:[%s20 + $0x90] sm:$0xff]
        %v3670 = vld [vmem:[%s20 + $0x98] sm:$0xff]
        %v3671 = vld [vmem:[%s20 + $0xa0] sm:$0xff]
        %v3672 = vld [vmem:[%s20 + $0xa8] sm:$0xff]
        %v3673 = vld [vmem:[%s20 + $0xb0] sm:$0xff]
        %v3674 = vld [vmem:[%s20 + $0xb8] sm:$0xff]
        %v3675 = vld [vmem:[%s20 + $0xc0] sm:$0xff]
        %v3676 = vld [vmem:[%s20 + $0xc8] sm:$0xff]
        %v3677 = vld [vmem:[%s20 + $0xd0] sm:$0xff]
        %v3678 = vld [vmem:[%s20 + $0xd8] sm:$0xff]
        %v3679 = vld [vmem:[%s20 + $0xe0] sm:$0xff]
        %v3680 = vld [vmem:[%s20 + $0xe8] sm:$0xff]
        %v3681 = vld [vmem:[%s20 + $0xf0] sm:$0xff]
        %v3682 = vld [vmem:[%s20 + $0xf8] sm:$0xff]
        %vm3683 = vcmask 1040384
        %v3684 = vsel %vm3683, %v3641, 0.0
        %3685 = vadd.xlane.f32.xlu0 %v3684
        %v3686 = vpop.xlane.xlu0 %3685
        %v3687 = vmul.f32 %v3686, %v1526
        %v3688 = vsub.f32 %v3641, %v3687
        %v3689 = vmul.f32 %v3688, %v3688
        %v3690 = vsel %vm3683, %v3689, 0.0
        %3691 = vadd.xlane.f32.xlu0 %v3690
        %v3692 = vpop.xlane.xlu0 %3691
        %v3693 = vmul.f32 %v3692, %v1526
        %v3694 = vadd.f32 %v3693, 1e-05
        %v3695 = vrsqrt.pop %v3694
        %v3696 = vmul.f32 %v3688, %v3695
        %v3697 = vmul.f32 %v3696, %v3649
        %v3698 = vadd.f32 %v3697, %v3650
        %3699 = vmatprep.subr.mxu0 %v3682
        %3700 = vmatpush1.msra.mxu0 %v3681
        %3701 = vmatprep.subr.mxu0 %v3680
        %3702 = vmatpush1.msra.mxu0 %v3679
        %3703 = vmatprep.subr.mxu0 %v3678
        %3704 = vmatpush1.msra.mxu0 %v3677
        %3705 = vmatprep.subr.mxu0 %v3676
        %3706 = vmatpush1.msra.mxu0 %v3675
        %3707 = vmatprep.subr.mxu0 %v3674
        %3708 = vmatpush1.msra.mxu0 %v3673
        %3709 = vmatprep.subr.mxu0 %v3672
        %3710 = vmatpush1.msra.mxu0 %v3671
        %3711 = vmatprep.subr.mxu0 %v3670
        %3712 = vmatpush1.msra.mxu0 %v3669
        %3713 = vmatprep.subr.mxu0 %v3668
        %3714 = vmatpush1.msra.mxu0 %v3667
        %3715 = vmatprep.subr.mxu0 %v3666
        %3716 = vmatpush1.msra.mxu0 %v3665
        %3717 = vmatprep.subr.mxu0 %v3664
        %3718 = vmatpush1.msra.mxu0 %v3663
        %3719 = vmatprep.subr.mxu0 %v3662
        %3720 = vmatpush1.msra.mxu0 %v3661
        %3721 = vmatprep.subr.mxu0 %v3660
        %3722 = vmatpush1.msra.mxu0 %v3659
        %3723 = vmatprep.subr.mxu0 %v3658
        %3724 = vmatpush1.msra.mxu0 %v3657
        %3725 = vmatprep.subr.mxu0 %v3656
        %3726 = vmatpush1.msra.mxu0 %v3655
        %3727 = vmatprep.subr.mxu0 %v3654
        %3728 = vmatpush1.msra.mxu0 %v3653
        %3729 = vmatprep.subr.mxu0 %v3652
        %3730 = vmatpush1.msra.mxu0 %v3651
        %3731 = vmatprep.subr.mxu0 0.0
        %3732 = vmatpush2.msra.mxu0 0.0
        %3733 = vmatprep.subr.mxu0 0.0
        %3734 = vmatpush2.msra.mxu0 0.0
        %3735 = vmatprep.subr.mxu0 0.0
        %3736 = vmatpush2.msra.mxu0 0.0
        %3737 = vmatprep.subr.mxu0 0.0
        %3738 = vmatpush2.msra.mxu0 0.0
        %3739 = vmatprep.subr.mxu0 0.0
        %3740 = vmatpush2.msra.mxu0 0.0
        %3741 = vmatprep.subr.mxu0 0.0
        %3742 = vmatpush2.msra.mxu0 0.0
        %3743 = vmatprep.subr.mxu0 0.0
        %3744 = vmatpush2.msra.mxu0 0.0
        %3745 = vmatprep.subr.mxu0 0.0
        %3746 = vmatpush2.msra.mxu0 0.0
        %3747 = vmatprep.subr.mxu0 0.0
        %3748 = vmatpush2.msra.mxu0 0.0
        %3749 = vmatprep.subr.mxu0 0.0
        %3750 = vmatpush2.msra.mxu0 0.0
        %3751 = vmatprep.subr.mxu0 0.0
        %3752 = vmatpush2.msra.mxu0 0.0
        %3753 = vmatprep.subr.mxu0 0.0
        %3754 = vmatpush2.msra.mxu0 0.0
        %3755 = vmatprep.subr.mxu0 0.0
        %3756 = vmatpush2.msra.mxu0 0.0
        %3757 = vmatprep.subr.mxu0 0.0
        %3758 = vmatpush2.msra.mxu0 0.0
        %3759 = vmatprep.subr.mxu0 0.0
        %3760 = vmatpush2.msra.mxu0 0.0
        %3761 = vmatprep.subr.mxu0 0.0
        %3762 = vmatpush2.msra.mxu0 0.0
        %3763 = vmatprep.mubr.f32.mxu0 0.0
        %3764 = vmatmul.mubr.f32.gmra.mxu0 %v3698
        %v3765 = vpop.f32.mrf.mxu0
        %v3766 = vadd.f32 0.0, %v3765
        %v3767 = vpop.f32.mrf.mxu0
        %v3768 = vadd.f32 0.0, %v3767
        %3769 = vdwg.mxu0
        %v3770 = vxor.u32 %v3766, 2147483648
        %v3771 = vxor.u32 %v3768, 2147483648
        %v3772 = vmul.f32 %v3770, 1.442695
        %v3773 = vpow.pop %v3772
        %v3774 = vmul.f32 %v3771, 1.442695
        %v3775 = vpow.pop %v3774
        %v3776 = vadd.f32 %v3773, 1.0
        %v3777 = vadd.f32 %v3775, 1.0
        %v3778 = vrcp.pop %v3776
        %v3779 = vmul.f32 1.0, %v3778
        %v3780 = vrcp.pop %v3777
        %v3781 = vmul.f32 1.0, %v3780
        %v3784 = vcombine.low %v3779, %v3781
        %v3786 = vunpack.c.l.s4 1966171168
        %v3787 = vunpack.c.0.s8 %v3786
        %v3788 = vlaneseq
        %v3789 = vshrl.u32 %v3788, 7
        %v3790 = vsub.s32 %v3787, %v3789
        %v3791 = vrot.slane %v3784, %v3790
        %v3793 = vunpack.c.l.s4 1966171168
        %v3794 = vunpack.c.0.s8 %v3793
        %v3795 = vlaneseq
        %v3796 = vshrl.u32 %v3795, 7
        %v3797 = vsub.s32 %v3794, %v3796
        %v3798 = vrot.slane %v3791, %v3797
        %v3800 = vlaneseq
        %vm3801 = vcmp.ge.s32.totalorder %v3800, 0
        %vm3802 = vcmp.lt.s32.totalorder %v3800, 256
        %vm3803 = vmand %vm3801, %vm3802
        %3804 = vst.msk [vmem:[%s21] ss:$2 sm:$0x3] %vm3803, %v3798
        %vm3805 = vcmask 1045509
        %v3806 = vsel %vm3805, %v3641, 0.0
        %3807 = vadd.xlane.f32.xlu0 %v3806
        %v3808 = vpop.xlane.xlu0 %3807
        %v3809 = vmul.f32 %v3808, %v1526
        %v3810 = vsub.f32 %v3641, %v3809
        %v3811 = vmul.f32 %v3810, %v3810
        %v3812 = vsel %vm3805, %v3811, 0.0
        %3813 = vadd.xlane.f32.xlu0 %v3812
        %v3814 = vpop.xlane.xlu0 %3813
        %v3815 = vmul.f32 %v3814, %v1526
        %v3816 = vadd.f32 %v3815, 1e-05
        %v3817 = vrsqrt.pop %v3816
        %v3818 = vmul.f32 %v3810, %v3817
        %v3820 = vlaneseq
        %v3821 = vshrl.u32 %v3820, 7
        %v3822 = vsub.s32 0, %v3821
        %v3823 = vrot.slane %v3649, %v3822
        %v3825 = vmul.f32 %v3818, %v3823
        %v3827 = vlaneseq
        %v3828 = vshrl.u32 %v3827, 7
        %v3829 = vsub.s32 0, %v3828
        %v3830 = vrot.slane %v3650, %v3829
        %v3832 = vadd.f32 %v3825, %v3830
        %v3834 = vrot.slane %v3832, 5
        %3836 = vmatprep.subr.mxu0 %v3682
        %3837 = vmatpush1.msra.mxu0 %v3681
        %3838 = vmatprep.subr.mxu0 %v3680
        %3839 = vmatpush1.msra.mxu0 %v3679
        %3840 = vmatprep.subr.mxu0 %v3678
        %3841 = vmatpush1.msra.mxu0 %v3677
        %3842 = vmatprep.subr.mxu0 %v3676
        %3843 = vmatpush1.msra.mxu0 %v3675
        %3844 = vmatprep.subr.mxu0 %v3674
        %3845 = vmatpush1.msra.mxu0 %v3673
        %3846 = vmatprep.subr.mxu0 %v3672
        %3847 = vmatpush1.msra.mxu0 %v3671
        %3848 = vmatprep.subr.mxu0 %v3670
        %3849 = vmatpush1.msra.mxu0 %v3669
        %3850 = vmatprep.subr.mxu0 %v3668
        %3851 = vmatpush1.msra.mxu0 %v3667
        %3852 = vmatprep.subr.mxu0 %v3666
        %3853 = vmatpush1.msra.mxu0 %v3665
        %3854 = vmatprep.subr.mxu0 %v3664
        %3855 = vmatpush1.msra.mxu0 %v3663
        %3856 = vmatprep.subr.mxu0 %v3662
        %3857 = vmatpush1.msra.mxu0 %v3661
        %3858 = vmatprep.subr.mxu0 %v3660
        %3859 = vmatpush1.msra.mxu0 %v3659
        %3860 = vmatprep.subr.mxu0 %v3658
        %3861 = vmatpush1.msra.mxu0 %v3657
        %3862 = vmatprep.subr.mxu0 %v3656
        %3863 = vmatpush1.msra.mxu0 %v3655
        %3864 = vmatprep.subr.mxu0 %v3654
        %3865 = vmatpush1.msra.mxu0 %v3653
        %3866 = vmatprep.subr.mxu0 %v3652
        %3867 = vmatpush1.msra.mxu0 %v3651
        %3868 = vmatprep.subr.mxu0 0.0
        %3869 = vmatpush2.msra.mxu0 0.0
        %3870 = vmatprep.subr.mxu0 0.0
        %3871 = vmatpush2.msra.mxu0 0.0
        %3872 = vmatprep.subr.mxu0 0.0
        %3873 = vmatpush2.msra.mxu0 0.0
        %3874 = vmatprep.subr.mxu0 0.0
        %3875 = vmatpush2.msra.mxu0 0.0
        %3876 = vmatprep.subr.mxu0 0.0
        %3877 = vmatpush2.msra.mxu0 0.0
        %3878 = vmatprep.subr.mxu0 0.0
        %3879 = vmatpush2.msra.mxu0 0.0
        %3880 = vmatprep.subr.mxu0 0.0
        %3881 = vmatpush2.msra.mxu0 0.0
        %3882 = vmatprep.subr.mxu0 0.0
        %3883 = vmatpush2.msra.mxu0 0.0
        %3884 = vmatprep.subr.mxu0 0.0
        %3885 = vmatpush2.msra.mxu0 0.0
        %3886 = vmatprep.subr.mxu0 0.0
        %3887 = vmatpush2.msra.mxu0 0.0
        %3888 = vmatprep.subr.mxu0 0.0
        %3889 = vmatpush2.msra.mxu0 0.0
        %3890 = vmatprep.subr.mxu0 0.0
        %3891 = vmatpush2.msra.mxu0 0.0
        %3892 = vmatprep.subr.mxu0 0.0
        %3893 = vmatpush2.msra.mxu0 0.0
        %3894 = vmatprep.subr.mxu0 0.0
        %3895 = vmatpush2.msra.mxu0 0.0
        %3896 = vmatprep.subr.mxu0 0.0
        %3897 = vmatpush2.msra.mxu0 0.0
        %3898 = vmatprep.subr.mxu0 0.0
        %3899 = vmatpush2.msra.mxu0 0.0
        %3900 = vmatprep.mubr.f32.mxu0 0.0
        %3901 = vmatmul.mubr.f32.gmra.mxu0 %v3834
        %v3902 = vpop.f32.mrf.mxu0
        %v3903 = vadd.f32 0.0, %v3902
        %v3904 = vpop.f32.mrf.mxu0
        %v3905 = vadd.f32 0.0, %v3904
        %3906 = vdwg.mxu0
        %v3907 = vxor.u32 %v3903, 2147483648
        %v3908 = vxor.u32 %v3905, 2147483648
        %v3909 = vmul.f32 %v3907, 1.442695
        %v3910 = vpow.pop %v3909
        %v3911 = vmul.f32 %v3908, 1.442695
        %v3912 = vpow.pop %v3911
        %v3913 = vadd.f32 %v3910, 1.0
        %v3914 = vadd.f32 %v3912, 1.0
        %v3915 = vrcp.pop %v3913
        %v3916 = vmul.f32 1.0, %v3915
        %v3917 = vrcp.pop %v3914
        %v3918 = vmul.f32 1.0, %v3917
        %v3921 = vcombine.low %v3916, %v3918
        %v3923 = vunpack.c.l.s4 1966171168
        %v3924 = vunpack.c.0.s8 %v3923
        %v3925 = vlaneseq
        %v3926 = vshrl.u32 %v3925, 7
        %v3927 = vsub.s32 %v3924, %v3926
        %v3928 = vrot.slane %v3921, %v3927
        %v3930 = vunpack.c.l.s4 1966171168
        %v3931 = vunpack.c.0.s8 %v3930
        %v3932 = vlaneseq
        %v3933 = vshrl.u32 %v3932, 7
        %v3934 = vsub.s32 %v3931, %v3933
        %v3935 = vrot.slane %v3928, %v3934
        %s3937 = scalar_lea.vmem %s21, 1
        %3938 = vst.msk [vmem:[%s3937] ss:$2 sm:$0x3] %vm3803, %v3935
      $region112: #{vision_transformer_forward.1} parent=103 // pred_fallthru
        _
      // Predicated region
      $region113: #{vision_transformer_forward.1} parent=103 // pred_check
        %p3939 = pneg %p546
      $region114: #{vision_transformer_forward.1} parent=103 // pred_check_branch
        %3941 = sbr.rel (%p3939) target = $region116
      $region115: #{vision_transformer_forward.1} parent=103 // pred_region
        _
      $region116: #{vision_transformer_forward.1} parent=103 // pred_fallthru
        _
      // Predicated region
      $region117: #{vision_transformer_forward.1} parent=103 // pred_check
        %p3942 = pneg %p546
      $region118: #{vision_transformer_forward.1} parent=103 // pred_check_branch
        %3944 = sbr.rel (%p3942) target = $region120
      $region119: #{vision_transformer_forward.1} parent=103 // pred_region
        _
      $region120: #{vision_transformer_forward.1} parent=103 // pred_fallthru
        _
    $region104: #{vision_transformer_forward.1} parent=5 // pred_fallthru
      _
    %p3945 = scmp.le.s32.totalorder 2, %s27
    // Predicated region
    $region121: #{vision_transformer_forward.1} parent=5 // pred_check
      %p3946 = pneg %p3945
    $region122: #{vision_transformer_forward.1} parent=5 // pred_check_branch
      %3948 = sbr.rel (%p3946) target = $region124
    $region123: #{vision_transformer_forward.1} parent=5 // pred_region
      %s3949 = ssub.s32 %s27, 2
    $region124: #{vision_transformer_forward.1} parent=5 // pred_fallthru
      _
  $region6: #{vision_transformer_forward.1} parent=0 // loop_footer
    %s31 = sadd.s32 1, %s27
  $region7: #{vision_transformer_forward.1} parent=0 // loop_footer_branch
    %26 = sbr.rel target = $region3
  $region8: #{vision_transformer_forward.1} parent=0 // loop_exit
    _

</llo_original>
